<compile_context>
chip_gen: v7x
topology: tpu7x:2x2x1
jax: 0.10.0
libtpu: 0.0.40
codegen_flags: <defaults>
</compile_context>

<pallas_src>
import functools
import math

import jax
import jax.numpy as jnp
from jax.experimental import pallas as pl
from jax.experimental.pallas import tpu as pltpu


# ----------------------------- config -----------------------------------
class Config:
    vocab_size = 64
    hidden_size = 32
    num_heads = 4
    num_layers = 2
    max_seq_len = 16
    dropout = 0.1
    layer_norm_epsilon = 1e-12


VOCAB_PAD = 128      # pad the vocab/logit axis to the 128-lane width
EMB_LN_EPS = 1e-5    # BertCommon.lnorm = LayerNorm(hidden) -> torch default eps
VROWS_PER_LAYER = 8  # rows per layer in the bias/LN-parameter slab
W_LANES = 3 * 128    # lane width of the weight slab (Wqkv | Wo | W1, tile-aligned)


# ------------------------- in-kernel helpers ----------------------------
def _erf(x):
    # Abramowitz & Stegun 7.1.26, |err| < 1.5e-7 (intentional tiny deviation
    # from torch's exact erf GELU).
    a1, a2, a3, a4, a5 = (0.254829592, -0.284496736, 1.421413741,
                          -1.453152027, 1.061405429)
    p = 0.3275911
    s = jnp.where(x >= 0, 1.0, -1.0)
    ax = jnp.abs(x)
    t = 1.0 / (1.0 + p * ax)
    poly = ((((a5 * t + a4) * t + a3) * t + a2) * t + a1) * t
    return s * (1.0 - poly * jnp.exp(-ax * ax))


def _gelu(x):
    # matches torch.nn.GELU(approximate='none') up to the erf polynomial
    return 0.5 * x * (1.0 + _erf(x * (1.0 / math.sqrt(2.0))))


def _layernorm(x, g, b, eps):
    mu = jnp.mean(x, axis=-1, keepdims=True)
    xc = x - mu
    var = jnp.mean(xc * xc, axis=-1, keepdims=True)
    return xc * jax.lax.rsqrt(var + eps) * g + b


def _softmax_last(x):
    m = jnp.max(x, axis=-1, keepdims=True)
    e = jnp.exp(x - m)
    return e / jnp.sum(e, axis=-1, keepdims=True)   # exact divide (free here)


# ------------------------------ kernel ----------------------------------
def _bert_lm_kernel(ids_ref, pos_tkn_ref, emb_ref, w_ref, w2_ref, vec_ref,
                    o_ref, *, num_layers, num_heads, batch, eps_emb, eps):
    M, H = pos_tkn_ref.shape
    Vp = emb_ref.shape[0]
    S = M // batch
    nh = num_heads
    hs = H // nh
    scale = 1.0 / math.sqrt(hs)
    f32 = jnp.float32

    # ---------------- embeddings: one-hot token gather on the MXU ----------
    emb = emb_ref[...]                                              # (Vp, H)
    onehot = (jax.lax.broadcasted_iota(jnp.int32, (M, Vp), 1)
              == ids_ref[...]).astype(f32)                          # (M, Vp)
    x = jnp.dot(onehot, emb, preferred_element_type=f32) + pos_tkn_ref[...]
    x = _layernorm(x, vec_ref[0:1, :H], vec_ref[1:2, :H], eps_emb)  # (M, H)
    # TODO(synk): dropout layers are identity here (inference semantics).

    # --------------------------- encoder blocks ----------------------------
    # additive_attention_mask is None in BERTLanguageModel.forward -> no mask.
    for l in range(num_layers):              # num_layers == 2: fully unrolled
        r = 2 + l * VROWS_PER_LAYER
        wqkv = w_ref[l, :, 0:3 * H]          # (H, 3H)   Wq|Wk|Wv stacked
        wo   = w_ref[l, :, 128:128 + H]      # (H, H)
        w1   = w_ref[l, :, 256:256 + 4 * H]  # (H, 4H)
        w2   = w2_ref[l]                     # (4H, H)

        # one fused QKV projection for the whole (M, H) slab
        qkv = jnp.dot(x, wqkv, preferred_element_type=f32) \
            + vec_ref[r:r + 1, :3 * H]                               # (M, 3H)

        # split heads with static lane slices -> leading-batch (G=nh*B, S, hs)
        q = jnp.concatenate(
            [qkv[:, n * hs:(n + 1) * hs].reshape(batch, S, hs)
             for n in range(nh)], axis=0)
        k = jnp.concatenate(
            [qkv[:, H + n * hs:H + (n + 1) * hs].reshape(batch, S, hs)
             for n in range(nh)], axis=0)
        v = jnp.concatenate(
            [qkv[:, 2 * H + n * hs:2 * H + (n + 1) * hs].reshape(batch, S, hs)
             for n in range(nh)], axis=0)

        scores = jnp.einsum('gqd,gkd->gqk', q, k,
                            preferred_element_type=f32) * scale      # (G,S,S)
        probs = _softmax_last(scores)
        z = jnp.einsum('gqk,gkd->gqd', probs, v,
                       preferred_element_type=f32)                   # (G,S,hs)

        # concat heads back to (M, H), then a single W_O matmul
        zc = jnp.concatenate(
            [z[n * batch:(n + 1) * batch].reshape(M, hs) for n in range(nh)],
            axis=-1)                                                 # (M, H)
        attn = jnp.dot(zc, wo, preferred_element_type=f32) \
             + vec_ref[r + 1:r + 2, :H]

        out1 = _layernorm(attn + x, vec_ref[r + 2:r + 3, :H],
                          vec_ref[r + 3:r + 4, :H], eps)
        h1 = _gelu(jnp.dot(out1, w1, preferred_element_type=f32)
                   + vec_ref[r + 4:r + 5, :4 * H])                   # (M, 4H)
        mlp = jnp.dot(h1, w2, preferred_element_type=f32) \
            + vec_ref[r + 5:r + 6, :H]
        x = _layernorm(mlp + out1, vec_ref[r + 6:r + 7, :H],
                       vec_ref[r + 7:r + 8, :H], eps)

    # ------------------------------ LM head --------------------------------
    rh = 2 + num_layers * VROWS_PER_LAYER
    y = _gelu(jnp.dot(x, w_ref[num_layers, :, 0:H],
                      preferred_element_type=f32) + vec_ref[rh:rh + 1, :H])
    y = _layernorm(y, vec_ref[rh + 1:rh + 2, :H], vec_ref[rh + 2:rh + 3, :H], eps)
    # logits = y @ emb.T ; padded vocab rows are zero -> stripped in wrapper.
    # (tied_embed_bias is declared in the torch module but unused in forward.)
    o_ref[...] = jax.lax.dot_general(
        y, emb, (((1,), (1,)), ((), ())), preferred_element_type=f32)  # (M, Vp)


# --------------------------- parameters ----------------------------------
def init_params(key, cfg):
    H, V, I = cfg.hidden_size, cfg.vocab_size, 4 * cfg.hidden_size
    keys = iter(jax.random.split(key, 64))

    def nrm(shape, scale=0.02):
        return scale * jax.random.normal(next(keys), shape, jnp.float32)

    def gamma(shape):
        return 1.0 + 0.05 * jax.random.normal(next(keys), shape, jnp.float32)

    params = {
        'emb': nrm((V, H)),
        'pos_emb': nrm((cfg.max_seq_len, H)),
        'tkn_emb': nrm((2, H)),
        'ln0_g': gamma((1, H)), 'ln0_b': nrm((1, H)),
        'head_w': nrm((H, H)), 'head_b': nrm((1, H)),
        'head_ln_g': gamma((1, H)), 'head_ln_b': nrm((1, H)),
        # present in the torch module but never used in its forward()
        'tied_embed_bias': jnp.zeros((V,), jnp.float32),
        'blocks': [],
    }
    for _ in range(cfg.num_layers):
        params['blocks'].append({
            'wq': nrm((H, H)), 'bq': nrm((1, H)),
            'wk': nrm((H, H)), 'bk': nrm((1, H)),
            'wv': nrm((H, H)), 'bv': nrm((1, H)),
            'wo': nrm((H, H)), 'bo': nrm((1, H)),
            'ln1_g': gamma((1, H)), 'ln1_b': nrm((1, H)),
            'w1': nrm((H, I)), 'b1': nrm((1, I)),
            'w2': nrm((I, H)), 'b2': nrm((1, H)),
            'ln2_g': gamma((1, H)), 'ln2_b': nrm((1, H)),
        })
    return params


def prepare_kernel_params(params, cfg, batch, seq_len):
    """One-time layout prep (outside the kernel): consolidate all weights and
    vector parameters into a handful of lane-dense slabs so the kernel's DMA
    prologue is ~6 transfers instead of ~25."""
    H, V, L, I = cfg.hidden_size, cfg.vocab_size, cfg.num_layers, 4 * cfg.hidden_size

    # embedding table padded to 128 rows (padded rows zero -> zero logits)
    emb_pad = jnp.zeros((VOCAB_PAD, H), jnp.float32).at[:V].set(params['emb'])

    # positional + token-type(0) embeddings, precomputed and tiled over batch
    pos_tkn = jnp.tile(params['pos_emb'][:seq_len]
                       + params['tkn_emb'][0][None, :], (batch, 1))   # (B*S, H)

    # weight slab: lanes [0,3H)=Wqkv  [128,128+H)=Wo  [256,256+4H)=W1 ;
    # slot L holds the LM-head projection at lanes [0,H).
    w_slab = jnp.zeros((L + 1, H, W_LANES), jnp.float32)
    for l, blk in enumerate(params['blocks']):
        wqkv = jnp.concatenate([blk['wq'], blk['wk'], blk['wv']], axis=1)
        w_slab = w_slab.at[l, :, 0:3 * H].set(wqkv)
        w_slab = w_slab.at[l, :, 128:128 + H].set(blk['wo'])
        w_slab = w_slab.at[l, :, 256:256 + I].set(blk['w1'])
    w_slab = w_slab.at[L, :, 0:H].set(params['head_w'])

    # second MLP weight (rows = 4H) gets its own slab
    w2_slab = jnp.stack([blk['w2'] for blk in params['blocks']])       # (L,4H,H)

    # bias / LayerNorm-parameter slab: one 128-lane row per vector
    def row(v):
        v = jnp.asarray(v, jnp.float32).reshape(-1)
        return jnp.pad(v, (0, 128 - v.shape[0]))

    rows = [row(params['ln0_g']), row(params['ln0_b'])]
    for blk in params['blocks']:
        bqkv = jnp.concatenate([blk['bq'], blk['bk'], blk['bv']], axis=1)
        rows += [row(bqkv), row(blk['bo']), row(blk['ln1_g']), row(blk['ln1_b']),
                 row(blk['b1']), row(blk['b2']), row(blk['ln2_g']), row(blk['ln2_b'])]
    rows += [row(params['head_b']), row(params['head_ln_g']), row(params['head_ln_b'])]
    while len(rows) % 8:                      # pad rows to a sublane multiple
        rows.append(jnp.zeros((128,), jnp.float32))
    vec_slab = jnp.stack(rows)                                         # (R,128)

    return {'emb_pad': emb_pad, 'pos_tkn': pos_tkn, 'w_slab': w_slab,
            'w2_slab': w2_slab, 'vec_slab': vec_slab}


# ----------------------------- forward ------------------------------------
def bert_lm_forward(kparams, token_ids, cfg):
    B, S = token_ids.shape
    M = B * S
    V = cfg.vocab_size

    kernel = functools.partial(
        _bert_lm_kernel, num_layers=cfg.num_layers, num_heads=cfg.num_heads,
        batch=B, eps_emb=EMB_LN_EPS, eps=cfg.layer_norm_epsilon)

    args = (token_ids.reshape(M, 1).astype(jnp.int32),
            kparams['pos_tkn'], kparams['emb_pad'],
            kparams['w_slab'], kparams['w2_slab'], kparams['vec_slab'])

    # TODO(synk): at production sizes, tile the M = B*S axis with a grid +
    # dimension_semantics=("parallel",) so v7x's second TensorCore is used and
    # weights stay resident (index_map -> block 0); at M=16 the whole model is
    # VMEM-resident and a grid would only add per-step overhead.
    logits_pad = pl.pallas_call(
        kernel,
        out_shape=jax.ShapeDtypeStruct((M, VOCAB_PAD), jnp.float32),
        in_specs=[pl.BlockSpec(memory_space=pltpu.MemorySpace.VMEM)] * len(args),
        out_specs=pl.BlockSpec(memory_space=pltpu.MemorySpace.VMEM),
        # actual VMEM usage is < 1 MiB; keep the request small (v7x has only
        # 64 MiB physical) while leaving headroom for compiler scratch.
        compiler_params=pltpu.CompilerParams(vmem_limit_bytes=4 * 1024 * 1024),
    )(*args)
    # strip vocab padding, restore (batch, seq, vocab)
    return logits_pad[:, :V].reshape(B, S, V)


# ----------------------- pure-JAX reference (f32) --------------------------
def reference_forward(params, token_ids, cfg):
    H, nh = cfg.hidden_size, cfg.num_heads
    hs = H // nh
    B, S = token_ids.shape

    def ln(x, g, b, eps):
        mu = jnp.mean(x, axis=-1, keepdims=True)
        var = jnp.mean((x - mu) ** 2, axis=-1, keepdims=True)
        return (x - mu) / jnp.sqrt(var + eps) * g.reshape(-1) + b.reshape(-1)

    x = (params['emb'][token_ids] + params['pos_emb'][:S][None]
         + params['tkn_emb'][0][None, None])
    x = ln(x, params['ln0_g'], params['ln0_b'], EMB_LN_EPS)
    for blk in params['blocks']:
        q = (x @ blk['wq'] + blk['bq'].reshape(-1)).reshape(B, S, nh, hs)
        k = (x @ blk['wk'] + blk['bk'].reshape(-1)).reshape(B, S, nh, hs)
        v = (x @ blk['wv'] + blk['bv'].reshape(-1)).reshape(B, S, nh, hs)
        s = jnp.einsum('bqnd,bknd->bnqk', q, k) / math.sqrt(hs)
        p = jax.nn.softmax(s, axis=-1)
        z = jnp.einsum('bnqk,bknd->bqnd', p, v).reshape(B, S, H)
        attn = z @ blk['wo'] + blk['bo'].reshape(-1)
        out1 = ln(attn + x, blk['ln1_g'], blk['ln1_b'], cfg.layer_norm_epsilon)
        h1 = jax.nn.gelu(out1 @ blk['w1'] + blk['b1'].reshape(-1),
                         approximate=False)
        mlp = h1 @ blk['w2'] + blk['b2'].reshape(-1)
        x = ln(mlp + out1, blk['ln2_g'], blk['ln2_b'], cfg.layer_norm_epsilon)
    y = jax.nn.gelu(x @ params['head_w'] + params['head_b'].reshape(-1),
                    approximate=False)
    y = ln(y, params['head_ln_g'], params['head_ln_b'], cfg.layer_norm_epsilon)
    return jnp.einsum('bse,ve->bsv', y, params['emb'])


# ------------------------------- main --------------------------------------
if __name__ == "__main__":
    cfg = Config()
    key = jax.random.PRNGKey(0)
    pkey, dkey = jax.random.split(key)
    params = init_params(pkey, cfg)

    B, S = 2, 8
    token_ids = jax.random.randint(dkey, (B, S), 0, cfg.vocab_size,
                                   dtype=jnp.int32)

    kparams = prepare_kernel_params(params, cfg, B, S)
    fwd = jax.jit(lambda kp, ids: bert_lm_forward(kp, ids, cfg))
    logits = jax.block_until_ready(fwd(kparams, token_ids))

    assert logits.shape == (B, S, cfg.vocab_size), logits.shape
    assert logits.dtype == jnp.float32
    assert bool(jnp.all(jnp.isfinite(logits)))

    # Full-f32 kernel + exact softmax divide -> tight tolerance (erf poly only).
    ref = reference_forward(params, token_ids, cfg)
    max_err = float(jnp.max(jnp.abs(logits - ref)))
    assert max_err < 2e-3, f"max abs err vs reference: {max_err}"

    print("KERNEL_OK")
</pallas_src>

<mosaic_0001>
module attributes {stable_mosaic.version = 11 : i64} {
  func.func @_bert_lm_kernel(%arg0: memref<16x1xi32, #tpu.memory_space<vmem>>, %arg1: memref<16x32xf32, #tpu.memory_space<vmem>>, %arg2: memref<128x32xf32, #tpu.memory_space<vmem>>, %arg3: memref<3x32x384xf32, #tpu.memory_space<vmem>>, %arg4: memref<2x128x32xf32, #tpu.memory_space<vmem>>, %arg5: memref<24x128xf32, #tpu.memory_space<vmem>>, %arg6: memref<16x128xf32, #tpu.memory_space<vmem>>) attributes {dimension_semantics = [], scalar_prefetch = 0 : i64, scratch_operands = 0 : i64, tpu.core_type = #tpu.core_type<tc>} {
    %c0 = arith.constant 0 : index
    %c0_0 = arith.constant 0 : index
    %0 = vector.load %arg2[%c0, %c0_0] : memref<128x32xf32, #tpu.memory_space<vmem>>, vector<128x32xf32>
    %1 = tpu.iota {dimensions = array<i32: 1>} : vector<16x128xi32>
    %c0_1 = arith.constant 0 : index
    %c0_2 = arith.constant 0 : index
    %2 = vector.load %arg0[%c0_1, %c0_2] : memref<16x1xi32, #tpu.memory_space<vmem>>, vector<16x1xi32>
    %3 = vector.broadcast %2 : vector<16x1xi32> to vector<16x128xi32>
    %4 = arith.cmpi eq, %1, %3 : vector<16x128xi32>
    %5 = arith.extui %4 : vector<16x128xi1> to vector<16x128xi32>
    %6 = arith.sitofp %5 : vector<16x128xi32> to vector<16x128xf32>
    %cst = arith.constant dense<0.000000e+00> : vector<16x32xf32>
    %7 = tpu.matmul %6, %0, %cst {dimension_numbers = #tpu.dot_dimension_numbers<[1], [0], [0], [1], [0, 0, 1, 1], [], []>} : vector<16x128xf32>, vector<128x32xf32>, vector<16x32xf32> -> vector<16x32xf32>
    %c0_3 = arith.constant 0 : index
    %c0_4 = arith.constant 0 : index
    %8 = vector.load %arg1[%c0_3, %c0_4] : memref<16x32xf32, #tpu.memory_space<vmem>>, vector<16x32xf32>
    %9 = arith.addf %7, %8 : vector<16x32xf32>
    %c0_5 = arith.constant 0 : index
    %c0_6 = arith.constant 0 : index
    %10 = vector.load %arg5[%c0_5, %c0_6] : memref<24x128xf32, #tpu.memory_space<vmem>>, vector<1x32xf32>
    %c1 = arith.constant 1 : index
    %c0_7 = arith.constant 0 : index
    %11 = vector.load %arg5[%c1, %c0_7] : memref<24x128xf32, #tpu.memory_space<vmem>>, vector<1x32xf32>
    %cst_8 = arith.constant dense<0.000000e+00> : vector<16xf32>
    %12 = vector.multi_reduction <add>, %9, %cst_8 [1] : vector<16x32xf32> to vector<16xf32>
    %13 = vector.shape_cast %12 : vector<16xf32> to vector<16x1xf32>
    %cst_9 = arith.constant 3.200000e+01 : f32
    %14 = vector.broadcast %cst_9 : f32 to vector<16x1xf32>
    %15 = arith.divf %13, %14 : vector<16x1xf32>
    %16 = vector.broadcast %15 : vector<16x1xf32> to vector<16x32xf32>
    %17 = arith.subf %9, %16 : vector<16x32xf32>
    %18 = arith.mulf %17, %17 : vector<16x32xf32>
    %cst_10 = arith.constant dense<0.000000e+00> : vector<16xf32>
    %19 = vector.multi_reduction <add>, %18, %cst_10 [1] : vector<16x32xf32> to vector<16xf32>
    %20 = vector.shape_cast %19 : vector<16xf32> to vector<16x1xf32>
    %cst_11 = arith.constant 3.200000e+01 : f32
    %21 = vector.broadcast %cst_11 : f32 to vector<16x1xf32>
    %22 = arith.divf %20, %21 : vector<16x1xf32>
    %cst_12 = arith.constant 9.99999974E-6 : f32
    %23 = vector.broadcast %cst_12 : f32 to vector<16x1xf32>
    %24 = arith.addf %22, %23 : vector<16x1xf32>
    %25 = math.rsqrt %24 : vector<16x1xf32>
    %26 = vector.broadcast %25 : vector<16x1xf32> to vector<16x32xf32>
    %27 = arith.mulf %17, %26 : vector<16x32xf32>
    %28 = vector.broadcast %10 : vector<1x32xf32> to vector<16x32xf32>
    %29 = arith.mulf %27, %28 : vector<16x32xf32>
    %30 = vector.broadcast %11 : vector<1x32xf32> to vector<16x32xf32>
    %31 = arith.addf %29, %30 : vector<16x32xf32>
    %c0_13 = arith.constant 0 : index
    %c0_14 = arith.constant 0 : index
    %c0_15 = arith.constant 0 : index
    %32 = vector.load %arg3[%c0_13, %c0_14, %c0_15] : memref<3x32x384xf32, #tpu.memory_space<vmem>>, vector<1x32x96xf32>
    %33 = vector.shape_cast %32 : vector<1x32x96xf32> to vector<32x96xf32>
    %c0_16 = arith.constant 0 : index
    %c0_17 = arith.constant 0 : index
    %c128 = arith.constant 128 : index
    %34 = vector.load %arg3[%c0_16, %c0_17, %c128] : memref<3x32x384xf32, #tpu.memory_space<vmem>>, vector<1x32x32xf32>
    %35 = vector.shape_cast %34 : vector<1x32x32xf32> to vector<32x32xf32>
    %c0_18 = arith.constant 0 : index
    %c0_19 = arith.constant 0 : index
    %c256 = arith.constant 256 : index
    %36 = vector.load %arg3[%c0_18, %c0_19, %c256] : memref<3x32x384xf32, #tpu.memory_space<vmem>>, vector<1x32x128xf32>
    %37 = vector.shape_cast %36 : vector<1x32x128xf32> to vector<32x128xf32>
    %c0_20 = arith.constant 0 : index
    %c0_21 = arith.constant 0 : index
    %c0_22 = arith.constant 0 : index
    %38 = vector.load %arg4[%c0_20, %c0_21, %c0_22] : memref<2x128x32xf32, #tpu.memory_space<vmem>>, vector<1x128x32xf32>
    %39 = vector.shape_cast %38 : vector<1x128x32xf32> to vector<128x32xf32>
    %cst_23 = arith.constant dense<0.000000e+00> : vector<16x96xf32>
    %40 = tpu.matmul %31, %33, %cst_23 {dimension_numbers = #tpu.dot_dimension_numbers<[1], [0], [0], [1], [0, 0, 1, 1], [], []>} : vector<16x32xf32>, vector<32x96xf32>, vector<16x96xf32> -> vector<16x96xf32>
    %c2 = arith.constant 2 : index
    %c0_24 = arith.constant 0 : index
    %41 = vector.load %arg5[%c2, %c0_24] : memref<24x128xf32, #tpu.memory_space<vmem>>, vector<1x96xf32>
    %42 = vector.broadcast %41 : vector<1x96xf32> to vector<16x96xf32>
    %43 = arith.addf %40, %42 : vector<16x96xf32>
    %44 = vector.extract_strided_slice %43 {offsets = [0, 0], sizes = [16, 8], strides = [1, 1]} : vector<16x96xf32> to vector<16x8xf32>
    %45 = vector.shape_cast %44 : vector<16x8xf32> to vector<2x8x8xf32>
    %46 = vector.extract_strided_slice %43 {offsets = [0, 8], sizes = [16, 8], strides = [1, 1]} : vector<16x96xf32> to vector<16x8xf32>
    %47 = vector.shape_cast %46 : vector<16x8xf32> to vector<2x8x8xf32>
    %48 = vector.extract_strided_slice %43 {offsets = [0, 16], sizes = [16, 8], strides = [1, 1]} : vector<16x96xf32> to vector<16x8xf32>
    %49 = vector.shape_cast %48 : vector<16x8xf32> to vector<2x8x8xf32>
    %50 = vector.extract_strided_slice %43 {offsets = [0, 24], sizes = [16, 8], strides = [1, 1]} : vector<16x96xf32> to vector<16x8xf32>
    %51 = vector.shape_cast %50 : vector<16x8xf32> to vector<2x8x8xf32>
    %52 = tpu.concatenate %45, %47, %49, %51 in 0 : vector<2x8x8xf32>, vector<2x8x8xf32>, vector<2x8x8xf32>, vector<2x8x8xf32> -> vector<8x8x8xf32>
    %53 = vector.extract_strided_slice %43 {offsets = [0, 32], sizes = [16, 8], strides = [1, 1]} : vector<16x96xf32> to vector<16x8xf32>
    %54 = vector.shape_cast %53 : vector<16x8xf32> to vector<2x8x8xf32>
    %55 = vector.extract_strided_slice %43 {offsets = [0, 40], sizes = [16, 8], strides = [1, 1]} : vector<16x96xf32> to vector<16x8xf32>
    %56 = vector.shape_cast %55 : vector<16x8xf32> to vector<2x8x8xf32>
    %57 = vector.extract_strided_slice %43 {offsets = [0, 48], sizes = [16, 8], strides = [1, 1]} : vector<16x96xf32> to vector<16x8xf32>
    %58 = vector.shape_cast %57 : vector<16x8xf32> to vector<2x8x8xf32>
    %59 = vector.extract_strided_slice %43 {offsets = [0, 56], sizes = [16, 8], strides = [1, 1]} : vector<16x96xf32> to vector<16x8xf32>
    %60 = vector.shape_cast %59 : vector<16x8xf32> to vector<2x8x8xf32>
    %61 = tpu.concatenate %54, %56, %58, %60 in 0 : vector<2x8x8xf32>, vector<2x8x8xf32>, vector<2x8x8xf32>, vector<2x8x8xf32> -> vector<8x8x8xf32>
    %62 = vector.extract_strided_slice %43 {offsets = [0, 64], sizes = [16, 8], strides = [1, 1]} : vector<16x96xf32> to vector<16x8xf32>
    %63 = vector.shape_cast %62 : vector<16x8xf32> to vector<2x8x8xf32>
    %64 = vector.extract_strided_slice %43 {offsets = [0, 72], sizes = [16, 8], strides = [1, 1]} : vector<16x96xf32> to vector<16x8xf32>
    %65 = vector.shape_cast %64 : vector<16x8xf32> to vector<2x8x8xf32>
    %66 = vector.extract_strided_slice %43 {offsets = [0, 80], sizes = [16, 8], strides = [1, 1]} : vector<16x96xf32> to vector<16x8xf32>
    %67 = vector.shape_cast %66 : vector<16x8xf32> to vector<2x8x8xf32>
    %68 = vector.extract_strided_slice %43 {offsets = [0, 88], sizes = [16, 8], strides = [1, 1]} : vector<16x96xf32> to vector<16x8xf32>
    %69 = vector.shape_cast %68 : vector<16x8xf32> to vector<2x8x8xf32>
    %70 = tpu.concatenate %63, %65, %67, %69 in 0 : vector<2x8x8xf32>, vector<2x8x8xf32>, vector<2x8x8xf32>, vector<2x8x8xf32> -> vector<8x8x8xf32>
    "tpu.trace_start"() <{level = 10 : i32, message = "gqd,gkd->gqk"}> : () -> ()
    %cst_25 = arith.constant dense<0.000000e+00> : vector<8x8x8xf32>
    %71 = tpu.matmul %52, %61, %cst_25 {dimension_numbers = #tpu.dot_dimension_numbers<[2], [2], [1], [1], [0, 0, 0, 1, 1, 1], [0], [0]>} : vector<8x8x8xf32>, vector<8x8x8xf32>, vector<8x8x8xf32> -> vector<8x8x8xf32>
    "tpu.trace_stop"() : () -> ()
    %cst_26 = arith.constant 0.353553385 : f32
    %72 = vector.broadcast %cst_26 : f32 to vector<8x8x8xf32>
    %73 = arith.mulf %71, %72 : vector<8x8x8xf32>
    %cst_27 = arith.constant dense<0xFF800000> : vector<8x8xf32>
    %74 = vector.multi_reduction <maximumf>, %73, %cst_27 [2] : vector<8x8x8xf32> to vector<8x8xf32>
    %75 = vector.shape_cast %74 : vector<8x8xf32> to vector<8x8x1xf32>
    %76 = vector.broadcast %75 : vector<8x8x1xf32> to vector<8x8x8xf32>
    %77 = arith.subf %73, %76 : vector<8x8x8xf32>
    %78 = math.exp %77 : vector<8x8x8xf32>
    %cst_28 = arith.constant dense<0.000000e+00> : vector<8x8xf32>
    %79 = vector.multi_reduction <add>, %78, %cst_28 [2] : vector<8x8x8xf32> to vector<8x8xf32>
    %80 = vector.shape_cast %79 : vector<8x8xf32> to vector<8x8x1xf32>
    %81 = vector.broadcast %80 : vector<8x8x1xf32> to vector<8x8x8xf32>
    %82 = arith.divf %78, %81 : vector<8x8x8xf32>
    "tpu.trace_start"() <{level = 10 : i32, message = "gqk,gkd->gqd"}> : () -> ()
    %cst_29 = arith.constant dense<0.000000e+00> : vector<8x8x8xf32>
    %83 = tpu.matmul %82, %70, %cst_29 {dimension_numbers = #tpu.dot_dimension_numbers<[2], [1], [1], [2], [0, 0, 0, 1, 1, 2], [0], [0]>} : vector<8x8x8xf32>, vector<8x8x8xf32>, vector<8x8x8xf32> -> vector<8x8x8xf32>
    "tpu.trace_stop"() : () -> ()
    %84 = vector.extract_strided_slice %83 {offsets = [0, 0, 0], sizes = [2, 8, 8], strides = [1, 1, 1]} : vector<8x8x8xf32> to vector<2x8x8xf32>
    %85 = vector.shape_cast %84 : vector<2x8x8xf32> to vector<16x8xf32>
    %86 = vector.extract_strided_slice %83 {offsets = [2, 0, 0], sizes = [2, 8, 8], strides = [1, 1, 1]} : vector<8x8x8xf32> to vector<2x8x8xf32>
    %87 = vector.shape_cast %86 : vector<2x8x8xf32> to vector<16x8xf32>
    %88 = vector.extract_strided_slice %83 {offsets = [4, 0, 0], sizes = [2, 8, 8], strides = [1, 1, 1]} : vector<8x8x8xf32> to vector<2x8x8xf32>
    %89 = vector.shape_cast %88 : vector<2x8x8xf32> to vector<16x8xf32>
    %90 = vector.extract_strided_slice %83 {offsets = [6, 0, 0], sizes = [2, 8, 8], strides = [1, 1, 1]} : vector<8x8x8xf32> to vector<2x8x8xf32>
    %91 = vector.shape_cast %90 : vector<2x8x8xf32> to vector<16x8xf32>
    %92 = tpu.concatenate %85, %87, %89, %91 in 1 : vector<16x8xf32>, vector<16x8xf32>, vector<16x8xf32>, vector<16x8xf32> -> vector<16x32xf32>
    %cst_30 = arith.constant dense<0.000000e+00> : vector<16x32xf32>
    %93 = tpu.matmul %92, %35, %cst_30 {dimension_numbers = #tpu.dot_dimension_numbers<[1], [0], [0], [1], [0, 0, 1, 1], [], []>} : vector<16x32xf32>, vector<32x32xf32>, vector<16x32xf32> -> vector<16x32xf32>
    %c3 = arith.constant 3 : index
    %c0_31 = arith.constant 0 : index
    %94 = vector.load %arg5[%c3, %c0_31] : memref<24x128xf32, #tpu.memory_space<vmem>>, vector<1x32xf32>
    %95 = vector.broadcast %94 : vector<1x32xf32> to vector<16x32xf32>
    %96 = arith.addf %93, %95 : vector<16x32xf32>
    %97 = arith.addf %96, %31 : vector<16x32xf32>
    %c4 = arith.constant 4 : index
    %c0_32 = arith.constant 0 : index
    %98 = vector.load %arg5[%c4, %c0_32] : memref<24x128xf32, #tpu.memory_space<vmem>>, vector<1x32xf32>
    %c5 = arith.constant 5 : index
    %c0_33 = arith.constant 0 : index
    %99 = vector.load %arg5[%c5, %c0_33] : memref<24x128xf32, #tpu.memory_space<vmem>>, vector<1x32xf32>
    %cst_34 = arith.constant dense<0.000000e+00> : vector<16xf32>
    %100 = vector.multi_reduction <add>, %97, %cst_34 [1] : vector<16x32xf32> to vector<16xf32>
    %101 = vector.shape_cast %100 : vector<16xf32> to vector<16x1xf32>
    %cst_35 = arith.constant 3.200000e+01 : f32
    %102 = vector.broadcast %cst_35 : f32 to vector<16x1xf32>
    %103 = arith.divf %101, %102 : vector<16x1xf32>
    %104 = vector.broadcast %103 : vector<16x1xf32> to vector<16x32xf32>
    %105 = arith.subf %97, %104 : vector<16x32xf32>
    %106 = arith.mulf %105, %105 : vector<16x32xf32>
    %cst_36 = arith.constant dense<0.000000e+00> : vector<16xf32>
    %107 = vector.multi_reduction <add>, %106, %cst_36 [1] : vector<16x32xf32> to vector<16xf32>
    %108 = vector.shape_cast %107 : vector<16xf32> to vector<16x1xf32>
    %cst_37 = arith.constant 3.200000e+01 : f32
    %109 = vector.broadcast %cst_37 : f32 to vector<16x1xf32>
    %110 = arith.divf %108, %109 : vector<16x1xf32>
    %cst_38 = arith.constant 9.99999996E-13 : f32
    %111 = vector.broadcast %cst_38 : f32 to vector<16x1xf32>
    %112 = arith.addf %110, %111 : vector<16x1xf32>
    %113 = math.rsqrt %112 : vector<16x1xf32>
    %114 = vector.broadcast %113 : vector<16x1xf32> to vector<16x32xf32>
    %115 = arith.mulf %105, %114 : vector<16x32xf32>
    %116 = vector.broadcast %98 : vector<1x32xf32> to vector<16x32xf32>
    %117 = arith.mulf %115, %116 : vector<16x32xf32>
    %118 = vector.broadcast %99 : vector<1x32xf32> to vector<16x32xf32>
    %119 = arith.addf %117, %118 : vector<16x32xf32>
    %cst_39 = arith.constant dense<0.000000e+00> : vector<16x128xf32>
    %120 = tpu.matmul %119, %37, %cst_39 {dimension_numbers = #tpu.dot_dimension_numbers<[1], [0], [0], [1], [0, 0, 1, 1], [], []>} : vector<16x32xf32>, vector<32x128xf32>, vector<16x128xf32> -> vector<16x128xf32>
    %c6 = arith.constant 6 : index
    %c0_40 = arith.constant 0 : index
    %121 = vector.load %arg5[%c6, %c0_40] : memref<24x128xf32, #tpu.memory_space<vmem>>, vector<1x128xf32>
    %122 = vector.broadcast %121 : vector<1x128xf32> to vector<16x128xf32>
    %123 = arith.addf %120, %122 : vector<16x128xf32>
    %cst_41 = arith.constant 5.000000e-01 : f32
    %124 = vector.broadcast %cst_41 : f32 to vector<16x128xf32>
    %125 = arith.mulf %124, %123 : vector<16x128xf32>
    %cst_42 = arith.constant 0.707106769 : f32
    %126 = vector.broadcast %cst_42 : f32 to vector<16x128xf32>
    %127 = arith.mulf %123, %126 : vector<16x128xf32>
    %cst_43 = arith.constant 0.000000e+00 : f32
    %128 = vector.broadcast %cst_43 : f32 to vector<16x128xf32>
    %129 = arith.cmpf oge, %127, %128 : vector<16x128xf32>
    %cst_44 = arith.constant 1.000000e+00 : f32
    %cst_45 = arith.constant -1.000000e+00 : f32
    %130 = vector.broadcast %cst_44 : f32 to vector<16x128xf32>
    %131 = vector.broadcast %cst_45 : f32 to vector<16x128xf32>
    %132 = arith.select %129, %130, %131 : vector<16x128xi1>, vector<16x128xf32>
    %133 = math.absf %127 : vector<16x128xf32>
    %cst_46 = arith.constant 0.327591091 : f32
    %134 = vector.broadcast %cst_46 : f32 to vector<16x128xf32>
    %135 = arith.mulf %134, %133 : vector<16x128xf32>
    %cst_47 = arith.constant 1.000000e+00 : f32
    %136 = vector.broadcast %cst_47 : f32 to vector<16x128xf32>
    %137 = arith.addf %136, %135 : vector<16x128xf32>
    %cst_48 = arith.constant 1.000000e+00 : f32
    %138 = vector.broadcast %cst_48 : f32 to vector<16x128xf32>
    %139 = arith.divf %138, %137 : vector<16x128xf32>
    %cst_49 = arith.constant 1.06140542 : f32
    %140 = vector.broadcast %cst_49 : f32 to vector<16x128xf32>
    %141 = arith.mulf %140, %139 : vector<16x128xf32>
    %cst_50 = arith.constant -1.45315206 : f32
    %142 = vector.broadcast %cst_50 : f32 to vector<16x128xf32>
    %143 = arith.addf %141, %142 : vector<16x128xf32>
    %144 = arith.mulf %143, %139 : vector<16x128xf32>
    %cst_51 = arith.constant 1.42141378 : f32
    %145 = vector.broadcast %cst_51 : f32 to vector<16x128xf32>
    %146 = arith.addf %144, %145 : vector<16x128xf32>
    %147 = arith.mulf %146, %139 : vector<16x128xf32>
    %cst_52 = arith.constant -0.284496725 : f32
    %148 = vector.broadcast %cst_52 : f32 to vector<16x128xf32>
    %149 = arith.addf %147, %148 : vector<16x128xf32>
    %150 = arith.mulf %149, %139 : vector<16x128xf32>
    %cst_53 = arith.constant 0.254829586 : f32
    %151 = vector.broadcast %cst_53 : f32 to vector<16x128xf32>
    %152 = arith.addf %150, %151 : vector<16x128xf32>
    %153 = arith.mulf %152, %139 : vector<16x128xf32>
    %cst_54 = arith.constant 0.000000e+00 : f32
    %154 = vector.broadcast %cst_54 : f32 to vector<16x128xf32>
    %155 = arith.subf %154, %133 : vector<16x128xf32>
    %156 = arith.mulf %155, %133 : vector<16x128xf32>
    %157 = math.exp %156 : vector<16x128xf32>
    %158 = arith.mulf %153, %157 : vector<16x128xf32>
    %cst_55 = arith.constant 1.000000e+00 : f32
    %159 = vector.broadcast %cst_55 : f32 to vector<16x128xf32>
    %160 = arith.subf %159, %158 : vector<16x128xf32>
    %161 = arith.mulf %132, %160 : vector<16x128xf32>
    %cst_56 = arith.constant 1.000000e+00 : f32
    %162 = vector.broadcast %cst_56 : f32 to vector<16x128xf32>
    %163 = arith.addf %162, %161 : vector<16x128xf32>
    %164 = arith.mulf %125, %163 : vector<16x128xf32>
    %cst_57 = arith.constant dense<0.000000e+00> : vector<16x32xf32>
    %165 = tpu.matmul %164, %39, %cst_57 {dimension_numbers = #tpu.dot_dimension_numbers<[1], [0], [0], [1], [0, 0, 1, 1], [], []>} : vector<16x128xf32>, vector<128x32xf32>, vector<16x32xf32> -> vector<16x32xf32>
    %c7 = arith.constant 7 : index
    %c0_58 = arith.constant 0 : index
    %166 = vector.load %arg5[%c7, %c0_58] : memref<24x128xf32, #tpu.memory_space<vmem>>, vector<1x32xf32>
    %167 = vector.broadcast %166 : vector<1x32xf32> to vector<16x32xf32>
    %168 = arith.addf %165, %167 : vector<16x32xf32>
    %169 = arith.addf %168, %119 : vector<16x32xf32>
    %c8 = arith.constant 8 : index
    %c0_59 = arith.constant 0 : index
    %170 = vector.load %arg5[%c8, %c0_59] : memref<24x128xf32, #tpu.memory_space<vmem>>, vector<1x32xf32>
    %c9 = arith.constant 9 : index
    %c0_60 = arith.constant 0 : index
    %171 = vector.load %arg5[%c9, %c0_60] : memref<24x128xf32, #tpu.memory_space<vmem>>, vector<1x32xf32>
    %cst_61 = arith.constant dense<0.000000e+00> : vector<16xf32>
    %172 = vector.multi_reduction <add>, %169, %cst_61 [1] : vector<16x32xf32> to vector<16xf32>
    %173 = vector.shape_cast %172 : vector<16xf32> to vector<16x1xf32>
    %cst_62 = arith.constant 3.200000e+01 : f32
    %174 = vector.broadcast %cst_62 : f32 to vector<16x1xf32>
    %175 = arith.divf %173, %174 : vector<16x1xf32>
    %176 = vector.broadcast %175 : vector<16x1xf32> to vector<16x32xf32>
    %177 = arith.subf %169, %176 : vector<16x32xf32>
    %178 = arith.mulf %177, %177 : vector<16x32xf32>
    %cst_63 = arith.constant dense<0.000000e+00> : vector<16xf32>
    %179 = vector.multi_reduction <add>, %178, %cst_63 [1] : vector<16x32xf32> to vector<16xf32>
    %180 = vector.shape_cast %179 : vector<16xf32> to vector<16x1xf32>
    %cst_64 = arith.constant 3.200000e+01 : f32
    %181 = vector.broadcast %cst_64 : f32 to vector<16x1xf32>
    %182 = arith.divf %180, %181 : vector<16x1xf32>
    %cst_65 = arith.constant 9.99999996E-13 : f32
    %183 = vector.broadcast %cst_65 : f32 to vector<16x1xf32>
    %184 = arith.addf %182, %183 : vector<16x1xf32>
    %185 = math.rsqrt %184 : vector<16x1xf32>
    %186 = vector.broadcast %185 : vector<16x1xf32> to vector<16x32xf32>
    %187 = arith.mulf %177, %186 : vector<16x32xf32>
    %188 = vector.broadcast %170 : vector<1x32xf32> to vector<16x32xf32>
    %189 = arith.mulf %187, %188 : vector<16x32xf32>
    %190 = vector.broadcast %171 : vector<1x32xf32> to vector<16x32xf32>
    %191 = arith.addf %189, %190 : vector<16x32xf32>
    %c1_66 = arith.constant 1 : index
    %c0_67 = arith.constant 0 : index
    %c0_68 = arith.constant 0 : index
    %192 = vector.load %arg3[%c1_66, %c0_67, %c0_68] : memref<3x32x384xf32, #tpu.memory_space<vmem>>, vector<1x32x96xf32>
    %193 = vector.shape_cast %192 : vector<1x32x96xf32> to vector<32x96xf32>
    %c1_69 = arith.constant 1 : index
    %c0_70 = arith.constant 0 : index
    %c128_71 = arith.constant 128 : index
    %194 = vector.load %arg3[%c1_69, %c0_70, %c128_71] : memref<3x32x384xf32, #tpu.memory_space<vmem>>, vector<1x32x32xf32>
    %195 = vector.shape_cast %194 : vector<1x32x32xf32> to vector<32x32xf32>
    %c1_72 = arith.constant 1 : index
    %c0_73 = arith.constant 0 : index
    %c256_74 = arith.constant 256 : index
    %196 = vector.load %arg3[%c1_72, %c0_73, %c256_74] : memref<3x32x384xf32, #tpu.memory_space<vmem>>, vector<1x32x128xf32>
    %197 = vector.shape_cast %196 : vector<1x32x128xf32> to vector<32x128xf32>
    %c1_75 = arith.constant 1 : index
    %c0_76 = arith.constant 0 : index
    %c0_77 = arith.constant 0 : index
    %198 = vector.load %arg4[%c1_75, %c0_76, %c0_77] : memref<2x128x32xf32, #tpu.memory_space<vmem>>, vector<1x128x32xf32>
    %199 = vector.shape_cast %198 : vector<1x128x32xf32> to vector<128x32xf32>
    %cst_78 = arith.constant dense<0.000000e+00> : vector<16x96xf32>
    %200 = tpu.matmul %191, %193, %cst_78 {dimension_numbers = #tpu.dot_dimension_numbers<[1], [0], [0], [1], [0, 0, 1, 1], [], []>} : vector<16x32xf32>, vector<32x96xf32>, vector<16x96xf32> -> vector<16x96xf32>
    %c10 = arith.constant 10 : index
    %c0_79 = arith.constant 0 : index
    %201 = vector.load %arg5[%c10, %c0_79] : memref<24x128xf32, #tpu.memory_space<vmem>>, vector<1x96xf32>
    %202 = vector.broadcast %201 : vector<1x96xf32> to vector<16x96xf32>
    %203 = arith.addf %200, %202 : vector<16x96xf32>
    %204 = vector.extract_strided_slice %203 {offsets = [0, 0], sizes = [16, 8], strides = [1, 1]} : vector<16x96xf32> to vector<16x8xf32>
    %205 = vector.shape_cast %204 : vector<16x8xf32> to vector<2x8x8xf32>
    %206 = vector.extract_strided_slice %203 {offsets = [0, 8], sizes = [16, 8], strides = [1, 1]} : vector<16x96xf32> to vector<16x8xf32>
    %207 = vector.shape_cast %206 : vector<16x8xf32> to vector<2x8x8xf32>
    %208 = vector.extract_strided_slice %203 {offsets = [0, 16], sizes = [16, 8], strides = [1, 1]} : vector<16x96xf32> to vector<16x8xf32>
    %209 = vector.shape_cast %208 : vector<16x8xf32> to vector<2x8x8xf32>
    %210 = vector.extract_strided_slice %203 {offsets = [0, 24], sizes = [16, 8], strides = [1, 1]} : vector<16x96xf32> to vector<16x8xf32>
    %211 = vector.shape_cast %210 : vector<16x8xf32> to vector<2x8x8xf32>
    %212 = tpu.concatenate %205, %207, %209, %211 in 0 : vector<2x8x8xf32>, vector<2x8x8xf32>, vector<2x8x8xf32>, vector<2x8x8xf32> -> vector<8x8x8xf32>
    %213 = vector.extract_strided_slice %203 {offsets = [0, 32], sizes = [16, 8], strides = [1, 1]} : vector<16x96xf32> to vector<16x8xf32>
    %214 = vector.shape_cast %213 : vector<16x8xf32> to vector<2x8x8xf32>
    %215 = vector.extract_strided_slice %203 {offsets = [0, 40], sizes = [16, 8], strides = [1, 1]} : vector<16x96xf32> to vector<16x8xf32>
    %216 = vector.shape_cast %215 : vector<16x8xf32> to vector<2x8x8xf32>
    %217 = vector.extract_strided_slice %203 {offsets = [0, 48], sizes = [16, 8], strides = [1, 1]} : vector<16x96xf32> to vector<16x8xf32>
    %218 = vector.shape_cast %217 : vector<16x8xf32> to vector<2x8x8xf32>
    %219 = vector.extract_strided_slice %203 {offsets = [0, 56], sizes = [16, 8], strides = [1, 1]} : vector<16x96xf32> to vector<16x8xf32>
    %220 = vector.shape_cast %219 : vector<16x8xf32> to vector<2x8x8xf32>
    %221 = tpu.concatenate %214, %216, %218, %220 in 0 : vector<2x8x8xf32>, vector<2x8x8xf32>, vector<2x8x8xf32>, vector<2x8x8xf32> -> vector<8x8x8xf32>
    %222 = vector.extract_strided_slice %203 {offsets = [0, 64], sizes = [16, 8], strides = [1, 1]} : vector<16x96xf32> to vector<16x8xf32>
    %223 = vector.shape_cast %222 : vector<16x8xf32> to vector<2x8x8xf32>
    %224 = vector.extract_strided_slice %203 {offsets = [0, 72], sizes = [16, 8], strides = [1, 1]} : vector<16x96xf32> to vector<16x8xf32>
    %225 = vector.shape_cast %224 : vector<16x8xf32> to vector<2x8x8xf32>
    %226 = vector.extract_strided_slice %203 {offsets = [0, 80], sizes = [16, 8], strides = [1, 1]} : vector<16x96xf32> to vector<16x8xf32>
    %227 = vector.shape_cast %226 : vector<16x8xf32> to vector<2x8x8xf32>
    %228 = vector.extract_strided_slice %203 {offsets = [0, 88], sizes = [16, 8], strides = [1, 1]} : vector<16x96xf32> to vector<16x8xf32>
    %229 = vector.shape_cast %228 : vector<16x8xf32> to vector<2x8x8xf32>
    %230 = tpu.concatenate %223, %225, %227, %229 in 0 : vector<2x8x8xf32>, vector<2x8x8xf32>, vector<2x8x8xf32>, vector<2x8x8xf32> -> vector<8x8x8xf32>
    "tpu.trace_start"() <{level = 10 : i32, message = "gqd,gkd->gqk"}> : () -> ()
    %cst_80 = arith.constant dense<0.000000e+00> : vector<8x8x8xf32>
    %231 = tpu.matmul %212, %221, %cst_80 {dimension_numbers = #tpu.dot_dimension_numbers<[2], [2], [1], [1], [0, 0, 0, 1, 1, 1], [0], [0]>} : vector<8x8x8xf32>, vector<8x8x8xf32>, vector<8x8x8xf32> -> vector<8x8x8xf32>
    "tpu.trace_stop"() : () -> ()
    %cst_81 = arith.constant 0.353553385 : f32
    %232 = vector.broadcast %cst_81 : f32 to vector<8x8x8xf32>
    %233 = arith.mulf %231, %232 : vector<8x8x8xf32>
    %cst_82 = arith.constant dense<0xFF800000> : vector<8x8xf32>
    %234 = vector.multi_reduction <maximumf>, %233, %cst_82 [2] : vector<8x8x8xf32> to vector<8x8xf32>
    %235 = vector.shape_cast %234 : vector<8x8xf32> to vector<8x8x1xf32>
    %236 = vector.broadcast %235 : vector<8x8x1xf32> to vector<8x8x8xf32>
    %237 = arith.subf %233, %236 : vector<8x8x8xf32>
    %238 = math.exp %237 : vector<8x8x8xf32>
    %cst_83 = arith.constant dense<0.000000e+00> : vector<8x8xf32>
    %239 = vector.multi_reduction <add>, %238, %cst_83 [2] : vector<8x8x8xf32> to vector<8x8xf32>
    %240 = vector.shape_cast %239 : vector<8x8xf32> to vector<8x8x1xf32>
    %241 = vector.broadcast %240 : vector<8x8x1xf32> to vector<8x8x8xf32>
    %242 = arith.divf %238, %241 : vector<8x8x8xf32>
    "tpu.trace_start"() <{level = 10 : i32, message = "gqk,gkd->gqd"}> : () -> ()
    %cst_84 = arith.constant dense<0.000000e+00> : vector<8x8x8xf32>
    %243 = tpu.matmul %242, %230, %cst_84 {dimension_numbers = #tpu.dot_dimension_numbers<[2], [1], [1], [2], [0, 0, 0, 1, 1, 2], [0], [0]>} : vector<8x8x8xf32>, vector<8x8x8xf32>, vector<8x8x8xf32> -> vector<8x8x8xf32>
    "tpu.trace_stop"() : () -> ()
    %244 = vector.extract_strided_slice %243 {offsets = [0, 0, 0], sizes = [2, 8, 8], strides = [1, 1, 1]} : vector<8x8x8xf32> to vector<2x8x8xf32>
    %245 = vector.shape_cast %244 : vector<2x8x8xf32> to vector<16x8xf32>
    %246 = vector.extract_strided_slice %243 {offsets = [2, 0, 0], sizes = [2, 8, 8], strides = [1, 1, 1]} : vector<8x8x8xf32> to vector<2x8x8xf32>
    %247 = vector.shape_cast %246 : vector<2x8x8xf32> to vector<16x8xf32>
    %248 = vector.extract_strided_slice %243 {offsets = [4, 0, 0], sizes = [2, 8, 8], strides = [1, 1, 1]} : vector<8x8x8xf32> to vector<2x8x8xf32>
    %249 = vector.shape_cast %248 : vector<2x8x8xf32> to vector<16x8xf32>
    %250 = vector.extract_strided_slice %243 {offsets = [6, 0, 0], sizes = [2, 8, 8], strides = [1, 1, 1]} : vector<8x8x8xf32> to vector<2x8x8xf32>
    %251 = vector.shape_cast %250 : vector<2x8x8xf32> to vector<16x8xf32>
    %252 = tpu.concatenate %245, %247, %249, %251 in 1 : vector<16x8xf32>, vector<16x8xf32>, vector<16x8xf32>, vector<16x8xf32> -> vector<16x32xf32>
    %cst_85 = arith.constant dense<0.000000e+00> : vector<16x32xf32>
    %253 = tpu.matmul %252, %195, %cst_85 {dimension_numbers = #tpu.dot_dimension_numbers<[1], [0], [0], [1], [0, 0, 1, 1], [], []>} : vector<16x32xf32>, vector<32x32xf32>, vector<16x32xf32> -> vector<16x32xf32>
    %c11 = arith.constant 11 : index
    %c0_86 = arith.constant 0 : index
    %254 = vector.load %arg5[%c11, %c0_86] : memref<24x128xf32, #tpu.memory_space<vmem>>, vector<1x32xf32>
    %255 = vector.broadcast %254 : vector<1x32xf32> to vector<16x32xf32>
    %256 = arith.addf %253, %255 : vector<16x32xf32>
    %257 = arith.addf %256, %191 : vector<16x32xf32>
    %c12 = arith.constant 12 : index
    %c0_87 = arith.constant 0 : index
    %258 = vector.load %arg5[%c12, %c0_87] : memref<24x128xf32, #tpu.memory_space<vmem>>, vector<1x32xf32>
    %c13 = arith.constant 13 : index
    %c0_88 = arith.constant 0 : index
    %259 = vector.load %arg5[%c13, %c0_88] : memref<24x128xf32, #tpu.memory_space<vmem>>, vector<1x32xf32>
    %cst_89 = arith.constant dense<0.000000e+00> : vector<16xf32>
    %260 = vector.multi_reduction <add>, %257, %cst_89 [1] : vector<16x32xf32> to vector<16xf32>
    %261 = vector.shape_cast %260 : vector<16xf32> to vector<16x1xf32>
    %cst_90 = arith.constant 3.200000e+01 : f32
    %262 = vector.broadcast %cst_90 : f32 to vector<16x1xf32>
    %263 = arith.divf %261, %262 : vector<16x1xf32>
    %264 = vector.broadcast %263 : vector<16x1xf32> to vector<16x32xf32>
    %265 = arith.subf %257, %264 : vector<16x32xf32>
    %266 = arith.mulf %265, %265 : vector<16x32xf32>
    %cst_91 = arith.constant dense<0.000000e+00> : vector<16xf32>
    %267 = vector.multi_reduction <add>, %266, %cst_91 [1] : vector<16x32xf32> to vector<16xf32>
    %268 = vector.shape_cast %267 : vector<16xf32> to vector<16x1xf32>
    %cst_92 = arith.constant 3.200000e+01 : f32
    %269 = vector.broadcast %cst_92 : f32 to vector<16x1xf32>
    %270 = arith.divf %268, %269 : vector<16x1xf32>
    %cst_93 = arith.constant 9.99999996E-13 : f32
    %271 = vector.broadcast %cst_93 : f32 to vector<16x1xf32>
    %272 = arith.addf %270, %271 : vector<16x1xf32>
    %273 = math.rsqrt %272 : vector<16x1xf32>
    %274 = vector.broadcast %273 : vector<16x1xf32> to vector<16x32xf32>
    %275 = arith.mulf %265, %274 : vector<16x32xf32>
    %276 = vector.broadcast %258 : vector<1x32xf32> to vector<16x32xf32>
    %277 = arith.mulf %275, %276 : vector<16x32xf32>
    %278 = vector.broadcast %259 : vector<1x32xf32> to vector<16x32xf32>
    %279 = arith.addf %277, %278 : vector<16x32xf32>
    %cst_94 = arith.constant dense<0.000000e+00> : vector<16x128xf32>
    %280 = tpu.matmul %279, %197, %cst_94 {dimension_numbers = #tpu.dot_dimension_numbers<[1], [0], [0], [1], [0, 0, 1, 1], [], []>} : vector<16x32xf32>, vector<32x128xf32>, vector<16x128xf32> -> vector<16x128xf32>
    %c14 = arith.constant 14 : index
    %c0_95 = arith.constant 0 : index
    %281 = vector.load %arg5[%c14, %c0_95] : memref<24x128xf32, #tpu.memory_space<vmem>>, vector<1x128xf32>
    %282 = vector.broadcast %281 : vector<1x128xf32> to vector<16x128xf32>
    %283 = arith.addf %280, %282 : vector<16x128xf32>
    %cst_96 = arith.constant 5.000000e-01 : f32
    %284 = vector.broadcast %cst_96 : f32 to vector<16x128xf32>
    %285 = arith.mulf %284, %283 : vector<16x128xf32>
    %cst_97 = arith.constant 0.707106769 : f32
    %286 = vector.broadcast %cst_97 : f32 to vector<16x128xf32>
    %287 = arith.mulf %283, %286 : vector<16x128xf32>
    %cst_98 = arith.constant 0.000000e+00 : f32
    %288 = vector.broadcast %cst_98 : f32 to vector<16x128xf32>
    %289 = arith.cmpf oge, %287, %288 : vector<16x128xf32>
    %cst_99 = arith.constant 1.000000e+00 : f32
    %cst_100 = arith.constant -1.000000e+00 : f32
    %290 = vector.broadcast %cst_99 : f32 to vector<16x128xf32>
    %291 = vector.broadcast %cst_100 : f32 to vector<16x128xf32>
    %292 = arith.select %289, %290, %291 : vector<16x128xi1>, vector<16x128xf32>
    %293 = math.absf %287 : vector<16x128xf32>
    %cst_101 = arith.constant 0.327591091 : f32
    %294 = vector.broadcast %cst_101 : f32 to vector<16x128xf32>
    %295 = arith.mulf %294, %293 : vector<16x128xf32>
    %cst_102 = arith.constant 1.000000e+00 : f32
    %296 = vector.broadcast %cst_102 : f32 to vector<16x128xf32>
    %297 = arith.addf %296, %295 : vector<16x128xf32>
    %cst_103 = arith.constant 1.000000e+00 : f32
    %298 = vector.broadcast %cst_103 : f32 to vector<16x128xf32>
    %299 = arith.divf %298, %297 : vector<16x128xf32>
    %cst_104 = arith.constant 1.06140542 : f32
    %300 = vector.broadcast %cst_104 : f32 to vector<16x128xf32>
    %301 = arith.mulf %300, %299 : vector<16x128xf32>
    %cst_105 = arith.constant -1.45315206 : f32
    %302 = vector.broadcast %cst_105 : f32 to vector<16x128xf32>
    %303 = arith.addf %301, %302 : vector<16x128xf32>
    %304 = arith.mulf %303, %299 : vector<16x128xf32>
    %cst_106 = arith.constant 1.42141378 : f32
    %305 = vector.broadcast %cst_106 : f32 to vector<16x128xf32>
    %306 = arith.addf %304, %305 : vector<16x128xf32>
    %307 = arith.mulf %306, %299 : vector<16x128xf32>
    %cst_107 = arith.constant -0.284496725 : f32
    %308 = vector.broadcast %cst_107 : f32 to vector<16x128xf32>
    %309 = arith.addf %307, %308 : vector<16x128xf32>
    %310 = arith.mulf %309, %299 : vector<16x128xf32>
    %cst_108 = arith.constant 0.254829586 : f32
    %311 = vector.broadcast %cst_108 : f32 to vector<16x128xf32>
    %312 = arith.addf %310, %311 : vector<16x128xf32>
    %313 = arith.mulf %312, %299 : vector<16x128xf32>
    %cst_109 = arith.constant 0.000000e+00 : f32
    %314 = vector.broadcast %cst_109 : f32 to vector<16x128xf32>
    %315 = arith.subf %314, %293 : vector<16x128xf32>
    %316 = arith.mulf %315, %293 : vector<16x128xf32>
    %317 = math.exp %316 : vector<16x128xf32>
    %318 = arith.mulf %313, %317 : vector<16x128xf32>
    %cst_110 = arith.constant 1.000000e+00 : f32
    %319 = vector.broadcast %cst_110 : f32 to vector<16x128xf32>
    %320 = arith.subf %319, %318 : vector<16x128xf32>
    %321 = arith.mulf %292, %320 : vector<16x128xf32>
    %cst_111 = arith.constant 1.000000e+00 : f32
    %322 = vector.broadcast %cst_111 : f32 to vector<16x128xf32>
    %323 = arith.addf %322, %321 : vector<16x128xf32>
    %324 = arith.mulf %285, %323 : vector<16x128xf32>
    %cst_112 = arith.constant dense<0.000000e+00> : vector<16x32xf32>
    %325 = tpu.matmul %324, %199, %cst_112 {dimension_numbers = #tpu.dot_dimension_numbers<[1], [0], [0], [1], [0, 0, 1, 1], [], []>} : vector<16x128xf32>, vector<128x32xf32>, vector<16x32xf32> -> vector<16x32xf32>
    %c15 = arith.constant 15 : index
    %c0_113 = arith.constant 0 : index
    %326 = vector.load %arg5[%c15, %c0_113] : memref<24x128xf32, #tpu.memory_space<vmem>>, vector<1x32xf32>
    %327 = vector.broadcast %326 : vector<1x32xf32> to vector<16x32xf32>
    %328 = arith.addf %325, %327 : vector<16x32xf32>
    %329 = arith.addf %328, %279 : vector<16x32xf32>
    %c16 = arith.constant 16 : index
    %c0_114 = arith.constant 0 : index
    %330 = vector.load %arg5[%c16, %c0_114] : memref<24x128xf32, #tpu.memory_space<vmem>>, vector<1x32xf32>
    %c17 = arith.constant 17 : index
    %c0_115 = arith.constant 0 : index
    %331 = vector.load %arg5[%c17, %c0_115] : memref<24x128xf32, #tpu.memory_space<vmem>>, vector<1x32xf32>
    %cst_116 = arith.constant dense<0.000000e+00> : vector<16xf32>
    %332 = vector.multi_reduction <add>, %329, %cst_116 [1] : vector<16x32xf32> to vector<16xf32>
    %333 = vector.shape_cast %332 : vector<16xf32> to vector<16x1xf32>
    %cst_117 = arith.constant 3.200000e+01 : f32
    %334 = vector.broadcast %cst_117 : f32 to vector<16x1xf32>
    %335 = arith.divf %333, %334 : vector<16x1xf32>
    %336 = vector.broadcast %335 : vector<16x1xf32> to vector<16x32xf32>
    %337 = arith.subf %329, %336 : vector<16x32xf32>
    %338 = arith.mulf %337, %337 : vector<16x32xf32>
    %cst_118 = arith.constant dense<0.000000e+00> : vector<16xf32>
    %339 = vector.multi_reduction <add>, %338, %cst_118 [1] : vector<16x32xf32> to vector<16xf32>
    %340 = vector.shape_cast %339 : vector<16xf32> to vector<16x1xf32>
    %cst_119 = arith.constant 3.200000e+01 : f32
    %341 = vector.broadcast %cst_119 : f32 to vector<16x1xf32>
    %342 = arith.divf %340, %341 : vector<16x1xf32>
    %cst_120 = arith.constant 9.99999996E-13 : f32
    %343 = vector.broadcast %cst_120 : f32 to vector<16x1xf32>
    %344 = arith.addf %342, %343 : vector<16x1xf32>
    %345 = math.rsqrt %344 : vector<16x1xf32>
    %346 = vector.broadcast %345 : vector<16x1xf32> to vector<16x32xf32>
    %347 = arith.mulf %337, %346 : vector<16x32xf32>
    %348 = vector.broadcast %330 : vector<1x32xf32> to vector<16x32xf32>
    %349 = arith.mulf %347, %348 : vector<16x32xf32>
    %350 = vector.broadcast %331 : vector<1x32xf32> to vector<16x32xf32>
    %351 = arith.addf %349, %350 : vector<16x32xf32>
    %c2_121 = arith.constant 2 : index
    %c0_122 = arith.constant 0 : index
    %c0_123 = arith.constant 0 : index
    %352 = vector.load %arg3[%c2_121, %c0_122, %c0_123] : memref<3x32x384xf32, #tpu.memory_space<vmem>>, vector<1x32x32xf32>
    %353 = vector.shape_cast %352 : vector<1x32x32xf32> to vector<32x32xf32>
    %cst_124 = arith.constant dense<0.000000e+00> : vector<16x32xf32>
    %354 = tpu.matmul %351, %353, %cst_124 {dimension_numbers = #tpu.dot_dimension_numbers<[1], [0], [0], [1], [0, 0, 1, 1], [], []>} : vector<16x32xf32>, vector<32x32xf32>, vector<16x32xf32> -> vector<16x32xf32>
    %c18 = arith.constant 18 : index
    %c0_125 = arith.constant 0 : index
    %355 = vector.load %arg5[%c18, %c0_125] : memref<24x128xf32, #tpu.memory_space<vmem>>, vector<1x32xf32>
    %356 = vector.broadcast %355 : vector<1x32xf32> to vector<16x32xf32>
    %357 = arith.addf %354, %356 : vector<16x32xf32>
    %cst_126 = arith.constant 5.000000e-01 : f32
    %358 = vector.broadcast %cst_126 : f32 to vector<16x32xf32>
    %359 = arith.mulf %358, %357 : vector<16x32xf32>
    %cst_127 = arith.constant 0.707106769 : f32
    %360 = vector.broadcast %cst_127 : f32 to vector<16x32xf32>
    %361 = arith.mulf %357, %360 : vector<16x32xf32>
    %cst_128 = arith.constant 0.000000e+00 : f32
    %362 = vector.broadcast %cst_128 : f32 to vector<16x32xf32>
    %363 = arith.cmpf oge, %361, %362 : vector<16x32xf32>
    %cst_129 = arith.constant 1.000000e+00 : f32
    %cst_130 = arith.constant -1.000000e+00 : f32
    %364 = vector.broadcast %cst_129 : f32 to vector<16x32xf32>
    %365 = vector.broadcast %cst_130 : f32 to vector<16x32xf32>
    %366 = arith.select %363, %364, %365 : vector<16x32xi1>, vector<16x32xf32>
    %367 = math.absf %361 : vector<16x32xf32>
    %cst_131 = arith.constant 0.327591091 : f32
    %368 = vector.broadcast %cst_131 : f32 to vector<16x32xf32>
    %369 = arith.mulf %368, %367 : vector<16x32xf32>
    %cst_132 = arith.constant 1.000000e+00 : f32
    %370 = vector.broadcast %cst_132 : f32 to vector<16x32xf32>
    %371 = arith.addf %370, %369 : vector<16x32xf32>
    %cst_133 = arith.constant 1.000000e+00 : f32
    %372 = vector.broadcast %cst_133 : f32 to vector<16x32xf32>
    %373 = arith.divf %372, %371 : vector<16x32xf32>
    %cst_134 = arith.constant 1.06140542 : f32
    %374 = vector.broadcast %cst_134 : f32 to vector<16x32xf32>
    %375 = arith.mulf %374, %373 : vector<16x32xf32>
    %cst_135 = arith.constant -1.45315206 : f32
    %376 = vector.broadcast %cst_135 : f32 to vector<16x32xf32>
    %377 = arith.addf %375, %376 : vector<16x32xf32>
    %378 = arith.mulf %377, %373 : vector<16x32xf32>
    %cst_136 = arith.constant 1.42141378 : f32
    %379 = vector.broadcast %cst_136 : f32 to vector<16x32xf32>
    %380 = arith.addf %378, %379 : vector<16x32xf32>
    %381 = arith.mulf %380, %373 : vector<16x32xf32>
    %cst_137 = arith.constant -0.284496725 : f32
    %382 = vector.broadcast %cst_137 : f32 to vector<16x32xf32>
    %383 = arith.addf %381, %382 : vector<16x32xf32>
    %384 = arith.mulf %383, %373 : vector<16x32xf32>
    %cst_138 = arith.constant 0.254829586 : f32
    %385 = vector.broadcast %cst_138 : f32 to vector<16x32xf32>
    %386 = arith.addf %384, %385 : vector<16x32xf32>
    %387 = arith.mulf %386, %373 : vector<16x32xf32>
    %cst_139 = arith.constant 0.000000e+00 : f32
    %388 = vector.broadcast %cst_139 : f32 to vector<16x32xf32>
    %389 = arith.subf %388, %367 : vector<16x32xf32>
    %390 = arith.mulf %389, %367 : vector<16x32xf32>
    %391 = math.exp %390 : vector<16x32xf32>
    %392 = arith.mulf %387, %391 : vector<16x32xf32>
    %cst_140 = arith.constant 1.000000e+00 : f32
    %393 = vector.broadcast %cst_140 : f32 to vector<16x32xf32>
    %394 = arith.subf %393, %392 : vector<16x32xf32>
    %395 = arith.mulf %366, %394 : vector<16x32xf32>
    %cst_141 = arith.constant 1.000000e+00 : f32
    %396 = vector.broadcast %cst_141 : f32 to vector<16x32xf32>
    %397 = arith.addf %396, %395 : vector<16x32xf32>
    %398 = arith.mulf %359, %397 : vector<16x32xf32>
    %c19 = arith.constant 19 : index
    %c0_142 = arith.constant 0 : index
    %399 = vector.load %arg5[%c19, %c0_142] : memref<24x128xf32, #tpu.memory_space<vmem>>, vector<1x32xf32>
    %c20 = arith.constant 20 : index
    %c0_143 = arith.constant 0 : index
    %400 = vector.load %arg5[%c20, %c0_143] : memref<24x128xf32, #tpu.memory_space<vmem>>, vector<1x32xf32>
    %cst_144 = arith.constant dense<0.000000e+00> : vector<16xf32>
    %401 = vector.multi_reduction <add>, %398, %cst_144 [1] : vector<16x32xf32> to vector<16xf32>
    %402 = vector.shape_cast %401 : vector<16xf32> to vector<16x1xf32>
    %cst_145 = arith.constant 3.200000e+01 : f32
    %403 = vector.broadcast %cst_145 : f32 to vector<16x1xf32>
    %404 = arith.divf %402, %403 : vector<16x1xf32>
    %405 = vector.broadcast %404 : vector<16x1xf32> to vector<16x32xf32>
    %406 = arith.subf %398, %405 : vector<16x32xf32>
    %407 = arith.mulf %406, %406 : vector<16x32xf32>
    %cst_146 = arith.constant dense<0.000000e+00> : vector<16xf32>
    %408 = vector.multi_reduction <add>, %407, %cst_146 [1] : vector<16x32xf32> to vector<16xf32>
    %409 = vector.shape_cast %408 : vector<16xf32> to vector<16x1xf32>
    %cst_147 = arith.constant 3.200000e+01 : f32
    %410 = vector.broadcast %cst_147 : f32 to vector<16x1xf32>
    %411 = arith.divf %409, %410 : vector<16x1xf32>
    %cst_148 = arith.constant 9.99999996E-13 : f32
    %412 = vector.broadcast %cst_148 : f32 to vector<16x1xf32>
    %413 = arith.addf %411, %412 : vector<16x1xf32>
    %414 = math.rsqrt %413 : vector<16x1xf32>
    %415 = vector.broadcast %414 : vector<16x1xf32> to vector<16x32xf32>
    %416 = arith.mulf %406, %415 : vector<16x32xf32>
    %417 = vector.broadcast %399 : vector<1x32xf32> to vector<16x32xf32>
    %418 = arith.mulf %416, %417 : vector<16x32xf32>
    %419 = vector.broadcast %400 : vector<1x32xf32> to vector<16x32xf32>
    %420 = arith.addf %418, %419 : vector<16x32xf32>
    %cst_149 = arith.constant dense<0.000000e+00> : vector<16x128xf32>
    %421 = tpu.matmul %420, %0, %cst_149 {dimension_numbers = #tpu.dot_dimension_numbers<[1], [1], [0], [0], [0, 0, 1, 0], [], []>} : vector<16x32xf32>, vector<128x32xf32>, vector<16x128xf32> -> vector<16x128xf32>
    %c0_150 = arith.constant 0 : index
    %c0_151 = arith.constant 0 : index
    %422 = vector.load %arg6[%c0_150, %c0_151] : memref<16x128xf32, #tpu.memory_space<vmem>>, vector<16x128xf32>
    tpu.vector_store %arg6[%c0_150, %c0_151], %421 {strides = array<i32>} : memref<16x128xf32, #tpu.memory_space<vmem>>, vector<16x128xf32>,
    return
  }
}

</mosaic_0001>

<llo_original>
// kernel: _lambda_.1
$region0: #{_lambda_.1}
  #allocation0 [shape = 'u32[]', space=smem, size = 0x4, offset = 0x4, fixed_abs, tag = 'smem constant byte address 0x4 - core index']
  #allocation1 [shape = 'u32[144,128]{1,0:T(1,128)}', space=vmem, size = 0x12000, scoped, tag = 'internal scratch']
  %s0 = inlined_call_operand.vmem [shape: s32[16,1], index: 0, kind: input, shape index: {}]
  %s1 = inlined_call_operand.vmem [shape: f32[16,32], index: 1, kind: input, shape index: {}]
  %s2 = inlined_call_operand.vmem [shape: f32[128,32], index: 2, kind: input, shape index: {}]
  %s3 = inlined_call_operand.vmem [shape: f32[3,32,384], index: 3, kind: input, shape index: {}]
  %s4 = inlined_call_operand.vmem [shape: f32[2,128,32], index: 4, kind: input, shape index: {}]
  %s5 = inlined_call_operand.vmem [shape: f32[24,128], index: 5, kind: input, shape index: {}]
  %s6 = inlined_call_operand.vmem [shape: f32[16,128], index: 6, kind: output, shape index: {}]
  %s7 = sld [smem:[#allocation0]]
  $region34: #{_lambda_.1} parent=0
    _
  %s9 = ssub.s32 1, %s7
  %s10 = scalar_select 0, %s9, %s7
  // Predicated region
  $region2: #{_lambda_.1} parent=0 // pred_check
    _
  $region3: #{_lambda_.1} parent=0 // pred_check_branch
    %12 = sbr.rel (0) target = $region5
  $region4: #{_lambda_.1} parent=0 // pred_region
    _
  $region5: #{_lambda_.1} parent=0 // pred_fallthru
    _
  // Predicated region
  $region6: #{_lambda_.1} parent=0 // pred_check
    _
  $region7: #{_lambda_.1} parent=0 // pred_check_branch
    %14 = sbr.rel (0) target = $region9
  $region8: #{_lambda_.1} parent=0 // pred_region
    _
  $region9: #{_lambda_.1} parent=0 // pred_fallthru
    _
  // Predicated region
  $region10: #{_lambda_.1} parent=0 // pred_check
    _
  $region11: #{_lambda_.1} parent=0 // pred_check_branch
    %16 = sbr.rel (0) target = $region13
  $region12: #{_lambda_.1} parent=0 // pred_region
    _
  $region13: #{_lambda_.1} parent=0 // pred_fallthru
    _
  // Predicated region
  $region14: #{_lambda_.1} parent=0 // pred_check
    _
  $region15: #{_lambda_.1} parent=0 // pred_check_branch
    %18 = sbr.rel (0) target = $region17
  $region16: #{_lambda_.1} parent=0 // pred_region
    _
  $region17: #{_lambda_.1} parent=0 // pred_fallthru
    _
  // Predicated region
  $region18: #{_lambda_.1} parent=0 // pred_check
    _
  $region19: #{_lambda_.1} parent=0 // pred_check_branch
    %20 = sbr.rel (0) target = $region21
  $region20: #{_lambda_.1} parent=0 // pred_region
    _
  $region21: #{_lambda_.1} parent=0 // pred_fallthru
    _
  // Predicated region
  $region22: #{_lambda_.1} parent=0 // pred_check
    _
  $region23: #{_lambda_.1} parent=0 // pred_check_branch
    %22 = sbr.rel (0) target = $region25
  $region24: #{_lambda_.1} parent=0 // pred_region
    _
  $region25: #{_lambda_.1} parent=0 // pred_fallthru
    _
  %v23 = vld [vmem:[%s2] sm:$0xff]
  %v24 = vld [vmem:[%s2 + $0x8] sm:$0xff]
  %v25 = vld [vmem:[%s2 + $0x10] sm:$0xff]
  %v26 = vld [vmem:[%s2 + $0x18] sm:$0xff]
  %v27 = vld [vmem:[%s2 + $0x20] sm:$0xff]
  %v28 = vld [vmem:[%s2 + $0x28] sm:$0xff]
  %v29 = vld [vmem:[%s2 + $0x30] sm:$0xff]
  %v30 = vld [vmem:[%s2 + $0x38] sm:$0xff]
  %v31 = vld [vmem:[%s2 + $0x40] sm:$0xff]
  %v32 = vld [vmem:[%s2 + $0x48] sm:$0xff]
  %v33 = vld [vmem:[%s2 + $0x50] sm:$0xff]
  %v34 = vld [vmem:[%s2 + $0x58] sm:$0xff]
  %v35 = vld [vmem:[%s2 + $0x60] sm:$0xff]
  %v36 = vld [vmem:[%s2 + $0x68] sm:$0xff]
  %v37 = vld [vmem:[%s2 + $0x70] sm:$0xff]
  %v38 = vld [vmem:[%s2 + $0x78] sm:$0xff]
  %v39 = vlaneseq
  %v40 = vand.u32 %v39, 127
  %v41 = vld [vmem:[%s0] sm:$0xff]
  %v42 = vld [vmem:[%s0 + $0x8] sm:$0xff]
  %43 = vset.pattern.permute.xlu0 0
  %44 = vperm.xlu0 %43, %v41
  %v45 = vpop.permute.xlu0 %44
  %46 = vset.pattern.permute.xlu0 0
  %47 = vperm.xlu0 %46, %v42
  %v48 = vpop.permute.xlu0 %47
  %vm49 = vcmp.eq.s32.totalorder %v40, %v45
  %vm50 = vcmp.eq.s32.totalorder %v40, %v48
  %v51 = vsel %vm49, 1, 0
  %v52 = vsel %vm50, 1, 0
  %v53 = vcvt.s32.f32 %v51
  %v54 = vcvt.s32.f32 %v52
  %v55 = vld [vmem:[%s1] sm:$0xff]
  %v56 = vld [vmem:[%s1 + $0x8] sm:$0xff]
  %57 = vmatprep.subr.mxu0 0.0
  %58 = vmatpush1.msra.mxu0 %v23
  %59 = vmatprep.subr.mxu0 0.0
  %60 = vmatpush1.msra.mxu0 %v24
  %61 = vmatprep.subr.mxu0 0.0
  %62 = vmatpush1.msra.mxu0 %v25
  %63 = vmatprep.subr.mxu0 0.0
  %64 = vmatpush1.msra.mxu0 %v26
  %65 = vmatprep.subr.mxu0 0.0
  %66 = vmatpush1.msra.mxu0 %v27
  %67 = vmatprep.subr.mxu0 0.0
  %68 = vmatpush1.msra.mxu0 %v28
  %69 = vmatprep.subr.mxu0 0.0
  %70 = vmatpush1.msra.mxu0 %v29
  %71 = vmatprep.subr.mxu0 0.0
  %72 = vmatpush1.msra.mxu0 %v30
  %73 = vmatprep.subr.mxu0 0.0
  %74 = vmatpush1.msra.mxu0 %v31
  %75 = vmatprep.subr.mxu0 0.0
  %76 = vmatpush1.msra.mxu0 %v32
  %77 = vmatprep.subr.mxu0 0.0
  %78 = vmatpush1.msra.mxu0 %v33
  %79 = vmatprep.subr.mxu0 0.0
  %80 = vmatpush1.msra.mxu0 %v34
  %81 = vmatprep.subr.mxu0 0.0
  %82 = vmatpush1.msra.mxu0 %v35
  %83 = vmatprep.subr.mxu0 0.0
  %84 = vmatpush1.msra.mxu0 %v36
  %85 = vmatprep.subr.mxu0 0.0
  %86 = vmatpush1.msra.mxu0 %v37
  %87 = vmatprep.subr.mxu0 0.0
  %88 = vmatpush1.msra.mxu0 %v38
  %89 = vmatprep.subr.mxu0 0.0
  %90 = vmatpush1.msra.mxu0 0.0
  %91 = vmatprep.subr.mxu0 0.0
  %92 = vmatpush1.msra.mxu0 0.0
  %93 = vmatprep.subr.mxu0 0.0
  %94 = vmatpush1.msra.mxu0 0.0
  %95 = vmatprep.subr.mxu0 0.0
  %96 = vmatpush1.msra.mxu0 0.0
  %97 = vmatprep.subr.mxu0 0.0
  %98 = vmatpush1.msra.mxu0 0.0
  %99 = vmatprep.subr.mxu0 0.0
  %100 = vmatpush1.msra.mxu0 0.0
  %101 = vmatprep.subr.mxu0 0.0
  %102 = vmatpush1.msra.mxu0 0.0
  %103 = vmatprep.subr.mxu0 0.0
  %104 = vmatpush1.msra.mxu0 0.0
  %105 = vmatprep.subr.mxu0 0.0
  %106 = vmatpush1.msra.mxu0 0.0
  %107 = vmatprep.subr.mxu0 0.0
  %108 = vmatpush1.msra.mxu0 0.0
  %109 = vmatprep.subr.mxu0 0.0
  %110 = vmatpush1.msra.mxu0 0.0
  %111 = vmatprep.subr.mxu0 0.0
  %112 = vmatpush1.msra.mxu0 0.0
  %113 = vmatprep.subr.mxu0 0.0
  %114 = vmatpush1.msra.mxu0 0.0
  %115 = vmatprep.subr.mxu0 0.0
  %116 = vmatpush1.msra.mxu0 0.0
  %117 = vmatprep.subr.mxu0 0.0
  %118 = vmatpush1.msra.mxu0 0.0
  %119 = vmatprep.subr.mxu0 0.0
  %120 = vmatpush1.msra.mxu0 0.0
  %121 = vmatprep.mubr.f32.mxu0 0.0
  %122 = vmatmul.mubr.f32.gmra.mrb[0].mxu0 %v53
  %v123 = vpop.f32.mrb[0].mxu0
  %v124 = vadd.f32 %v55, %v123
  %v125 = vpop.f32.mrb[0].mxu0
  %126 = vmatprep.mubr.f32.mxu0 0.0
  %127 = vmatmul.mubr.f32.gmra.mrb[0].mxu0 %v54
  %v128 = vpop.f32.mrb[0].mxu0
  %v129 = vadd.f32 %v56, %v128
  %v130 = vpop.f32.mrb[0].mxu0
  %131 = vdwg.mxu0
  %v132 = vld [vmem:[%s5] sm:$0x1]
  %v133 = vld [vmem:[%s5 + $0x1] sm:$0x1]
  %vm134 = vcmask 261120
  %v135 = vsel %vm134, %v124, 0.0
  %136 = vadd.xlane.f32.xlu0 %v135
  %v137 = vpop.xlane.xlu0 %136
  %v138 = vsel %vm134, %v129, 0.0
  %139 = vadd.xlane.f32.xlu0 %v138
  %v140 = vpop.xlane.xlu0 %139
  %v141 = vrcp.pop 32.0
  %v142 = vmul.f32 %v137, %v141
  %v143 = vmul.f32 %v140, %v141
  %v144 = vsub.f32 %v124, %v142
  %v145 = vsub.f32 %v129, %v143
  %v146 = vmul.f32 %v144, %v144
  %v147 = vmul.f32 %v145, %v145
  %v148 = vsel %vm134, %v146, 0.0
  %149 = vadd.xlane.f32.xlu0 %v148
  %v150 = vpop.xlane.xlu0 %149
  %v151 = vsel %vm134, %v147, 0.0
  %152 = vadd.xlane.f32.xlu0 %v151
  %v153 = vpop.xlane.xlu0 %152
  %v154 = vmul.f32 %v150, %v141
  %v155 = vmul.f32 %v153, %v141
  %v156 = vadd.f32 %v154, 1e-05
  %v157 = vadd.f32 %v155, 1e-05
  %v158 = vrsqrt.pop %v156
  %v159 = vrsqrt.pop %v157
  %v160 = vmul.f32 %v144, %v158
  %v161 = vmul.f32 %v145, %v159
  %v162 = vlaneseq
  %v163 = vshrl.u32 %v162, 7
  %v164 = vsub.s32 0, %v163
  %v165 = vrot.slane %v132, %v164
  %v166 = vmul.f32 %v160, %v165
  %v167 = vmul.f32 %v161, %v165
  %v168 = vlaneseq
  %v169 = vshrl.u32 %v168, 7
  %v170 = vsub.s32 0, %v169
  %v171 = vrot.slane %v133, %v170
  %v172 = vadd.f32 %v166, %v171
  %v173 = vadd.f32 %v167, %v171
  %v174 = vld [vmem:[%s3] sm:$0xff]
  %v175 = vld [vmem:[%s3 + $0x18] sm:$0xff]
  %v176 = vld [vmem:[%s3 + $0x30] sm:$0xff]
  %v177 = vld [vmem:[%s3 + $0x48] sm:$0xff]
  %v178 = vld [vmem:[%s3 + $0x8] sm:$0xff]
  %v179 = vld [vmem:[%s3 + $0x20] sm:$0xff]
  %v180 = vld [vmem:[%s3 + $0x38] sm:$0xff]
  %v181 = vld [vmem:[%s3 + $0x50] sm:$0xff]
  %v182 = vld [vmem:[%s3 + $0x10] sm:$0xff]
  %v183 = vld [vmem:[%s3 + $0x28] sm:$0xff]
  %v184 = vld [vmem:[%s3 + $0x40] sm:$0xff]
  %v185 = vld [vmem:[%s3 + $0x58] sm:$0xff]
  %v186 = vld [vmem:[%s4] sm:$0xff]
  %v187 = vld [vmem:[%s4 + $0x8] sm:$0xff]
  %v188 = vld [vmem:[%s4 + $0x10] sm:$0xff]
  %v189 = vld [vmem:[%s4 + $0x18] sm:$0xff]
  %v190 = vld [vmem:[%s4 + $0x20] sm:$0xff]
  %v191 = vld [vmem:[%s4 + $0x28] sm:$0xff]
  %v192 = vld [vmem:[%s4 + $0x30] sm:$0xff]
  %v193 = vld [vmem:[%s4 + $0x38] sm:$0xff]
  %v194 = vld [vmem:[%s4 + $0x40] sm:$0xff]
  %v195 = vld [vmem:[%s4 + $0x48] sm:$0xff]
  %v196 = vld [vmem:[%s4 + $0x50] sm:$0xff]
  %v197 = vld [vmem:[%s4 + $0x58] sm:$0xff]
  %v198 = vld [vmem:[%s4 + $0x60] sm:$0xff]
  %v199 = vld [vmem:[%s4 + $0x68] sm:$0xff]
  %v200 = vld [vmem:[%s4 + $0x70] sm:$0xff]
  %v201 = vld [vmem:[%s4 + $0x78] sm:$0xff]
  %v202 = vld [vmem:[%s5 + $0x2] sm:$0x1]
  %v203 = vlaneseq
  %v204 = vshrl.u32 %v203, 7
  %v205 = vsub.s32 0, %v204
  %v206 = vrot.slane %v202, %v205
  %v208 = vsel %vm134, %v172, 0
  %v211 = vsel %vm134, %v173, 0
  %213 = vmatprep.subr.mxu0 0.0
  %214 = vmatpush1.msra.mxu0 %v174
  %215 = vmatprep.subr.mxu0 0.0
  %216 = vmatpush1.msra.mxu0 %v175
  %217 = vmatprep.subr.mxu0 0.0
  %218 = vmatpush1.msra.mxu0 %v176
  %219 = vmatprep.subr.mxu0 0.0
  %220 = vmatpush1.msra.mxu0 %v177
  %221 = vmatprep.subr.mxu0 0.0
  %222 = vmatpush1.msra.mxu0 0.0
  %223 = vmatprep.subr.mxu0 0.0
  %224 = vmatpush1.msra.mxu0 0.0
  %225 = vmatprep.subr.mxu0 0.0
  %226 = vmatpush1.msra.mxu0 0.0
  %227 = vmatprep.subr.mxu0 0.0
  %228 = vmatpush1.msra.mxu0 0.0
  %229 = vmatprep.subr.mxu0 0.0
  %230 = vmatpush1.msra.mxu0 0.0
  %231 = vmatprep.subr.mxu0 0.0
  %232 = vmatpush1.msra.mxu0 0.0
  %233 = vmatprep.subr.mxu0 0.0
  %234 = vmatpush1.msra.mxu0 0.0
  %235 = vmatprep.subr.mxu0 0.0
  %236 = vmatpush1.msra.mxu0 0.0
  %237 = vmatprep.subr.mxu0 0.0
  %238 = vmatpush1.msra.mxu0 0.0
  %239 = vmatprep.subr.mxu0 0.0
  %240 = vmatpush1.msra.mxu0 0.0
  %241 = vmatprep.subr.mxu0 0.0
  %242 = vmatpush1.msra.mxu0 0.0
  %243 = vmatprep.subr.mxu0 0.0
  %244 = vmatpush1.msra.mxu0 0.0
  %245 = vmatprep.subr.mxu0 0.0
  %246 = vmatpush1.msra.mxu0 0.0
  %247 = vmatprep.subr.mxu0 0.0
  %248 = vmatpush1.msra.mxu0 0.0
  %249 = vmatprep.subr.mxu0 0.0
  %250 = vmatpush1.msra.mxu0 0.0
  %251 = vmatprep.subr.mxu0 0.0
  %252 = vmatpush1.msra.mxu0 0.0
  %253 = vmatprep.subr.mxu0 0.0
  %254 = vmatpush1.msra.mxu0 0.0
  %255 = vmatprep.subr.mxu0 0.0
  %256 = vmatpush1.msra.mxu0 0.0
  %257 = vmatprep.subr.mxu0 0.0
  %258 = vmatpush1.msra.mxu0 0.0
  %259 = vmatprep.subr.mxu0 0.0
  %260 = vmatpush1.msra.mxu0 0.0
  %261 = vmatprep.subr.mxu0 0.0
  %262 = vmatpush1.msra.mxu0 0.0
  %263 = vmatprep.subr.mxu0 0.0
  %264 = vmatpush1.msra.mxu0 0.0
  %265 = vmatprep.subr.mxu0 0.0
  %266 = vmatpush1.msra.mxu0 0.0
  %267 = vmatprep.subr.mxu0 0.0
  %268 = vmatpush1.msra.mxu0 0.0
  %269 = vmatprep.subr.mxu0 0.0
  %270 = vmatpush1.msra.mxu0 0.0
  %271 = vmatprep.subr.mxu0 0.0
  %272 = vmatpush1.msra.mxu0 0.0
  %273 = vmatprep.subr.mxu0 0.0
  %274 = vmatpush1.msra.mxu0 0.0
  %275 = vmatprep.subr.mxu0 0.0
  %276 = vmatpush1.msra.mxu0 0.0
  %277 = vmatprep.mubr.f32.mxu0 0.0
  %278 = vmatmul.mubr.f32.gmra.mrb[0].mxu0 %v208
  %v279 = vpop.f32.mrb[0].mxu0
  %v280 = vadd.f32 %v206, %v279
  %v281 = vpop.f32.mrb[0].mxu0
  %282 = vmatprep.mubr.f32.mxu0 0.0
  %283 = vmatmul.mubr.f32.gmra.mrb[0].mxu0 %v211
  %v284 = vpop.f32.mrb[0].mxu0
  %v285 = vadd.f32 %v206, %v284
  %v286 = vpop.f32.mrb[0].mxu0
  %287 = vdwg.mxu0
  %290 = vrot.lane.b32.xlu0 %v280, 120
  %v291 = vpop.permute.xlu0 %290
  %292 = vrot.lane.b32.xlu0 %v285, 120
  %v293 = vpop.permute.xlu0 %292
  %294 = vrot.lane.b32.xlu0 %v280, 112
  %v295 = vpop.permute.xlu0 %294
  %296 = vrot.lane.b32.xlu0 %v285, 112
  %v297 = vpop.permute.xlu0 %296
  %298 = vrot.lane.b32.xlu0 %v280, 104
  %v299 = vpop.permute.xlu0 %298
  %300 = vrot.lane.b32.xlu0 %v285, 104
  %v301 = vpop.permute.xlu0 %300
  %302 = vrot.lane.b32.xlu0 %v280, 96
  %v303 = vpop.permute.xlu0 %302
  %vm304 = vcmask 64512
  %v305 = vsel %vm304, %v280, 0
  %v307 = vsel %vm304, %v303, 0
  %309 = vmatprep.subr.mxu0 0.0
  %310 = vmatpush1.xpose.msra.mxu0 %v307
  %311 = vmatprep.subr.mxu0 0.0
  %312 = vmatpush1.xpose.msra.mxu0 0.0
  %313 = vmatprep.subr.mxu0 0.0
  %314 = vmatpush1.xpose.msra.mxu0 0.0
  %315 = vmatprep.subr.mxu0 0.0
  %316 = vmatpush1.xpose.msra.mxu0 0.0
  %317 = vmatprep.subr.mxu0 0.0
  %318 = vmatpush1.xpose.msra.mxu0 0.0
  %319 = vmatprep.subr.mxu0 0.0
  %320 = vmatpush1.xpose.msra.mxu0 0.0
  %321 = vmatprep.subr.mxu0 0.0
  %322 = vmatpush1.xpose.msra.mxu0 0.0
  %323 = vmatprep.subr.mxu0 0.0
  %324 = vmatpush1.xpose.msra.mxu0 0.0
  %325 = vmatprep.subr.mxu0 0.0
  %326 = vmatpush1.xpose.msra.mxu0 0.0
  %327 = vmatprep.subr.mxu0 0.0
  %328 = vmatpush1.xpose.msra.mxu0 0.0
  %329 = vmatprep.subr.mxu0 0.0
  %330 = vmatpush1.xpose.msra.mxu0 0.0
  %331 = vmatprep.subr.mxu0 0.0
  %332 = vmatpush1.xpose.msra.mxu0 0.0
  %333 = vmatprep.subr.mxu0 0.0
  %334 = vmatpush1.xpose.msra.mxu0 0.0
  %335 = vmatprep.subr.mxu0 0.0
  %336 = vmatpush1.xpose.msra.mxu0 0.0
  %337 = vmatprep.subr.mxu0 0.0
  %338 = vmatpush1.xpose.msra.mxu0 0.0
  %339 = vmatprep.subr.mxu0 0.0
  %340 = vmatpush1.xpose.msra.mxu0 0.0
  %341 = vmatprep.subr.mxu0 0.0
  %342 = vmatpush1.xpose.msra.mxu0 0.0
  %343 = vmatprep.subr.mxu0 0.0
  %344 = vmatpush1.xpose.msra.mxu0 0.0
  %345 = vmatprep.subr.mxu0 0.0
  %346 = vmatpush1.xpose.msra.mxu0 0.0
  %347 = vmatprep.subr.mxu0 0.0
  %348 = vmatpush1.xpose.msra.mxu0 0.0
  %349 = vmatprep.subr.mxu0 0.0
  %350 = vmatpush1.xpose.msra.mxu0 0.0
  %351 = vmatprep.subr.mxu0 0.0
  %352 = vmatpush1.xpose.msra.mxu0 0.0
  %353 = vmatprep.subr.mxu0 0.0
  %354 = vmatpush1.xpose.msra.mxu0 0.0
  %355 = vmatprep.subr.mxu0 0.0
  %356 = vmatpush1.xpose.msra.mxu0 0.0
  %357 = vmatprep.subr.mxu0 0.0
  %358 = vmatpush1.xpose.msra.mxu0 0.0
  %359 = vmatprep.subr.mxu0 0.0
  %360 = vmatpush1.xpose.msra.mxu0 0.0
  %361 = vmatprep.subr.mxu0 0.0
  %362 = vmatpush1.xpose.msra.mxu0 0.0
  %363 = vmatprep.subr.mxu0 0.0
  %364 = vmatpush1.xpose.msra.mxu0 0.0
  %365 = vmatprep.subr.mxu0 0.0
  %366 = vmatpush1.xpose.msra.mxu0 0.0
  %367 = vmatprep.subr.mxu0 0.0
  %368 = vmatpush1.xpose.msra.mxu0 0.0
  %369 = vmatprep.subr.mxu0 0.0
  %370 = vmatpush1.xpose.msra.mxu0 0.0
  %371 = vmatprep.subr.mxu0 0.0
  %372 = vmatpush1.xpose.msra.mxu0 0.0
  %373 = vmatprep.mubr.f32.mxu0 0.0
  %374 = vmatmul.mubr.f32.gmra.mrb[0].mxu0 %v305
  %v375 = vpop.f32.mrb[0].mxu0
  %v376 = vadd.f32 0.0, %v375
  %v377 = vpop.f32.mrb[0].mxu0
  %378 = vdwg.mxu0
  %379 = vrot.lane.b32.xlu0 %v285, 96
  %v380 = vpop.permute.xlu0 %379
  %v381 = vsel %vm304, %v285, 0
  %v383 = vsel %vm304, %v380, 0
  %385 = vmatprep.subr.mxu0 0.0
  %386 = vmatpush1.xpose.msra.mxu0 %v383
  %387 = vmatprep.subr.mxu0 0.0
  %388 = vmatpush1.xpose.msra.mxu0 0.0
  %389 = vmatprep.subr.mxu0 0.0
  %390 = vmatpush1.xpose.msra.mxu0 0.0
  %391 = vmatprep.subr.mxu0 0.0
  %392 = vmatpush1.xpose.msra.mxu0 0.0
  %393 = vmatprep.subr.mxu0 0.0
  %394 = vmatpush1.xpose.msra.mxu0 0.0
  %395 = vmatprep.subr.mxu0 0.0
  %396 = vmatpush1.xpose.msra.mxu0 0.0
  %397 = vmatprep.subr.mxu0 0.0
  %398 = vmatpush1.xpose.msra.mxu0 0.0
  %399 = vmatprep.subr.mxu0 0.0
  %400 = vmatpush1.xpose.msra.mxu0 0.0
  %401 = vmatprep.subr.mxu0 0.0
  %402 = vmatpush1.xpose.msra.mxu0 0.0
  %403 = vmatprep.subr.mxu0 0.0
  %404 = vmatpush1.xpose.msra.mxu0 0.0
  %405 = vmatprep.subr.mxu0 0.0
  %406 = vmatpush1.xpose.msra.mxu0 0.0
  %407 = vmatprep.subr.mxu0 0.0
  %408 = vmatpush1.xpose.msra.mxu0 0.0
  %409 = vmatprep.subr.mxu0 0.0
  %410 = vmatpush1.xpose.msra.mxu0 0.0
  %411 = vmatprep.subr.mxu0 0.0
  %412 = vmatpush1.xpose.msra.mxu0 0.0
  %413 = vmatprep.subr.mxu0 0.0
  %414 = vmatpush1.xpose.msra.mxu0 0.0
  %415 = vmatprep.subr.mxu0 0.0
  %416 = vmatpush1.xpose.msra.mxu0 0.0
  %417 = vmatprep.subr.mxu0 0.0
  %418 = vmatpush1.xpose.msra.mxu0 0.0
  %419 = vmatprep.subr.mxu0 0.0
  %420 = vmatpush1.xpose.msra.mxu0 0.0
  %421 = vmatprep.subr.mxu0 0.0
  %422 = vmatpush1.xpose.msra.mxu0 0.0
  %423 = vmatprep.subr.mxu0 0.0
  %424 = vmatpush1.xpose.msra.mxu0 0.0
  %425 = vmatprep.subr.mxu0 0.0
  %426 = vmatpush1.xpose.msra.mxu0 0.0
  %427 = vmatprep.subr.mxu0 0.0
  %428 = vmatpush1.xpose.msra.mxu0 0.0
  %429 = vmatprep.subr.mxu0 0.0
  %430 = vmatpush1.xpose.msra.mxu0 0.0
  %431 = vmatprep.subr.mxu0 0.0
  %432 = vmatpush1.xpose.msra.mxu0 0.0
  %433 = vmatprep.subr.mxu0 0.0
  %434 = vmatpush1.xpose.msra.mxu0 0.0
  %435 = vmatprep.subr.mxu0 0.0
  %436 = vmatpush1.xpose.msra.mxu0 0.0
  %437 = vmatprep.subr.mxu0 0.0
  %438 = vmatpush1.xpose.msra.mxu0 0.0
  %439 = vmatprep.subr.mxu0 0.0
  %440 = vmatpush1.xpose.msra.mxu0 0.0
  %441 = vmatprep.subr.mxu0 0.0
  %442 = vmatpush1.xpose.msra.mxu0 0.0
  %443 = vmatprep.subr.mxu0 0.0
  %444 = vmatpush1.xpose.msra.mxu0 0.0
  %445 = vmatprep.subr.mxu0 0.0
  %446 = vmatpush1.xpose.msra.mxu0 0.0
  %447 = vmatprep.subr.mxu0 0.0
  %448 = vmatpush1.xpose.msra.mxu0 0.0
  %449 = vmatprep.mubr.f32.mxu0 0.0
  %450 = vmatmul.mubr.f32.gmra.mrb[0].mxu0 %v381
  %v451 = vpop.f32.mrb[0].mxu0
  %v452 = vadd.f32 0.0, %v451
  %v453 = vpop.f32.mrb[0].mxu0
  %454 = vdwg.mxu0
  %455 = vrot.lane.b32.xlu0 %v291, 96
  %v456 = vpop.permute.xlu0 %455
  %v457 = vsel %vm304, %v291, 0
  %v459 = vsel %vm304, %v456, 0
  %461 = vmatprep.subr.mxu0 0.0
  %462 = vmatpush1.xpose.msra.mxu0 %v459
  %463 = vmatprep.subr.mxu0 0.0
  %464 = vmatpush1.xpose.msra.mxu0 0.0
  %465 = vmatprep.subr.mxu0 0.0
  %466 = vmatpush1.xpose.msra.mxu0 0.0
  %467 = vmatprep.subr.mxu0 0.0
  %468 = vmatpush1.xpose.msra.mxu0 0.0
  %469 = vmatprep.subr.mxu0 0.0
  %470 = vmatpush1.xpose.msra.mxu0 0.0
  %471 = vmatprep.subr.mxu0 0.0
  %472 = vmatpush1.xpose.msra.mxu0 0.0
  %473 = vmatprep.subr.mxu0 0.0
  %474 = vmatpush1.xpose.msra.mxu0 0.0
  %475 = vmatprep.subr.mxu0 0.0
  %476 = vmatpush1.xpose.msra.mxu0 0.0
  %477 = vmatprep.subr.mxu0 0.0
  %478 = vmatpush1.xpose.msra.mxu0 0.0
  %479 = vmatprep.subr.mxu0 0.0
  %480 = vmatpush1.xpose.msra.mxu0 0.0
  %481 = vmatprep.subr.mxu0 0.0
  %482 = vmatpush1.xpose.msra.mxu0 0.0
  %483 = vmatprep.subr.mxu0 0.0
  %484 = vmatpush1.xpose.msra.mxu0 0.0
  %485 = vmatprep.subr.mxu0 0.0
  %486 = vmatpush1.xpose.msra.mxu0 0.0
  %487 = vmatprep.subr.mxu0 0.0
  %488 = vmatpush1.xpose.msra.mxu0 0.0
  %489 = vmatprep.subr.mxu0 0.0
  %490 = vmatpush1.xpose.msra.mxu0 0.0
  %491 = vmatprep.subr.mxu0 0.0
  %492 = vmatpush1.xpose.msra.mxu0 0.0
  %493 = vmatprep.subr.mxu0 0.0
  %494 = vmatpush1.xpose.msra.mxu0 0.0
  %495 = vmatprep.subr.mxu0 0.0
  %496 = vmatpush1.xpose.msra.mxu0 0.0
  %497 = vmatprep.subr.mxu0 0.0
  %498 = vmatpush1.xpose.msra.mxu0 0.0
  %499 = vmatprep.subr.mxu0 0.0
  %500 = vmatpush1.xpose.msra.mxu0 0.0
  %501 = vmatprep.subr.mxu0 0.0
  %502 = vmatpush1.xpose.msra.mxu0 0.0
  %503 = vmatprep.subr.mxu0 0.0
  %504 = vmatpush1.xpose.msra.mxu0 0.0
  %505 = vmatprep.subr.mxu0 0.0
  %506 = vmatpush1.xpose.msra.mxu0 0.0
  %507 = vmatprep.subr.mxu0 0.0
  %508 = vmatpush1.xpose.msra.mxu0 0.0
  %509 = vmatprep.subr.mxu0 0.0
  %510 = vmatpush1.xpose.msra.mxu0 0.0
  %511 = vmatprep.subr.mxu0 0.0
  %512 = vmatpush1.xpose.msra.mxu0 0.0
  %513 = vmatprep.subr.mxu0 0.0
  %514 = vmatpush1.xpose.msra.mxu0 0.0
  %515 = vmatprep.subr.mxu0 0.0
  %516 = vmatpush1.xpose.msra.mxu0 0.0
  %517 = vmatprep.subr.mxu0 0.0
  %518 = vmatpush1.xpose.msra.mxu0 0.0
  %519 = vmatprep.subr.mxu0 0.0
  %520 = vmatpush1.xpose.msra.mxu0 0.0
  %521 = vmatprep.subr.mxu0 0.0
  %522 = vmatpush1.xpose.msra.mxu0 0.0
  %523 = vmatprep.subr.mxu0 0.0
  %524 = vmatpush1.xpose.msra.mxu0 0.0
  %525 = vmatprep.mubr.f32.mxu0 0.0
  %526 = vmatmul.mubr.f32.gmra.mrb[0].mxu0 %v457
  %v527 = vpop.f32.mrb[0].mxu0
  %v528 = vadd.f32 0.0, %v527
  %v529 = vpop.f32.mrb[0].mxu0
  %530 = vdwg.mxu0
  %531 = vrot.lane.b32.xlu0 %v293, 96
  %v532 = vpop.permute.xlu0 %531
  %v533 = vsel %vm304, %v293, 0
  %v535 = vsel %vm304, %v532, 0
  %537 = vmatprep.subr.mxu0 0.0
  %538 = vmatpush1.xpose.msra.mxu0 %v535
  %539 = vmatprep.subr.mxu0 0.0
  %540 = vmatpush1.xpose.msra.mxu0 0.0
  %541 = vmatprep.subr.mxu0 0.0
  %542 = vmatpush1.xpose.msra.mxu0 0.0
  %543 = vmatprep.subr.mxu0 0.0
  %544 = vmatpush1.xpose.msra.mxu0 0.0
  %545 = vmatprep.subr.mxu0 0.0
  %546 = vmatpush1.xpose.msra.mxu0 0.0
  %547 = vmatprep.subr.mxu0 0.0
  %548 = vmatpush1.xpose.msra.mxu0 0.0
  %549 = vmatprep.subr.mxu0 0.0
  %550 = vmatpush1.xpose.msra.mxu0 0.0
  %551 = vmatprep.subr.mxu0 0.0
  %552 = vmatpush1.xpose.msra.mxu0 0.0
  %553 = vmatprep.subr.mxu0 0.0
  %554 = vmatpush1.xpose.msra.mxu0 0.0
  %555 = vmatprep.subr.mxu0 0.0
  %556 = vmatpush1.xpose.msra.mxu0 0.0
  %557 = vmatprep.subr.mxu0 0.0
  %558 = vmatpush1.xpose.msra.mxu0 0.0
  %559 = vmatprep.subr.mxu0 0.0
  %560 = vmatpush1.xpose.msra.mxu0 0.0
  %561 = vmatprep.subr.mxu0 0.0
  %562 = vmatpush1.xpose.msra.mxu0 0.0
  %563 = vmatprep.subr.mxu0 0.0
  %564 = vmatpush1.xpose.msra.mxu0 0.0
  %565 = vmatprep.subr.mxu0 0.0
  %566 = vmatpush1.xpose.msra.mxu0 0.0
  %567 = vmatprep.subr.mxu0 0.0
  %568 = vmatpush1.xpose.msra.mxu0 0.0
  %569 = vmatprep.subr.mxu0 0.0
  %570 = vmatpush1.xpose.msra.mxu0 0.0
  %571 = vmatprep.subr.mxu0 0.0
  %572 = vmatpush1.xpose.msra.mxu0 0.0
  %573 = vmatprep.subr.mxu0 0.0
  %574 = vmatpush1.xpose.msra.mxu0 0.0
  %575 = vmatprep.subr.mxu0 0.0
  %576 = vmatpush1.xpose.msra.mxu0 0.0
  %577 = vmatprep.subr.mxu0 0.0
  %578 = vmatpush1.xpose.msra.mxu0 0.0
  %579 = vmatprep.subr.mxu0 0.0
  %580 = vmatpush1.xpose.msra.mxu0 0.0
  %581 = vmatprep.subr.mxu0 0.0
  %582 = vmatpush1.xpose.msra.mxu0 0.0
  %583 = vmatprep.subr.mxu0 0.0
  %584 = vmatpush1.xpose.msra.mxu0 0.0
  %585 = vmatprep.subr.mxu0 0.0
  %586 = vmatpush1.xpose.msra.mxu0 0.0
  %587 = vmatprep.subr.mxu0 0.0
  %588 = vmatpush1.xpose.msra.mxu0 0.0
  %589 = vmatprep.subr.mxu0 0.0
  %590 = vmatpush1.xpose.msra.mxu0 0.0
  %591 = vmatprep.subr.mxu0 0.0
  %592 = vmatpush1.xpose.msra.mxu0 0.0
  %593 = vmatprep.subr.mxu0 0.0
  %594 = vmatpush1.xpose.msra.mxu0 0.0
  %595 = vmatprep.subr.mxu0 0.0
  %596 = vmatpush1.xpose.msra.mxu0 0.0
  %597 = vmatprep.subr.mxu0 0.0
  %598 = vmatpush1.xpose.msra.mxu0 0.0
  %599 = vmatprep.subr.mxu0 0.0
  %600 = vmatpush1.xpose.msra.mxu0 0.0
  %601 = vmatprep.mubr.f32.mxu0 0.0
  %602 = vmatmul.mubr.f32.gmra.mrb[0].mxu0 %v533
  %v603 = vpop.f32.mrb[0].mxu0
  %v604 = vadd.f32 0.0, %v603
  %v605 = vpop.f32.mrb[0].mxu0
  %606 = vdwg.mxu0
  %607 = vrot.lane.b32.xlu0 %v295, 96
  %v608 = vpop.permute.xlu0 %607
  %v609 = vsel %vm304, %v295, 0
  %v611 = vsel %vm304, %v608, 0
  %613 = vmatprep.subr.mxu0 0.0
  %614 = vmatpush1.xpose.msra.mxu0 %v611
  %615 = vmatprep.subr.mxu0 0.0
  %616 = vmatpush1.xpose.msra.mxu0 0.0
  %617 = vmatprep.subr.mxu0 0.0
  %618 = vmatpush1.xpose.msra.mxu0 0.0
  %619 = vmatprep.subr.mxu0 0.0
  %620 = vmatpush1.xpose.msra.mxu0 0.0
  %621 = vmatprep.subr.mxu0 0.0
  %622 = vmatpush1.xpose.msra.mxu0 0.0
  %623 = vmatprep.subr.mxu0 0.0
  %624 = vmatpush1.xpose.msra.mxu0 0.0
  %625 = vmatprep.subr.mxu0 0.0
  %626 = vmatpush1.xpose.msra.mxu0 0.0
  %627 = vmatprep.subr.mxu0 0.0
  %628 = vmatpush1.xpose.msra.mxu0 0.0
  %629 = vmatprep.subr.mxu0 0.0
  %630 = vmatpush1.xpose.msra.mxu0 0.0
  %631 = vmatprep.subr.mxu0 0.0
  %632 = vmatpush1.xpose.msra.mxu0 0.0
  %633 = vmatprep.subr.mxu0 0.0
  %634 = vmatpush1.xpose.msra.mxu0 0.0
  %635 = vmatprep.subr.mxu0 0.0
  %636 = vmatpush1.xpose.msra.mxu0 0.0
  %637 = vmatprep.subr.mxu0 0.0
  %638 = vmatpush1.xpose.msra.mxu0 0.0
  %639 = vmatprep.subr.mxu0 0.0
  %640 = vmatpush1.xpose.msra.mxu0 0.0
  %641 = vmatprep.subr.mxu0 0.0
  %642 = vmatpush1.xpose.msra.mxu0 0.0
  %643 = vmatprep.subr.mxu0 0.0
  %644 = vmatpush1.xpose.msra.mxu0 0.0
  %645 = vmatprep.subr.mxu0 0.0
  %646 = vmatpush1.xpose.msra.mxu0 0.0
  %647 = vmatprep.subr.mxu0 0.0
  %648 = vmatpush1.xpose.msra.mxu0 0.0
  %649 = vmatprep.subr.mxu0 0.0
  %650 = vmatpush1.xpose.msra.mxu0 0.0
  %651 = vmatprep.subr.mxu0 0.0
  %652 = vmatpush1.xpose.msra.mxu0 0.0
  %653 = vmatprep.subr.mxu0 0.0
  %654 = vmatpush1.xpose.msra.mxu0 0.0
  %655 = vmatprep.subr.mxu0 0.0
  %656 = vmatpush1.xpose.msra.mxu0 0.0
  %657 = vmatprep.subr.mxu0 0.0
  %658 = vmatpush1.xpose.msra.mxu0 0.0
  %659 = vmatprep.subr.mxu0 0.0
  %660 = vmatpush1.xpose.msra.mxu0 0.0
  %661 = vmatprep.subr.mxu0 0.0
  %662 = vmatpush1.xpose.msra.mxu0 0.0
  %663 = vmatprep.subr.mxu0 0.0
  %664 = vmatpush1.xpose.msra.mxu0 0.0
  %665 = vmatprep.subr.mxu0 0.0
  %666 = vmatpush1.xpose.msra.mxu0 0.0
  %667 = vmatprep.subr.mxu0 0.0
  %668 = vmatpush1.xpose.msra.mxu0 0.0
  %669 = vmatprep.subr.mxu0 0.0
  %670 = vmatpush1.xpose.msra.mxu0 0.0
  %671 = vmatprep.subr.mxu0 0.0
  %672 = vmatpush1.xpose.msra.mxu0 0.0
  %673 = vmatprep.subr.mxu0 0.0
  %674 = vmatpush1.xpose.msra.mxu0 0.0
  %675 = vmatprep.subr.mxu0 0.0
  %676 = vmatpush1.xpose.msra.mxu0 0.0
  %677 = vmatprep.mubr.f32.mxu0 0.0
  %678 = vmatmul.mubr.f32.gmra.mrb[0].mxu0 %v609
  %v679 = vpop.f32.mrb[0].mxu0
  %v680 = vadd.f32 0.0, %v679
  %v681 = vpop.f32.mrb[0].mxu0
  %682 = vdwg.mxu0
  %683 = vrot.lane.b32.xlu0 %v297, 96
  %v684 = vpop.permute.xlu0 %683
  %v685 = vsel %vm304, %v297, 0
  %v687 = vsel %vm304, %v684, 0
  %689 = vmatprep.subr.mxu0 0.0
  %690 = vmatpush1.xpose.msra.mxu0 %v687
  %691 = vmatprep.subr.mxu0 0.0
  %692 = vmatpush1.xpose.msra.mxu0 0.0
  %693 = vmatprep.subr.mxu0 0.0
  %694 = vmatpush1.xpose.msra.mxu0 0.0
  %695 = vmatprep.subr.mxu0 0.0
  %696 = vmatpush1.xpose.msra.mxu0 0.0
  %697 = vmatprep.subr.mxu0 0.0
  %698 = vmatpush1.xpose.msra.mxu0 0.0
  %699 = vmatprep.subr.mxu0 0.0
  %700 = vmatpush1.xpose.msra.mxu0 0.0
  %701 = vmatprep.subr.mxu0 0.0
  %702 = vmatpush1.xpose.msra.mxu0 0.0
  %703 = vmatprep.subr.mxu0 0.0
  %704 = vmatpush1.xpose.msra.mxu0 0.0
  %705 = vmatprep.subr.mxu0 0.0
  %706 = vmatpush1.xpose.msra.mxu0 0.0
  %707 = vmatprep.subr.mxu0 0.0
  %708 = vmatpush1.xpose.msra.mxu0 0.0
  %709 = vmatprep.subr.mxu0 0.0
  %710 = vmatpush1.xpose.msra.mxu0 0.0
  %711 = vmatprep.subr.mxu0 0.0
  %712 = vmatpush1.xpose.msra.mxu0 0.0
  %713 = vmatprep.subr.mxu0 0.0
  %714 = vmatpush1.xpose.msra.mxu0 0.0
  %715 = vmatprep.subr.mxu0 0.0
  %716 = vmatpush1.xpose.msra.mxu0 0.0
  %717 = vmatprep.subr.mxu0 0.0
  %718 = vmatpush1.xpose.msra.mxu0 0.0
  %719 = vmatprep.subr.mxu0 0.0
  %720 = vmatpush1.xpose.msra.mxu0 0.0
  %721 = vmatprep.subr.mxu0 0.0
  %722 = vmatpush1.xpose.msra.mxu0 0.0
  %723 = vmatprep.subr.mxu0 0.0
  %724 = vmatpush1.xpose.msra.mxu0 0.0
  %725 = vmatprep.subr.mxu0 0.0
  %726 = vmatpush1.xpose.msra.mxu0 0.0
  %727 = vmatprep.subr.mxu0 0.0
  %728 = vmatpush1.xpose.msra.mxu0 0.0
  %729 = vmatprep.subr.mxu0 0.0
  %730 = vmatpush1.xpose.msra.mxu0 0.0
  %731 = vmatprep.subr.mxu0 0.0
  %732 = vmatpush1.xpose.msra.mxu0 0.0
  %733 = vmatprep.subr.mxu0 0.0
  %734 = vmatpush1.xpose.msra.mxu0 0.0
  %735 = vmatprep.subr.mxu0 0.0
  %736 = vmatpush1.xpose.msra.mxu0 0.0
  %737 = vmatprep.subr.mxu0 0.0
  %738 = vmatpush1.xpose.msra.mxu0 0.0
  %739 = vmatprep.subr.mxu0 0.0
  %740 = vmatpush1.xpose.msra.mxu0 0.0
  %741 = vmatprep.subr.mxu0 0.0
  %742 = vmatpush1.xpose.msra.mxu0 0.0
  %743 = vmatprep.subr.mxu0 0.0
  %744 = vmatpush1.xpose.msra.mxu0 0.0
  %745 = vmatprep.subr.mxu0 0.0
  %746 = vmatpush1.xpose.msra.mxu0 0.0
  %747 = vmatprep.subr.mxu0 0.0
  %748 = vmatpush1.xpose.msra.mxu0 0.0
  %749 = vmatprep.subr.mxu0 0.0
  %750 = vmatpush1.xpose.msra.mxu0 0.0
  %751 = vmatprep.subr.mxu0 0.0
  %752 = vmatpush1.xpose.msra.mxu0 0.0
  %753 = vmatprep.mubr.f32.mxu0 0.0
  %754 = vmatmul.mubr.f32.gmra.mrb[0].mxu0 %v685
  %v755 = vpop.f32.mrb[0].mxu0
  %v756 = vadd.f32 0.0, %v755
  %v757 = vpop.f32.mrb[0].mxu0
  %758 = vdwg.mxu0
  %759 = vrot.lane.b32.xlu0 %v299, 96
  %v760 = vpop.permute.xlu0 %759
  %v761 = vsel %vm304, %v299, 0
  %v763 = vsel %vm304, %v760, 0
  %765 = vmatprep.subr.mxu0 0.0
  %766 = vmatpush1.xpose.msra.mxu0 %v763
  %767 = vmatprep.subr.mxu0 0.0
  %768 = vmatpush1.xpose.msra.mxu0 0.0
  %769 = vmatprep.subr.mxu0 0.0
  %770 = vmatpush1.xpose.msra.mxu0 0.0
  %771 = vmatprep.subr.mxu0 0.0
  %772 = vmatpush1.xpose.msra.mxu0 0.0
  %773 = vmatprep.subr.mxu0 0.0
  %774 = vmatpush1.xpose.msra.mxu0 0.0
  %775 = vmatprep.subr.mxu0 0.0
  %776 = vmatpush1.xpose.msra.mxu0 0.0
  %777 = vmatprep.subr.mxu0 0.0
  %778 = vmatpush1.xpose.msra.mxu0 0.0
  %779 = vmatprep.subr.mxu0 0.0
  %780 = vmatpush1.xpose.msra.mxu0 0.0
  %781 = vmatprep.subr.mxu0 0.0
  %782 = vmatpush1.xpose.msra.mxu0 0.0
  %783 = vmatprep.subr.mxu0 0.0
  %784 = vmatpush1.xpose.msra.mxu0 0.0
  %785 = vmatprep.subr.mxu0 0.0
  %786 = vmatpush1.xpose.msra.mxu0 0.0
  %787 = vmatprep.subr.mxu0 0.0
  %788 = vmatpush1.xpose.msra.mxu0 0.0
  %789 = vmatprep.subr.mxu0 0.0
  %790 = vmatpush1.xpose.msra.mxu0 0.0
  %791 = vmatprep.subr.mxu0 0.0
  %792 = vmatpush1.xpose.msra.mxu0 0.0
  %793 = vmatprep.subr.mxu0 0.0
  %794 = vmatpush1.xpose.msra.mxu0 0.0
  %795 = vmatprep.subr.mxu0 0.0
  %796 = vmatpush1.xpose.msra.mxu0 0.0
  %797 = vmatprep.subr.mxu0 0.0
  %798 = vmatpush1.xpose.msra.mxu0 0.0
  %799 = vmatprep.subr.mxu0 0.0
  %800 = vmatpush1.xpose.msra.mxu0 0.0
  %801 = vmatprep.subr.mxu0 0.0
  %802 = vmatpush1.xpose.msra.mxu0 0.0
  %803 = vmatprep.subr.mxu0 0.0
  %804 = vmatpush1.xpose.msra.mxu0 0.0
  %805 = vmatprep.subr.mxu0 0.0
  %806 = vmatpush1.xpose.msra.mxu0 0.0
  %807 = vmatprep.subr.mxu0 0.0
  %808 = vmatpush1.xpose.msra.mxu0 0.0
  %809 = vmatprep.subr.mxu0 0.0
  %810 = vmatpush1.xpose.msra.mxu0 0.0
  %811 = vmatprep.subr.mxu0 0.0
  %812 = vmatpush1.xpose.msra.mxu0 0.0
  %813 = vmatprep.subr.mxu0 0.0
  %814 = vmatpush1.xpose.msra.mxu0 0.0
  %815 = vmatprep.subr.mxu0 0.0
  %816 = vmatpush1.xpose.msra.mxu0 0.0
  %817 = vmatprep.subr.mxu0 0.0
  %818 = vmatpush1.xpose.msra.mxu0 0.0
  %819 = vmatprep.subr.mxu0 0.0
  %820 = vmatpush1.xpose.msra.mxu0 0.0
  %821 = vmatprep.subr.mxu0 0.0
  %822 = vmatpush1.xpose.msra.mxu0 0.0
  %823 = vmatprep.subr.mxu0 0.0
  %824 = vmatpush1.xpose.msra.mxu0 0.0
  %825 = vmatprep.subr.mxu0 0.0
  %826 = vmatpush1.xpose.msra.mxu0 0.0
  %827 = vmatprep.subr.mxu0 0.0
  %828 = vmatpush1.xpose.msra.mxu0 0.0
  %829 = vmatprep.mubr.f32.mxu0 0.0
  %830 = vmatmul.mubr.f32.gmra.mrb[0].mxu0 %v761
  %v831 = vpop.f32.mrb[0].mxu0
  %v832 = vadd.f32 0.0, %v831
  %v833 = vpop.f32.mrb[0].mxu0
  %834 = vdwg.mxu0
  %835 = vrot.lane.b32.xlu0 %v301, 96
  %v836 = vpop.permute.xlu0 %835
  %v837 = vsel %vm304, %v301, 0
  %v839 = vsel %vm304, %v836, 0
  %841 = vmatprep.subr.mxu0 0.0
  %842 = vmatpush1.xpose.msra.mxu0 %v839
  %843 = vmatprep.subr.mxu0 0.0
  %844 = vmatpush1.xpose.msra.mxu0 0.0
  %845 = vmatprep.subr.mxu0 0.0
  %846 = vmatpush1.xpose.msra.mxu0 0.0
  %847 = vmatprep.subr.mxu0 0.0
  %848 = vmatpush1.xpose.msra.mxu0 0.0
  %849 = vmatprep.subr.mxu0 0.0
  %850 = vmatpush1.xpose.msra.mxu0 0.0
  %851 = vmatprep.subr.mxu0 0.0
  %852 = vmatpush1.xpose.msra.mxu0 0.0
  %853 = vmatprep.subr.mxu0 0.0
  %854 = vmatpush1.xpose.msra.mxu0 0.0
  %855 = vmatprep.subr.mxu0 0.0
  %856 = vmatpush1.xpose.msra.mxu0 0.0
  %857 = vmatprep.subr.mxu0 0.0
  %858 = vmatpush1.xpose.msra.mxu0 0.0
  %859 = vmatprep.subr.mxu0 0.0
  %860 = vmatpush1.xpose.msra.mxu0 0.0
  %861 = vmatprep.subr.mxu0 0.0
  %862 = vmatpush1.xpose.msra.mxu0 0.0
  %863 = vmatprep.subr.mxu0 0.0
  %864 = vmatpush1.xpose.msra.mxu0 0.0
  %865 = vmatprep.subr.mxu0 0.0
  %866 = vmatpush1.xpose.msra.mxu0 0.0
  %867 = vmatprep.subr.mxu0 0.0
  %868 = vmatpush1.xpose.msra.mxu0 0.0
  %869 = vmatprep.subr.mxu0 0.0
  %870 = vmatpush1.xpose.msra.mxu0 0.0
  %871 = vmatprep.subr.mxu0 0.0
  %872 = vmatpush1.xpose.msra.mxu0 0.0
  %873 = vmatprep.subr.mxu0 0.0
  %874 = vmatpush1.xpose.msra.mxu0 0.0
  %875 = vmatprep.subr.mxu0 0.0
  %876 = vmatpush1.xpose.msra.mxu0 0.0
  %877 = vmatprep.subr.mxu0 0.0
  %878 = vmatpush1.xpose.msra.mxu0 0.0
  %879 = vmatprep.subr.mxu0 0.0
  %880 = vmatpush1.xpose.msra.mxu0 0.0
  %881 = vmatprep.subr.mxu0 0.0
  %882 = vmatpush1.xpose.msra.mxu0 0.0
  %883 = vmatprep.subr.mxu0 0.0
  %884 = vmatpush1.xpose.msra.mxu0 0.0
  %885 = vmatprep.subr.mxu0 0.0
  %886 = vmatpush1.xpose.msra.mxu0 0.0
  %887 = vmatprep.subr.mxu0 0.0
  %888 = vmatpush1.xpose.msra.mxu0 0.0
  %889 = vmatprep.subr.mxu0 0.0
  %890 = vmatpush1.xpose.msra.mxu0 0.0
  %891 = vmatprep.subr.mxu0 0.0
  %892 = vmatpush1.xpose.msra.mxu0 0.0
  %893 = vmatprep.subr.mxu0 0.0
  %894 = vmatpush1.xpose.msra.mxu0 0.0
  %895 = vmatprep.subr.mxu0 0.0
  %896 = vmatpush1.xpose.msra.mxu0 0.0
  %897 = vmatprep.subr.mxu0 0.0
  %898 = vmatpush1.xpose.msra.mxu0 0.0
  %899 = vmatprep.subr.mxu0 0.0
  %900 = vmatpush1.xpose.msra.mxu0 0.0
  %901 = vmatprep.subr.mxu0 0.0
  %902 = vmatpush1.xpose.msra.mxu0 0.0
  %903 = vmatprep.subr.mxu0 0.0
  %904 = vmatpush1.xpose.msra.mxu0 0.0
  %905 = vmatprep.mubr.f32.mxu0 0.0
  %906 = vmatmul.mubr.f32.gmra.mrb[0].mxu0 %v837
  %v907 = vpop.f32.mrb[0].mxu0
  %v908 = vadd.f32 0.0, %v907
  %v909 = vpop.f32.mrb[0].mxu0
  %910 = vdwg.mxu0
  %v911 = vmul.f32 %v376, 0.35355338
  %v912 = vmul.f32 %v452, 0.35355338
  %v913 = vmul.f32 %v528, 0.35355338
  %v914 = vmul.f32 %v604, 0.35355338
  %v915 = vmul.f32 %v680, 0.35355338
  %v916 = vmul.f32 %v756, 0.35355338
  %v917 = vmul.f32 %v832, 0.35355338
  %v918 = vmul.f32 %v908, 0.35355338
  %v919 = vsel %vm304, %v911, -inf
  %920 = vmax.xlane.f32.xlu0 %v919
  %v921 = vpop.xlane.xlu0 %920
  %v922 = vsel %vm304, %v912, -inf
  %923 = vmax.xlane.f32.xlu0 %v922
  %v924 = vpop.xlane.xlu0 %923
  %v925 = vsel %vm304, %v913, -inf
  %926 = vmax.xlane.f32.xlu0 %v925
  %v927 = vpop.xlane.xlu0 %926
  %v928 = vsel %vm304, %v914, -inf
  %929 = vmax.xlane.f32.xlu0 %v928
  %v930 = vpop.xlane.xlu0 %929
  %v931 = vsel %vm304, %v915, -inf
  %932 = vmax.xlane.f32.xlu0 %v931
  %v933 = vpop.xlane.xlu0 %932
  %v934 = vsel %vm304, %v916, -inf
  %935 = vmax.xlane.f32.xlu0 %v934
  %v936 = vpop.xlane.xlu0 %935
  %v937 = vsel %vm304, %v917, -inf
  %938 = vmax.xlane.f32.xlu0 %v937
  %v939 = vpop.xlane.xlu0 %938
  %v940 = vsel %vm304, %v918, -inf
  %941 = vmax.xlane.f32.xlu0 %v940
  %v942 = vpop.xlane.xlu0 %941
  %v943 = vsub.f32 %v911, %v921
  %v944 = vsub.f32 %v912, %v924
  %v945 = vsub.f32 %v913, %v927
  %v946 = vsub.f32 %v914, %v930
  %v947 = vsub.f32 %v915, %v933
  %v948 = vsub.f32 %v916, %v936
  %v949 = vsub.f32 %v917, %v939
  %v950 = vsub.f32 %v918, %v942
  %v951 = vmul.f32 %v943, 1.442695
  %v952 = vpow.pop %v951
  %v953 = vmul.f32 %v944, 1.442695
  %v954 = vpow.pop %v953
  %v955 = vmul.f32 %v945, 1.442695
  %v956 = vpow.pop %v955
  %v957 = vmul.f32 %v946, 1.442695
  %v958 = vpow.pop %v957
  %v959 = vmul.f32 %v947, 1.442695
  %v960 = vpow.pop %v959
  %v961 = vmul.f32 %v948, 1.442695
  %v962 = vpow.pop %v961
  %v963 = vmul.f32 %v949, 1.442695
  %v964 = vpow.pop %v963
  %v965 = vmul.f32 %v950, 1.442695
  %v966 = vpow.pop %v965
  %v967 = vsel %vm304, %v952, 0.0
  %968 = vadd.xlane.f32.xlu0 %v967
  %v969 = vpop.xlane.xlu0 %968
  %v970 = vsel %vm304, %v954, 0.0
  %971 = vadd.xlane.f32.xlu0 %v970
  %v972 = vpop.xlane.xlu0 %971
  %v973 = vsel %vm304, %v956, 0.0
  %974 = vadd.xlane.f32.xlu0 %v973
  %v975 = vpop.xlane.xlu0 %974
  %v976 = vsel %vm304, %v958, 0.0
  %977 = vadd.xlane.f32.xlu0 %v976
  %v978 = vpop.xlane.xlu0 %977
  %v979 = vsel %vm304, %v960, 0.0
  %980 = vadd.xlane.f32.xlu0 %v979
  %v981 = vpop.xlane.xlu0 %980
  %v982 = vsel %vm304, %v962, 0.0
  %983 = vadd.xlane.f32.xlu0 %v982
  %v984 = vpop.xlane.xlu0 %983
  %v985 = vsel %vm304, %v964, 0.0
  %986 = vadd.xlane.f32.xlu0 %v985
  %v987 = vpop.xlane.xlu0 %986
  %v988 = vsel %vm304, %v966, 0.0
  %989 = vadd.xlane.f32.xlu0 %v988
  %v990 = vpop.xlane.xlu0 %989
  %v991 = vrcp.pop %v969
  %v992 = vmul.f32 %v952, %v991
  %v993 = vrcp.pop %v972
  %v994 = vmul.f32 %v954, %v993
  %v995 = vrcp.pop %v975
  %v996 = vmul.f32 %v956, %v995
  %v997 = vrcp.pop %v978
  %v998 = vmul.f32 %v958, %v997
  %v999 = vrcp.pop %v981
  %v1000 = vmul.f32 %v960, %v999
  %v1001 = vrcp.pop %v984
  %v1002 = vmul.f32 %v962, %v1001
  %v1003 = vrcp.pop %v987
  %v1004 = vmul.f32 %v964, %v1003
  %v1005 = vrcp.pop %v990
  %v1006 = vmul.f32 %v966, %v1005
  %1007 = vrot.lane.b32.xlu0 %v280, 64
  %v1008 = vpop.permute.xlu0 %1007
  %v1011 = vsel %vm304, %v992, 0
  %1013 = vmatprep.subr.mxu0 0.0
  %1014 = vmatpush1.msra.mxu0 %v1008
  %1015 = vmatprep.subr.mxu0 0.0
  %1016 = vmatpush1.msra.mxu0 0.0
  %1017 = vmatprep.subr.mxu0 0.0
  %1018 = vmatpush1.msra.mxu0 0.0
  %1019 = vmatprep.subr.mxu0 0.0
  %1020 = vmatpush1.msra.mxu0 0.0
  %1021 = vmatprep.subr.mxu0 0.0
  %1022 = vmatpush1.msra.mxu0 0.0
  %1023 = vmatprep.subr.mxu0 0.0
  %1024 = vmatpush1.msra.mxu0 0.0
  %1025 = vmatprep.subr.mxu0 0.0
  %1026 = vmatpush1.msra.mxu0 0.0
  %1027 = vmatprep.subr.mxu0 0.0
  %1028 = vmatpush1.msra.mxu0 0.0
  %1029 = vmatprep.subr.mxu0 0.0
  %1030 = vmatpush1.msra.mxu0 0.0
  %1031 = vmatprep.subr.mxu0 0.0
  %1032 = vmatpush1.msra.mxu0 0.0
  %1033 = vmatprep.subr.mxu0 0.0
  %1034 = vmatpush1.msra.mxu0 0.0
  %1035 = vmatprep.subr.mxu0 0.0
  %1036 = vmatpush1.msra.mxu0 0.0
  %1037 = vmatprep.subr.mxu0 0.0
  %1038 = vmatpush1.msra.mxu0 0.0
  %1039 = vmatprep.subr.mxu0 0.0
  %1040 = vmatpush1.msra.mxu0 0.0
  %1041 = vmatprep.subr.mxu0 0.0
  %1042 = vmatpush1.msra.mxu0 0.0
  %1043 = vmatprep.subr.mxu0 0.0
  %1044 = vmatpush1.msra.mxu0 0.0
  %1045 = vmatprep.subr.mxu0 0.0
  %1046 = vmatpush1.msra.mxu0 0.0
  %1047 = vmatprep.subr.mxu0 0.0
  %1048 = vmatpush1.msra.mxu0 0.0
  %1049 = vmatprep.subr.mxu0 0.0
  %1050 = vmatpush1.msra.mxu0 0.0
  %1051 = vmatprep.subr.mxu0 0.0
  %1052 = vmatpush1.msra.mxu0 0.0
  %1053 = vmatprep.subr.mxu0 0.0
  %1054 = vmatpush1.msra.mxu0 0.0
  %1055 = vmatprep.subr.mxu0 0.0
  %1056 = vmatpush1.msra.mxu0 0.0
  %1057 = vmatprep.subr.mxu0 0.0
  %1058 = vmatpush1.msra.mxu0 0.0
  %1059 = vmatprep.subr.mxu0 0.0
  %1060 = vmatpush1.msra.mxu0 0.0
  %1061 = vmatprep.subr.mxu0 0.0
  %1062 = vmatpush1.msra.mxu0 0.0
  %1063 = vmatprep.subr.mxu0 0.0
  %1064 = vmatpush1.msra.mxu0 0.0
  %1065 = vmatprep.subr.mxu0 0.0
  %1066 = vmatpush1.msra.mxu0 0.0
  %1067 = vmatprep.subr.mxu0 0.0
  %1068 = vmatpush1.msra.mxu0 0.0
  %1069 = vmatprep.subr.mxu0 0.0
  %1070 = vmatpush1.msra.mxu0 0.0
  %1071 = vmatprep.subr.mxu0 0.0
  %1072 = vmatpush1.msra.mxu0 0.0
  %1073 = vmatprep.subr.mxu0 0.0
  %1074 = vmatpush1.msra.mxu0 0.0
  %1075 = vmatprep.subr.mxu0 0.0
  %1076 = vmatpush1.msra.mxu0 0.0
  %1077 = vmatprep.mubr.f32.mxu0 0.0
  %1078 = vmatmul.mubr.f32.gmra.mrb[0].mxu0 %v1011
  %v1079 = vpop.f32.mrb[0].mxu0
  %v1080 = vadd.f32 0.0, %v1079
  %v1081 = vpop.f32.mrb[0].mxu0
  %1082 = vdwg.mxu0
  %1083 = vrot.lane.b32.xlu0 %v285, 64
  %v1084 = vpop.permute.xlu0 %1083
  %v1087 = vsel %vm304, %v994, 0
  %1089 = vmatprep.subr.mxu0 0.0
  %1090 = vmatpush1.msra.mxu0 %v1084
  %1091 = vmatprep.subr.mxu0 0.0
  %1092 = vmatpush1.msra.mxu0 0.0
  %1093 = vmatprep.subr.mxu0 0.0
  %1094 = vmatpush1.msra.mxu0 0.0
  %1095 = vmatprep.subr.mxu0 0.0
  %1096 = vmatpush1.msra.mxu0 0.0
  %1097 = vmatprep.subr.mxu0 0.0
  %1098 = vmatpush1.msra.mxu0 0.0
  %1099 = vmatprep.subr.mxu0 0.0
  %1100 = vmatpush1.msra.mxu0 0.0
  %1101 = vmatprep.subr.mxu0 0.0
  %1102 = vmatpush1.msra.mxu0 0.0
  %1103 = vmatprep.subr.mxu0 0.0
  %1104 = vmatpush1.msra.mxu0 0.0
  %1105 = vmatprep.subr.mxu0 0.0
  %1106 = vmatpush1.msra.mxu0 0.0
  %1107 = vmatprep.subr.mxu0 0.0
  %1108 = vmatpush1.msra.mxu0 0.0
  %1109 = vmatprep.subr.mxu0 0.0
  %1110 = vmatpush1.msra.mxu0 0.0
  %1111 = vmatprep.subr.mxu0 0.0
  %1112 = vmatpush1.msra.mxu0 0.0
  %1113 = vmatprep.subr.mxu0 0.0
  %1114 = vmatpush1.msra.mxu0 0.0
  %1115 = vmatprep.subr.mxu0 0.0
  %1116 = vmatpush1.msra.mxu0 0.0
  %1117 = vmatprep.subr.mxu0 0.0
  %1118 = vmatpush1.msra.mxu0 0.0
  %1119 = vmatprep.subr.mxu0 0.0
  %1120 = vmatpush1.msra.mxu0 0.0
  %1121 = vmatprep.subr.mxu0 0.0
  %1122 = vmatpush1.msra.mxu0 0.0
  %1123 = vmatprep.subr.mxu0 0.0
  %1124 = vmatpush1.msra.mxu0 0.0
  %1125 = vmatprep.subr.mxu0 0.0
  %1126 = vmatpush1.msra.mxu0 0.0
  %1127 = vmatprep.subr.mxu0 0.0
  %1128 = vmatpush1.msra.mxu0 0.0
  %1129 = vmatprep.subr.mxu0 0.0
  %1130 = vmatpush1.msra.mxu0 0.0
  %1131 = vmatprep.subr.mxu0 0.0
  %1132 = vmatpush1.msra.mxu0 0.0
  %1133 = vmatprep.subr.mxu0 0.0
  %1134 = vmatpush1.msra.mxu0 0.0
  %1135 = vmatprep.subr.mxu0 0.0
  %1136 = vmatpush1.msra.mxu0 0.0
  %1137 = vmatprep.subr.mxu0 0.0
  %1138 = vmatpush1.msra.mxu0 0.0
  %1139 = vmatprep.subr.mxu0 0.0
  %1140 = vmatpush1.msra.mxu0 0.0
  %1141 = vmatprep.subr.mxu0 0.0
  %1142 = vmatpush1.msra.mxu0 0.0
  %1143 = vmatprep.subr.mxu0 0.0
  %1144 = vmatpush1.msra.mxu0 0.0
  %1145 = vmatprep.subr.mxu0 0.0
  %1146 = vmatpush1.msra.mxu0 0.0
  %1147 = vmatprep.subr.mxu0 0.0
  %1148 = vmatpush1.msra.mxu0 0.0
  %1149 = vmatprep.subr.mxu0 0.0
  %1150 = vmatpush1.msra.mxu0 0.0
  %1151 = vmatprep.subr.mxu0 0.0
  %1152 = vmatpush1.msra.mxu0 0.0
  %1153 = vmatprep.mubr.f32.mxu0 0.0
  %1154 = vmatmul.mubr.f32.gmra.mrb[0].mxu0 %v1087
  %v1155 = vpop.f32.mrb[0].mxu0
  %v1156 = vadd.f32 0.0, %v1155
  %v1157 = vpop.f32.mrb[0].mxu0
  %1158 = vdwg.mxu0
  %1159 = vrot.lane.b32.xlu0 %v291, 64
  %v1160 = vpop.permute.xlu0 %1159
  %v1163 = vsel %vm304, %v996, 0
  %1165 = vmatprep.subr.mxu0 0.0
  %1166 = vmatpush1.msra.mxu0 %v1160
  %1167 = vmatprep.subr.mxu0 0.0
  %1168 = vmatpush1.msra.mxu0 0.0
  %1169 = vmatprep.subr.mxu0 0.0
  %1170 = vmatpush1.msra.mxu0 0.0
  %1171 = vmatprep.subr.mxu0 0.0
  %1172 = vmatpush1.msra.mxu0 0.0
  %1173 = vmatprep.subr.mxu0 0.0
  %1174 = vmatpush1.msra.mxu0 0.0
  %1175 = vmatprep.subr.mxu0 0.0
  %1176 = vmatpush1.msra.mxu0 0.0
  %1177 = vmatprep.subr.mxu0 0.0
  %1178 = vmatpush1.msra.mxu0 0.0
  %1179 = vmatprep.subr.mxu0 0.0
  %1180 = vmatpush1.msra.mxu0 0.0
  %1181 = vmatprep.subr.mxu0 0.0
  %1182 = vmatpush1.msra.mxu0 0.0
  %1183 = vmatprep.subr.mxu0 0.0
  %1184 = vmatpush1.msra.mxu0 0.0
  %1185 = vmatprep.subr.mxu0 0.0
  %1186 = vmatpush1.msra.mxu0 0.0
  %1187 = vmatprep.subr.mxu0 0.0
  %1188 = vmatpush1.msra.mxu0 0.0
  %1189 = vmatprep.subr.mxu0 0.0
  %1190 = vmatpush1.msra.mxu0 0.0
  %1191 = vmatprep.subr.mxu0 0.0
  %1192 = vmatpush1.msra.mxu0 0.0
  %1193 = vmatprep.subr.mxu0 0.0
  %1194 = vmatpush1.msra.mxu0 0.0
  %1195 = vmatprep.subr.mxu0 0.0
  %1196 = vmatpush1.msra.mxu0 0.0
  %1197 = vmatprep.subr.mxu0 0.0
  %1198 = vmatpush1.msra.mxu0 0.0
  %1199 = vmatprep.subr.mxu0 0.0
  %1200 = vmatpush1.msra.mxu0 0.0
  %1201 = vmatprep.subr.mxu0 0.0
  %1202 = vmatpush1.msra.mxu0 0.0
  %1203 = vmatprep.subr.mxu0 0.0
  %1204 = vmatpush1.msra.mxu0 0.0
  %1205 = vmatprep.subr.mxu0 0.0
  %1206 = vmatpush1.msra.mxu0 0.0
  %1207 = vmatprep.subr.mxu0 0.0
  %1208 = vmatpush1.msra.mxu0 0.0
  %1209 = vmatprep.subr.mxu0 0.0
  %1210 = vmatpush1.msra.mxu0 0.0
  %1211 = vmatprep.subr.mxu0 0.0
  %1212 = vmatpush1.msra.mxu0 0.0
  %1213 = vmatprep.subr.mxu0 0.0
  %1214 = vmatpush1.msra.mxu0 0.0
  %1215 = vmatprep.subr.mxu0 0.0
  %1216 = vmatpush1.msra.mxu0 0.0
  %1217 = vmatprep.subr.mxu0 0.0
  %1218 = vmatpush1.msra.mxu0 0.0
  %1219 = vmatprep.subr.mxu0 0.0
  %1220 = vmatpush1.msra.mxu0 0.0
  %1221 = vmatprep.subr.mxu0 0.0
  %1222 = vmatpush1.msra.mxu0 0.0
  %1223 = vmatprep.subr.mxu0 0.0
  %1224 = vmatpush1.msra.mxu0 0.0
  %1225 = vmatprep.subr.mxu0 0.0
  %1226 = vmatpush1.msra.mxu0 0.0
  %1227 = vmatprep.subr.mxu0 0.0
  %1228 = vmatpush1.msra.mxu0 0.0
  %1229 = vmatprep.mubr.f32.mxu0 0.0
  %1230 = vmatmul.mubr.f32.gmra.mrb[0].mxu0 %v1163
  %v1231 = vpop.f32.mrb[0].mxu0
  %v1232 = vadd.f32 0.0, %v1231
  %v1233 = vpop.f32.mrb[0].mxu0
  %1234 = vdwg.mxu0
  %1235 = vrot.lane.b32.xlu0 %v293, 64
  %v1236 = vpop.permute.xlu0 %1235
  %v1239 = vsel %vm304, %v998, 0
  %1241 = vmatprep.subr.mxu0 0.0
  %1242 = vmatpush1.msra.mxu0 %v1236
  %1243 = vmatprep.subr.mxu0 0.0
  %1244 = vmatpush1.msra.mxu0 0.0
  %1245 = vmatprep.subr.mxu0 0.0
  %1246 = vmatpush1.msra.mxu0 0.0
  %1247 = vmatprep.subr.mxu0 0.0
  %1248 = vmatpush1.msra.mxu0 0.0
  %1249 = vmatprep.subr.mxu0 0.0
  %1250 = vmatpush1.msra.mxu0 0.0
  %1251 = vmatprep.subr.mxu0 0.0
  %1252 = vmatpush1.msra.mxu0 0.0
  %1253 = vmatprep.subr.mxu0 0.0
  %1254 = vmatpush1.msra.mxu0 0.0
  %1255 = vmatprep.subr.mxu0 0.0
  %1256 = vmatpush1.msra.mxu0 0.0
  %1257 = vmatprep.subr.mxu0 0.0
  %1258 = vmatpush1.msra.mxu0 0.0
  %1259 = vmatprep.subr.mxu0 0.0
  %1260 = vmatpush1.msra.mxu0 0.0
  %1261 = vmatprep.subr.mxu0 0.0
  %1262 = vmatpush1.msra.mxu0 0.0
  %1263 = vmatprep.subr.mxu0 0.0
  %1264 = vmatpush1.msra.mxu0 0.0
  %1265 = vmatprep.subr.mxu0 0.0
  %1266 = vmatpush1.msra.mxu0 0.0
  %1267 = vmatprep.subr.mxu0 0.0
  %1268 = vmatpush1.msra.mxu0 0.0
  %1269 = vmatprep.subr.mxu0 0.0
  %1270 = vmatpush1.msra.mxu0 0.0
  %1271 = vmatprep.subr.mxu0 0.0
  %1272 = vmatpush1.msra.mxu0 0.0
  %1273 = vmatprep.subr.mxu0 0.0
  %1274 = vmatpush1.msra.mxu0 0.0
  %1275 = vmatprep.subr.mxu0 0.0
  %1276 = vmatpush1.msra.mxu0 0.0
  %1277 = vmatprep.subr.mxu0 0.0
  %1278 = vmatpush1.msra.mxu0 0.0
  %1279 = vmatprep.subr.mxu0 0.0
  %1280 = vmatpush1.msra.mxu0 0.0
  %1281 = vmatprep.subr.mxu0 0.0
  %1282 = vmatpush1.msra.mxu0 0.0
  %1283 = vmatprep.subr.mxu0 0.0
  %1284 = vmatpush1.msra.mxu0 0.0
  %1285 = vmatprep.subr.mxu0 0.0
  %1286 = vmatpush1.msra.mxu0 0.0
  %1287 = vmatprep.subr.mxu0 0.0
  %1288 = vmatpush1.msra.mxu0 0.0
  %1289 = vmatprep.subr.mxu0 0.0
  %1290 = vmatpush1.msra.mxu0 0.0
  %1291 = vmatprep.subr.mxu0 0.0
  %1292 = vmatpush1.msra.mxu0 0.0
  %1293 = vmatprep.subr.mxu0 0.0
  %1294 = vmatpush1.msra.mxu0 0.0
  %1295 = vmatprep.subr.mxu0 0.0
  %1296 = vmatpush1.msra.mxu0 0.0
  %1297 = vmatprep.subr.mxu0 0.0
  %1298 = vmatpush1.msra.mxu0 0.0
  %1299 = vmatprep.subr.mxu0 0.0
  %1300 = vmatpush1.msra.mxu0 0.0
  %1301 = vmatprep.subr.mxu0 0.0
  %1302 = vmatpush1.msra.mxu0 0.0
  %1303 = vmatprep.subr.mxu0 0.0
  %1304 = vmatpush1.msra.mxu0 0.0
  %1305 = vmatprep.mubr.f32.mxu0 0.0
  %1306 = vmatmul.mubr.f32.gmra.mrb[0].mxu0 %v1239
  %v1307 = vpop.f32.mrb[0].mxu0
  %v1308 = vadd.f32 0.0, %v1307
  %v1309 = vpop.f32.mrb[0].mxu0
  %1310 = vdwg.mxu0
  %1311 = vrot.lane.b32.xlu0 %v295, 64
  %v1312 = vpop.permute.xlu0 %1311
  %v1315 = vsel %vm304, %v1000, 0
  %1317 = vmatprep.subr.mxu0 0.0
  %1318 = vmatpush1.msra.mxu0 %v1312
  %1319 = vmatprep.subr.mxu0 0.0
  %1320 = vmatpush1.msra.mxu0 0.0
  %1321 = vmatprep.subr.mxu0 0.0
  %1322 = vmatpush1.msra.mxu0 0.0
  %1323 = vmatprep.subr.mxu0 0.0
  %1324 = vmatpush1.msra.mxu0 0.0
  %1325 = vmatprep.subr.mxu0 0.0
  %1326 = vmatpush1.msra.mxu0 0.0
  %1327 = vmatprep.subr.mxu0 0.0
  %1328 = vmatpush1.msra.mxu0 0.0
  %1329 = vmatprep.subr.mxu0 0.0
  %1330 = vmatpush1.msra.mxu0 0.0
  %1331 = vmatprep.subr.mxu0 0.0
  %1332 = vmatpush1.msra.mxu0 0.0
  %1333 = vmatprep.subr.mxu0 0.0
  %1334 = vmatpush1.msra.mxu0 0.0
  %1335 = vmatprep.subr.mxu0 0.0
  %1336 = vmatpush1.msra.mxu0 0.0
  %1337 = vmatprep.subr.mxu0 0.0
  %1338 = vmatpush1.msra.mxu0 0.0
  %1339 = vmatprep.subr.mxu0 0.0
  %1340 = vmatpush1.msra.mxu0 0.0
  %1341 = vmatprep.subr.mxu0 0.0
  %1342 = vmatpush1.msra.mxu0 0.0
  %1343 = vmatprep.subr.mxu0 0.0
  %1344 = vmatpush1.msra.mxu0 0.0
  %1345 = vmatprep.subr.mxu0 0.0
  %1346 = vmatpush1.msra.mxu0 0.0
  %1347 = vmatprep.subr.mxu0 0.0
  %1348 = vmatpush1.msra.mxu0 0.0
  %1349 = vmatprep.subr.mxu0 0.0
  %1350 = vmatpush1.msra.mxu0 0.0
  %1351 = vmatprep.subr.mxu0 0.0
  %1352 = vmatpush1.msra.mxu0 0.0
  %1353 = vmatprep.subr.mxu0 0.0
  %1354 = vmatpush1.msra.mxu0 0.0
  %1355 = vmatprep.subr.mxu0 0.0
  %1356 = vmatpush1.msra.mxu0 0.0
  %1357 = vmatprep.subr.mxu0 0.0
  %1358 = vmatpush1.msra.mxu0 0.0
  %1359 = vmatprep.subr.mxu0 0.0
  %1360 = vmatpush1.msra.mxu0 0.0
  %1361 = vmatprep.subr.mxu0 0.0
  %1362 = vmatpush1.msra.mxu0 0.0
  %1363 = vmatprep.subr.mxu0 0.0
  %1364 = vmatpush1.msra.mxu0 0.0
  %1365 = vmatprep.subr.mxu0 0.0
  %1366 = vmatpush1.msra.mxu0 0.0
  %1367 = vmatprep.subr.mxu0 0.0
  %1368 = vmatpush1.msra.mxu0 0.0
  %1369 = vmatprep.subr.mxu0 0.0
  %1370 = vmatpush1.msra.mxu0 0.0
  %1371 = vmatprep.subr.mxu0 0.0
  %1372 = vmatpush1.msra.mxu0 0.0
  %1373 = vmatprep.subr.mxu0 0.0
  %1374 = vmatpush1.msra.mxu0 0.0
  %1375 = vmatprep.subr.mxu0 0.0
  %1376 = vmatpush1.msra.mxu0 0.0
  %1377 = vmatprep.subr.mxu0 0.0
  %1378 = vmatpush1.msra.mxu0 0.0
  %1379 = vmatprep.subr.mxu0 0.0
  %1380 = vmatpush1.msra.mxu0 0.0
  %1381 = vmatprep.mubr.f32.mxu0 0.0
  %1382 = vmatmul.mubr.f32.gmra.mrb[0].mxu0 %v1315
  %v1383 = vpop.f32.mrb[0].mxu0
  %v1384 = vadd.f32 0.0, %v1383
  %v1385 = vpop.f32.mrb[0].mxu0
  %1386 = vdwg.mxu0
  %1387 = vrot.lane.b32.xlu0 %v297, 64
  %v1388 = vpop.permute.xlu0 %1387
  %v1391 = vsel %vm304, %v1002, 0
  %1393 = vmatprep.subr.mxu0 0.0
  %1394 = vmatpush1.msra.mxu0 %v1388
  %1395 = vmatprep.subr.mxu0 0.0
  %1396 = vmatpush1.msra.mxu0 0.0
  %1397 = vmatprep.subr.mxu0 0.0
  %1398 = vmatpush1.msra.mxu0 0.0
  %1399 = vmatprep.subr.mxu0 0.0
  %1400 = vmatpush1.msra.mxu0 0.0
  %1401 = vmatprep.subr.mxu0 0.0
  %1402 = vmatpush1.msra.mxu0 0.0
  %1403 = vmatprep.subr.mxu0 0.0
  %1404 = vmatpush1.msra.mxu0 0.0
  %1405 = vmatprep.subr.mxu0 0.0
  %1406 = vmatpush1.msra.mxu0 0.0
  %1407 = vmatprep.subr.mxu0 0.0
  %1408 = vmatpush1.msra.mxu0 0.0
  %1409 = vmatprep.subr.mxu0 0.0
  %1410 = vmatpush1.msra.mxu0 0.0
  %1411 = vmatprep.subr.mxu0 0.0
  %1412 = vmatpush1.msra.mxu0 0.0
  %1413 = vmatprep.subr.mxu0 0.0
  %1414 = vmatpush1.msra.mxu0 0.0
  %1415 = vmatprep.subr.mxu0 0.0
  %1416 = vmatpush1.msra.mxu0 0.0
  %1417 = vmatprep.subr.mxu0 0.0
  %1418 = vmatpush1.msra.mxu0 0.0
  %1419 = vmatprep.subr.mxu0 0.0
  %1420 = vmatpush1.msra.mxu0 0.0
  %1421 = vmatprep.subr.mxu0 0.0
  %1422 = vmatpush1.msra.mxu0 0.0
  %1423 = vmatprep.subr.mxu0 0.0
  %1424 = vmatpush1.msra.mxu0 0.0
  %1425 = vmatprep.subr.mxu0 0.0
  %1426 = vmatpush1.msra.mxu0 0.0
  %1427 = vmatprep.subr.mxu0 0.0
  %1428 = vmatpush1.msra.mxu0 0.0
  %1429 = vmatprep.subr.mxu0 0.0
  %1430 = vmatpush1.msra.mxu0 0.0
  %1431 = vmatprep.subr.mxu0 0.0
  %1432 = vmatpush1.msra.mxu0 0.0
  %1433 = vmatprep.subr.mxu0 0.0
  %1434 = vmatpush1.msra.mxu0 0.0
  %1435 = vmatprep.subr.mxu0 0.0
  %1436 = vmatpush1.msra.mxu0 0.0
  %1437 = vmatprep.subr.mxu0 0.0
  %1438 = vmatpush1.msra.mxu0 0.0
  %1439 = vmatprep.subr.mxu0 0.0
  %1440 = vmatpush1.msra.mxu0 0.0
  %1441 = vmatprep.subr.mxu0 0.0
  %1442 = vmatpush1.msra.mxu0 0.0
  %1443 = vmatprep.subr.mxu0 0.0
  %1444 = vmatpush1.msra.mxu0 0.0
  %1445 = vmatprep.subr.mxu0 0.0
  %1446 = vmatpush1.msra.mxu0 0.0
  %1447 = vmatprep.subr.mxu0 0.0
  %1448 = vmatpush1.msra.mxu0 0.0
  %1449 = vmatprep.subr.mxu0 0.0
  %1450 = vmatpush1.msra.mxu0 0.0
  %1451 = vmatprep.subr.mxu0 0.0
  %1452 = vmatpush1.msra.mxu0 0.0
  %1453 = vmatprep.subr.mxu0 0.0
  %1454 = vmatpush1.msra.mxu0 0.0
  %1455 = vmatprep.subr.mxu0 0.0
  %1456 = vmatpush1.msra.mxu0 0.0
  %1457 = vmatprep.mubr.f32.mxu0 0.0
  %1458 = vmatmul.mubr.f32.gmra.mrb[0].mxu0 %v1391
  %v1459 = vpop.f32.mrb[0].mxu0
  %v1460 = vadd.f32 0.0, %v1459
  %v1461 = vpop.f32.mrb[0].mxu0
  %1462 = vdwg.mxu0
  %1463 = vrot.lane.b32.xlu0 %v299, 64
  %v1464 = vpop.permute.xlu0 %1463
  %v1467 = vsel %vm304, %v1004, 0
  %1469 = vmatprep.subr.mxu0 0.0
  %1470 = vmatpush1.msra.mxu0 %v1464
  %1471 = vmatprep.subr.mxu0 0.0
  %1472 = vmatpush1.msra.mxu0 0.0
  %1473 = vmatprep.subr.mxu0 0.0
  %1474 = vmatpush1.msra.mxu0 0.0
  %1475 = vmatprep.subr.mxu0 0.0
  %1476 = vmatpush1.msra.mxu0 0.0
  %1477 = vmatprep.subr.mxu0 0.0
  %1478 = vmatpush1.msra.mxu0 0.0
  %1479 = vmatprep.subr.mxu0 0.0
  %1480 = vmatpush1.msra.mxu0 0.0
  %1481 = vmatprep.subr.mxu0 0.0
  %1482 = vmatpush1.msra.mxu0 0.0
  %1483 = vmatprep.subr.mxu0 0.0
  %1484 = vmatpush1.msra.mxu0 0.0
  %1485 = vmatprep.subr.mxu0 0.0
  %1486 = vmatpush1.msra.mxu0 0.0
  %1487 = vmatprep.subr.mxu0 0.0
  %1488 = vmatpush1.msra.mxu0 0.0
  %1489 = vmatprep.subr.mxu0 0.0
  %1490 = vmatpush1.msra.mxu0 0.0
  %1491 = vmatprep.subr.mxu0 0.0
  %1492 = vmatpush1.msra.mxu0 0.0
  %1493 = vmatprep.subr.mxu0 0.0
  %1494 = vmatpush1.msra.mxu0 0.0
  %1495 = vmatprep.subr.mxu0 0.0
  %1496 = vmatpush1.msra.mxu0 0.0
  %1497 = vmatprep.subr.mxu0 0.0
  %1498 = vmatpush1.msra.mxu0 0.0
  %1499 = vmatprep.subr.mxu0 0.0
  %1500 = vmatpush1.msra.mxu0 0.0
  %1501 = vmatprep.subr.mxu0 0.0
  %1502 = vmatpush1.msra.mxu0 0.0
  %1503 = vmatprep.subr.mxu0 0.0
  %1504 = vmatpush1.msra.mxu0 0.0
  %1505 = vmatprep.subr.mxu0 0.0
  %1506 = vmatpush1.msra.mxu0 0.0
  %1507 = vmatprep.subr.mxu0 0.0
  %1508 = vmatpush1.msra.mxu0 0.0
  %1509 = vmatprep.subr.mxu0 0.0
  %1510 = vmatpush1.msra.mxu0 0.0
  %1511 = vmatprep.subr.mxu0 0.0
  %1512 = vmatpush1.msra.mxu0 0.0
  %1513 = vmatprep.subr.mxu0 0.0
  %1514 = vmatpush1.msra.mxu0 0.0
  %1515 = vmatprep.subr.mxu0 0.0
  %1516 = vmatpush1.msra.mxu0 0.0
  %1517 = vmatprep.subr.mxu0 0.0
  %1518 = vmatpush1.msra.mxu0 0.0
  %1519 = vmatprep.subr.mxu0 0.0
  %1520 = vmatpush1.msra.mxu0 0.0
  %1521 = vmatprep.subr.mxu0 0.0
  %1522 = vmatpush1.msra.mxu0 0.0
  %1523 = vmatprep.subr.mxu0 0.0
  %1524 = vmatpush1.msra.mxu0 0.0
  %1525 = vmatprep.subr.mxu0 0.0
  %1526 = vmatpush1.msra.mxu0 0.0
  %1527 = vmatprep.subr.mxu0 0.0
  %1528 = vmatpush1.msra.mxu0 0.0
  %1529 = vmatprep.subr.mxu0 0.0
  %1530 = vmatpush1.msra.mxu0 0.0
  %1531 = vmatprep.subr.mxu0 0.0
  %1532 = vmatpush1.msra.mxu0 0.0
  %1533 = vmatprep.mubr.f32.mxu0 0.0
  %1534 = vmatmul.mubr.f32.gmra.mrb[0].mxu0 %v1467
  %v1535 = vpop.f32.mrb[0].mxu0
  %v1536 = vadd.f32 0.0, %v1535
  %v1537 = vpop.f32.mrb[0].mxu0
  %1538 = vdwg.mxu0
  %1539 = vrot.lane.b32.xlu0 %v301, 64
  %v1540 = vpop.permute.xlu0 %1539
  %v1543 = vsel %vm304, %v1006, 0
  %1545 = vmatprep.subr.mxu0 0.0
  %1546 = vmatpush1.msra.mxu0 %v1540
  %1547 = vmatprep.subr.mxu0 0.0
  %1548 = vmatpush1.msra.mxu0 0.0
  %1549 = vmatprep.subr.mxu0 0.0
  %1550 = vmatpush1.msra.mxu0 0.0
  %1551 = vmatprep.subr.mxu0 0.0
  %1552 = vmatpush1.msra.mxu0 0.0
  %1553 = vmatprep.subr.mxu0 0.0
  %1554 = vmatpush1.msra.mxu0 0.0
  %1555 = vmatprep.subr.mxu0 0.0
  %1556 = vmatpush1.msra.mxu0 0.0
  %1557 = vmatprep.subr.mxu0 0.0
  %1558 = vmatpush1.msra.mxu0 0.0
  %1559 = vmatprep.subr.mxu0 0.0
  %1560 = vmatpush1.msra.mxu0 0.0
  %1561 = vmatprep.subr.mxu0 0.0
  %1562 = vmatpush1.msra.mxu0 0.0
  %1563 = vmatprep.subr.mxu0 0.0
  %1564 = vmatpush1.msra.mxu0 0.0
  %1565 = vmatprep.subr.mxu0 0.0
  %1566 = vmatpush1.msra.mxu0 0.0
  %1567 = vmatprep.subr.mxu0 0.0
  %1568 = vmatpush1.msra.mxu0 0.0
  %1569 = vmatprep.subr.mxu0 0.0
  %1570 = vmatpush1.msra.mxu0 0.0
  %1571 = vmatprep.subr.mxu0 0.0
  %1572 = vmatpush1.msra.mxu0 0.0
  %1573 = vmatprep.subr.mxu0 0.0
  %1574 = vmatpush1.msra.mxu0 0.0
  %1575 = vmatprep.subr.mxu0 0.0
  %1576 = vmatpush1.msra.mxu0 0.0
  %1577 = vmatprep.subr.mxu0 0.0
  %1578 = vmatpush1.msra.mxu0 0.0
  %1579 = vmatprep.subr.mxu0 0.0
  %1580 = vmatpush1.msra.mxu0 0.0
  %1581 = vmatprep.subr.mxu0 0.0
  %1582 = vmatpush1.msra.mxu0 0.0
  %1583 = vmatprep.subr.mxu0 0.0
  %1584 = vmatpush1.msra.mxu0 0.0
  %1585 = vmatprep.subr.mxu0 0.0
  %1586 = vmatpush1.msra.mxu0 0.0
  %1587 = vmatprep.subr.mxu0 0.0
  %1588 = vmatpush1.msra.mxu0 0.0
  %1589 = vmatprep.subr.mxu0 0.0
  %1590 = vmatpush1.msra.mxu0 0.0
  %1591 = vmatprep.subr.mxu0 0.0
  %1592 = vmatpush1.msra.mxu0 0.0
  %1593 = vmatprep.subr.mxu0 0.0
  %1594 = vmatpush1.msra.mxu0 0.0
  %1595 = vmatprep.subr.mxu0 0.0
  %1596 = vmatpush1.msra.mxu0 0.0
  %1597 = vmatprep.subr.mxu0 0.0
  %1598 = vmatpush1.msra.mxu0 0.0
  %1599 = vmatprep.subr.mxu0 0.0
  %1600 = vmatpush1.msra.mxu0 0.0
  %1601 = vmatprep.subr.mxu0 0.0
  %1602 = vmatpush1.msra.mxu0 0.0
  %1603 = vmatprep.subr.mxu0 0.0
  %1604 = vmatpush1.msra.mxu0 0.0
  %1605 = vmatprep.subr.mxu0 0.0
  %1606 = vmatpush1.msra.mxu0 0.0
  %1607 = vmatprep.subr.mxu0 0.0
  %1608 = vmatpush1.msra.mxu0 0.0
  %1609 = vmatprep.mubr.f32.mxu0 0.0
  %1610 = vmatmul.mubr.f32.gmra.mrb[0].mxu0 %v1543
  %v1611 = vpop.f32.mrb[0].mxu0
  %v1612 = vadd.f32 0.0, %v1611
  %v1613 = vpop.f32.mrb[0].mxu0
  %1614 = vdwg.mxu0
  %1617 = vrot.lane.b32.xlu0 %v1232, 8
  %v1618 = vpop.permute.xlu0 %1617
  %1619 = vrot.lane.b32.xlu0 %v1308, 8
  %v1620 = vpop.permute.xlu0 %1619
  %1625 = vrot.lane.b32.xlu0 %v1384, 16
  %v1626 = vpop.permute.xlu0 %1625
  %1627 = vrot.lane.b32.xlu0 %v1460, 16
  %v1628 = vpop.permute.xlu0 %1627
  %1633 = vrot.lane.b32.xlu0 %v1536, 24
  %v1634 = vpop.permute.xlu0 %1633
  %1635 = vrot.lane.b32.xlu0 %v1612, 24
  %v1636 = vpop.permute.xlu0 %1635
  %v1639 = vsel %vm304, %v1080, %v1618
  %v1640 = vsel %vm304, %v1156, %v1620
  %vm1641 = vcmask 130048
  %v1642 = vsel %vm1641, %v1639, %v1626
  %v1643 = vsel %vm1641, %v1640, %v1628
  %vm1644 = vcmask 195584
  %v1645 = vsel %vm1644, %v1642, %v1634
  %v1646 = vsel %vm1644, %v1643, %v1636
  %v1647 = vld [vmem:[%s5 + $0x3] sm:$0x1]
  %v1648 = vlaneseq
  %v1649 = vshrl.u32 %v1648, 7
  %v1650 = vsub.s32 0, %v1649
  %v1651 = vrot.slane %v1647, %v1650
  %v1653 = vsel %vm134, %v1645, 0
  %v1656 = vsel %vm134, %v1646, 0
  %1658 = vmatprep.subr.mxu0 0.0
  %1659 = vmatpush1.msra.mxu0 %v178
  %1660 = vmatprep.subr.mxu0 0.0
  %1661 = vmatpush1.msra.mxu0 %v179
  %1662 = vmatprep.subr.mxu0 0.0
  %1663 = vmatpush1.msra.mxu0 %v180
  %1664 = vmatprep.subr.mxu0 0.0
  %1665 = vmatpush1.msra.mxu0 %v181
  %1666 = vmatprep.subr.mxu0 0.0
  %1667 = vmatpush1.msra.mxu0 0.0
  %1668 = vmatprep.subr.mxu0 0.0
  %1669 = vmatpush1.msra.mxu0 0.0
  %1670 = vmatprep.subr.mxu0 0.0
  %1671 = vmatpush1.msra.mxu0 0.0
  %1672 = vmatprep.subr.mxu0 0.0
  %1673 = vmatpush1.msra.mxu0 0.0
  %1674 = vmatprep.subr.mxu0 0.0
  %1675 = vmatpush1.msra.mxu0 0.0
  %1676 = vmatprep.subr.mxu0 0.0
  %1677 = vmatpush1.msra.mxu0 0.0
  %1678 = vmatprep.subr.mxu0 0.0
  %1679 = vmatpush1.msra.mxu0 0.0
  %1680 = vmatprep.subr.mxu0 0.0
  %1681 = vmatpush1.msra.mxu0 0.0
  %1682 = vmatprep.subr.mxu0 0.0
  %1683 = vmatpush1.msra.mxu0 0.0
  %1684 = vmatprep.subr.mxu0 0.0
  %1685 = vmatpush1.msra.mxu0 0.0
  %1686 = vmatprep.subr.mxu0 0.0
  %1687 = vmatpush1.msra.mxu0 0.0
  %1688 = vmatprep.subr.mxu0 0.0
  %1689 = vmatpush1.msra.mxu0 0.0
  %1690 = vmatprep.subr.mxu0 0.0
  %1691 = vmatpush1.msra.mxu0 0.0
  %1692 = vmatprep.subr.mxu0 0.0
  %1693 = vmatpush1.msra.mxu0 0.0
  %1694 = vmatprep.subr.mxu0 0.0
  %1695 = vmatpush1.msra.mxu0 0.0
  %1696 = vmatprep.subr.mxu0 0.0
  %1697 = vmatpush1.msra.mxu0 0.0
  %1698 = vmatprep.subr.mxu0 0.0
  %1699 = vmatpush1.msra.mxu0 0.0
  %1700 = vmatprep.subr.mxu0 0.0
  %1701 = vmatpush1.msra.mxu0 0.0
  %1702 = vmatprep.subr.mxu0 0.0
  %1703 = vmatpush1.msra.mxu0 0.0
  %1704 = vmatprep.subr.mxu0 0.0
  %1705 = vmatpush1.msra.mxu0 0.0
  %1706 = vmatprep.subr.mxu0 0.0
  %1707 = vmatpush1.msra.mxu0 0.0
  %1708 = vmatprep.subr.mxu0 0.0
  %1709 = vmatpush1.msra.mxu0 0.0
  %1710 = vmatprep.subr.mxu0 0.0
  %1711 = vmatpush1.msra.mxu0 0.0
  %1712 = vmatprep.subr.mxu0 0.0
  %1713 = vmatpush1.msra.mxu0 0.0
  %1714 = vmatprep.subr.mxu0 0.0
  %1715 = vmatpush1.msra.mxu0 0.0
  %1716 = vmatprep.subr.mxu0 0.0
  %1717 = vmatpush1.msra.mxu0 0.0
  %1718 = vmatprep.subr.mxu0 0.0
  %1719 = vmatpush1.msra.mxu0 0.0
  %1720 = vmatprep.subr.mxu0 0.0
  %1721 = vmatpush1.msra.mxu0 0.0
  %1722 = vmatprep.mubr.f32.mxu0 0.0
  %1723 = vmatmul.mubr.f32.gmra.mrb[0].mxu0 %v1653
  %v1724 = vpop.f32.mrb[0].mxu0
  %v1725 = vadd.f32 %v1651, %v1724
  %v1726 = vpop.f32.mrb[0].mxu0
  %1727 = vmatprep.mubr.f32.mxu0 0.0
  %1728 = vmatmul.mubr.f32.gmra.mrb[0].mxu0 %v1656
  %v1729 = vpop.f32.mrb[0].mxu0
  %v1730 = vadd.f32 %v1651, %v1729
  %v1731 = vpop.f32.mrb[0].mxu0
  %1732 = vdwg.mxu0
  %v1733 = vadd.f32 %v1725, %v172
  %v1734 = vadd.f32 %v1730, %v173
  %v1735 = vld [vmem:[%s5 + $0x4] sm:$0x1]
  %v1736 = vld [vmem:[%s5 + $0x5] sm:$0x1]
  %v1737 = vsel %vm134, %v1733, 0.0
  %1738 = vadd.xlane.f32.xlu0 %v1737
  %v1739 = vpop.xlane.xlu0 %1738
  %v1740 = vsel %vm134, %v1734, 0.0
  %1741 = vadd.xlane.f32.xlu0 %v1740
  %v1742 = vpop.xlane.xlu0 %1741
  %v1743 = vmul.f32 %v1739, %v141
  %v1744 = vmul.f32 %v1742, %v141
  %v1745 = vsub.f32 %v1733, %v1743
  %v1746 = vsub.f32 %v1734, %v1744
  %v1747 = vmul.f32 %v1745, %v1745
  %v1748 = vmul.f32 %v1746, %v1746
  %v1749 = vsel %vm134, %v1747, 0.0
  %1750 = vadd.xlane.f32.xlu0 %v1749
  %v1751 = vpop.xlane.xlu0 %1750
  %v1752 = vsel %vm134, %v1748, 0.0
  %1753 = vadd.xlane.f32.xlu0 %v1752
  %v1754 = vpop.xlane.xlu0 %1753
  %v1755 = vmul.f32 %v1751, %v141
  %v1756 = vmul.f32 %v1754, %v141
  %v1757 = vadd.f32 %v1755, 1e-12
  %v1758 = vadd.f32 %v1756, 1e-12
  %v1759 = vrsqrt.pop %v1757
  %v1760 = vrsqrt.pop %v1758
  %v1761 = vmul.f32 %v1745, %v1759
  %v1762 = vmul.f32 %v1746, %v1760
  %v1763 = vlaneseq
  %v1764 = vshrl.u32 %v1763, 7
  %v1765 = vsub.s32 0, %v1764
  %v1766 = vrot.slane %v1735, %v1765
  %v1767 = vmul.f32 %v1761, %v1766
  %v1768 = vmul.f32 %v1762, %v1766
  %v1769 = vlaneseq
  %v1770 = vshrl.u32 %v1769, 7
  %v1771 = vsub.s32 0, %v1770
  %v1772 = vrot.slane %v1736, %v1771
  %v1773 = vadd.f32 %v1767, %v1772
  %v1774 = vadd.f32 %v1768, %v1772
  %v1775 = vld [vmem:[%s5 + $0x6] sm:$0x1]
  %v1776 = vlaneseq
  %v1777 = vshrl.u32 %v1776, 7
  %v1778 = vsub.s32 0, %v1777
  %v1779 = vrot.slane %v1775, %v1778
  %v1781 = vsel %vm134, %v1773, 0
  %v1784 = vsel %vm134, %v1774, 0
  %1786 = vmatprep.subr.mxu0 0.0
  %1787 = vmatpush1.msra.mxu0 %v182
  %1788 = vmatprep.subr.mxu0 0.0
  %1789 = vmatpush1.msra.mxu0 %v183
  %1790 = vmatprep.subr.mxu0 0.0
  %1791 = vmatpush1.msra.mxu0 %v184
  %1792 = vmatprep.subr.mxu0 0.0
  %1793 = vmatpush1.msra.mxu0 %v185
  %1794 = vmatprep.subr.mxu0 0.0
  %1795 = vmatpush1.msra.mxu0 0.0
  %1796 = vmatprep.subr.mxu0 0.0
  %1797 = vmatpush1.msra.mxu0 0.0
  %1798 = vmatprep.subr.mxu0 0.0
  %1799 = vmatpush1.msra.mxu0 0.0
  %1800 = vmatprep.subr.mxu0 0.0
  %1801 = vmatpush1.msra.mxu0 0.0
  %1802 = vmatprep.subr.mxu0 0.0
  %1803 = vmatpush1.msra.mxu0 0.0
  %1804 = vmatprep.subr.mxu0 0.0
  %1805 = vmatpush1.msra.mxu0 0.0
  %1806 = vmatprep.subr.mxu0 0.0
  %1807 = vmatpush1.msra.mxu0 0.0
  %1808 = vmatprep.subr.mxu0 0.0
  %1809 = vmatpush1.msra.mxu0 0.0
  %1810 = vmatprep.subr.mxu0 0.0
  %1811 = vmatpush1.msra.mxu0 0.0
  %1812 = vmatprep.subr.mxu0 0.0
  %1813 = vmatpush1.msra.mxu0 0.0
  %1814 = vmatprep.subr.mxu0 0.0
  %1815 = vmatpush1.msra.mxu0 0.0
  %1816 = vmatprep.subr.mxu0 0.0
  %1817 = vmatpush1.msra.mxu0 0.0
  %1818 = vmatprep.subr.mxu0 0.0
  %1819 = vmatpush1.msra.mxu0 0.0
  %1820 = vmatprep.subr.mxu0 0.0
  %1821 = vmatpush1.msra.mxu0 0.0
  %1822 = vmatprep.subr.mxu0 0.0
  %1823 = vmatpush1.msra.mxu0 0.0
  %1824 = vmatprep.subr.mxu0 0.0
  %1825 = vmatpush1.msra.mxu0 0.0
  %1826 = vmatprep.subr.mxu0 0.0
  %1827 = vmatpush1.msra.mxu0 0.0
  %1828 = vmatprep.subr.mxu0 0.0
  %1829 = vmatpush1.msra.mxu0 0.0
  %1830 = vmatprep.subr.mxu0 0.0
  %1831 = vmatpush1.msra.mxu0 0.0
  %1832 = vmatprep.subr.mxu0 0.0
  %1833 = vmatpush1.msra.mxu0 0.0
  %1834 = vmatprep.subr.mxu0 0.0
  %1835 = vmatpush1.msra.mxu0 0.0
  %1836 = vmatprep.subr.mxu0 0.0
  %1837 = vmatpush1.msra.mxu0 0.0
  %1838 = vmatprep.subr.mxu0 0.0
  %1839 = vmatpush1.msra.mxu0 0.0
  %1840 = vmatprep.subr.mxu0 0.0
  %1841 = vmatpush1.msra.mxu0 0.0
  %1842 = vmatprep.subr.mxu0 0.0
  %1843 = vmatpush1.msra.mxu0 0.0
  %1844 = vmatprep.subr.mxu0 0.0
  %1845 = vmatpush1.msra.mxu0 0.0
  %1846 = vmatprep.subr.mxu0 0.0
  %1847 = vmatpush1.msra.mxu0 0.0
  %1848 = vmatprep.subr.mxu0 0.0
  %1849 = vmatpush1.msra.mxu0 0.0
  %1850 = vmatprep.mubr.f32.mxu0 0.0
  %1851 = vmatmul.mubr.f32.gmra.mrb[0].mxu0 %v1781
  %v1852 = vpop.f32.mrb[0].mxu0
  %v1853 = vadd.f32 %v1779, %v1852
  %v1854 = vpop.f32.mrb[0].mxu0
  %1855 = vmatprep.mubr.f32.mxu0 0.0
  %1856 = vmatmul.mubr.f32.gmra.mrb[0].mxu0 %v1784
  %v1857 = vpop.f32.mrb[0].mxu0
  %v1858 = vadd.f32 %v1779, %v1857
  %v1859 = vpop.f32.mrb[0].mxu0
  %1860 = vdwg.mxu0
  %v1861 = vmul.f32 %v1853, 0.5
  %v1862 = vmul.f32 %v1858, 0.5
  %v1863 = vmul.f32 %v1853, 0.70710677
  %v1864 = vmul.f32 %v1858, 0.70710677
  %vm1865 = vcmp.ge.f32.partialorder %v1863, 0.0
  %vm1866 = vcmp.ge.f32.partialorder %v1864, 0.0
  %v1867 = vsel %vm1865, 1.0, -1.0
  %v1868 = vsel %vm1866, 1.0, -1.0
  %v1869 = vand.u32 2147483647, %v1863
  %v1870 = vand.u32 2147483647, %v1864
  %v1871 = vmul.f32 %v1869, 0.3275911
  %v1872 = vmul.f32 %v1870, 0.3275911
  %v1873 = vadd.f32 %v1871, 1.0
  %v1874 = vadd.f32 %v1872, 1.0
  %v1875 = vrcp.pop %v1873
  %v1876 = vmul.f32 1.0, %v1875
  %v1877 = vrcp.pop %v1874
  %v1878 = vmul.f32 1.0, %v1877
  %v1879 = vmul.f32 %v1876, 1.0614054
  %v1880 = vmul.f32 %v1878, 1.0614054
  %v1881 = vadd.f32 %v1879, -1.4531521
  %v1882 = vadd.f32 %v1880, -1.4531521
  %v1883 = vmul.f32 %v1881, %v1876
  %v1884 = vmul.f32 %v1882, %v1878
  %v1885 = vadd.f32 %v1883, 1.4214138
  %v1886 = vadd.f32 %v1884, 1.4214138
  %v1887 = vmul.f32 %v1885, %v1876
  %v1888 = vmul.f32 %v1886, %v1878
  %v1889 = vadd.f32 %v1887, -0.28449672
  %v1890 = vadd.f32 %v1888, -0.28449672
  %v1891 = vmul.f32 %v1889, %v1876
  %v1892 = vmul.f32 %v1890, %v1878
  %v1893 = vadd.f32 %v1891, 0.2548296
  %v1894 = vadd.f32 %v1892, 0.2548296
  %v1895 = vmul.f32 %v1893, %v1876
  %v1896 = vmul.f32 %v1894, %v1878
  %v1897 = vsub.f32 0.0, %v1869
  %v1898 = vsub.f32 0.0, %v1870
  %v1899 = vmul.f32 %v1897, %v1869
  %v1900 = vmul.f32 %v1898, %v1870
  %v1901 = vmul.f32 %v1899, 1.442695
  %v1902 = vpow.pop %v1901
  %v1903 = vmul.f32 %v1900, 1.442695
  %v1904 = vpow.pop %v1903
  %v1905 = vmul.f32 %v1895, %v1902
  %v1906 = vmul.f32 %v1896, %v1904
  %v1907 = vsub.f32 1.0, %v1905
  %v1908 = vsub.f32 1.0, %v1906
  %v1909 = vmul.f32 %v1867, %v1907
  %v1910 = vmul.f32 %v1868, %v1908
  %v1911 = vadd.f32 %v1909, 1.0
  %v1912 = vadd.f32 %v1910, 1.0
  %v1913 = vmul.f32 %v1861, %v1911
  %v1914 = vmul.f32 %v1862, %v1912
  %v1915 = vld [vmem:[%s5 + $0x7] sm:$0x1]
  %v1916 = vlaneseq
  %v1917 = vshrl.u32 %v1916, 7
  %v1918 = vsub.s32 0, %v1917
  %v1919 = vrot.slane %v1915, %v1918
  %1920 = vmatprep.subr.mxu0 0.0
  %1921 = vmatpush1.msra.mxu0 %v186
  %1922 = vmatprep.subr.mxu0 0.0
  %1923 = vmatpush1.msra.mxu0 %v187
  %1924 = vmatprep.subr.mxu0 0.0
  %1925 = vmatpush1.msra.mxu0 %v188
  %1926 = vmatprep.subr.mxu0 0.0
  %1927 = vmatpush1.msra.mxu0 %v189
  %1928 = vmatprep.subr.mxu0 0.0
  %1929 = vmatpush1.msra.mxu0 %v190
  %1930 = vmatprep.subr.mxu0 0.0
  %1931 = vmatpush1.msra.mxu0 %v191
  %1932 = vmatprep.subr.mxu0 0.0
  %1933 = vmatpush1.msra.mxu0 %v192
  %1934 = vmatprep.subr.mxu0 0.0
  %1935 = vmatpush1.msra.mxu0 %v193
  %1936 = vmatprep.subr.mxu0 0.0
  %1937 = vmatpush1.msra.mxu0 %v194
  %1938 = vmatprep.subr.mxu0 0.0
  %1939 = vmatpush1.msra.mxu0 %v195
  %1940 = vmatprep.subr.mxu0 0.0
  %1941 = vmatpush1.msra.mxu0 %v196
  %1942 = vmatprep.subr.mxu0 0.0
  %1943 = vmatpush1.msra.mxu0 %v197
  %1944 = vmatprep.subr.mxu0 0.0
  %1945 = vmatpush1.msra.mxu0 %v198
  %1946 = vmatprep.subr.mxu0 0.0
  %1947 = vmatpush1.msra.mxu0 %v199
  %1948 = vmatprep.subr.mxu0 0.0
  %1949 = vmatpush1.msra.mxu0 %v200
  %1950 = vmatprep.subr.mxu0 0.0
  %1951 = vmatpush1.msra.mxu0 %v201
  %1952 = vmatprep.subr.mxu0 0.0
  %1953 = vmatpush1.msra.mxu0 0.0
  %1954 = vmatprep.subr.mxu0 0.0
  %1955 = vmatpush1.msra.mxu0 0.0
  %1956 = vmatprep.subr.mxu0 0.0
  %1957 = vmatpush1.msra.mxu0 0.0
  %1958 = vmatprep.subr.mxu0 0.0
  %1959 = vmatpush1.msra.mxu0 0.0
  %1960 = vmatprep.subr.mxu0 0.0
  %1961 = vmatpush1.msra.mxu0 0.0
  %1962 = vmatprep.subr.mxu0 0.0
  %1963 = vmatpush1.msra.mxu0 0.0
  %1964 = vmatprep.subr.mxu0 0.0
  %1965 = vmatpush1.msra.mxu0 0.0
  %1966 = vmatprep.subr.mxu0 0.0
  %1967 = vmatpush1.msra.mxu0 0.0
  %1968 = vmatprep.subr.mxu0 0.0
  %1969 = vmatpush1.msra.mxu0 0.0
  %1970 = vmatprep.subr.mxu0 0.0
  %1971 = vmatpush1.msra.mxu0 0.0
  %1972 = vmatprep.subr.mxu0 0.0
  %1973 = vmatpush1.msra.mxu0 0.0
  %1974 = vmatprep.subr.mxu0 0.0
  %1975 = vmatpush1.msra.mxu0 0.0
  %1976 = vmatprep.subr.mxu0 0.0
  %1977 = vmatpush1.msra.mxu0 0.0
  %1978 = vmatprep.subr.mxu0 0.0
  %1979 = vmatpush1.msra.mxu0 0.0
  %1980 = vmatprep.subr.mxu0 0.0
  %1981 = vmatpush1.msra.mxu0 0.0
  %1982 = vmatprep.subr.mxu0 0.0
  %1983 = vmatpush1.msra.mxu0 0.0
  %1984 = vmatprep.mubr.f32.mxu0 0.0
  %1985 = vmatmul.mubr.f32.gmra.mrb[0].mxu0 %v1913
  %v1986 = vpop.f32.mrb[0].mxu0
  %v1987 = vadd.f32 %v1919, %v1986
  %v1988 = vpop.f32.mrb[0].mxu0
  %1989 = vmatprep.mubr.f32.mxu0 0.0
  %1990 = vmatmul.mubr.f32.gmra.mrb[0].mxu0 %v1914
  %v1991 = vpop.f32.mrb[0].mxu0
  %v1992 = vadd.f32 %v1919, %v1991
  %v1993 = vpop.f32.mrb[0].mxu0
  %1994 = vdwg.mxu0
  %v1995 = vadd.f32 %v1987, %v1773
  %v1996 = vadd.f32 %v1992, %v1774
  %v1997 = vld [vmem:[%s5 + $0x8] sm:$0x1]
  %v1998 = vld [vmem:[%s5 + $0x9] sm:$0x1]
  %v1999 = vsel %vm134, %v1995, 0.0
  %2000 = vadd.xlane.f32.xlu0 %v1999
  %v2001 = vpop.xlane.xlu0 %2000
  %v2002 = vsel %vm134, %v1996, 0.0
  %2003 = vadd.xlane.f32.xlu0 %v2002
  %v2004 = vpop.xlane.xlu0 %2003
  %v2005 = vmul.f32 %v2001, %v141
  %v2006 = vmul.f32 %v2004, %v141
  %v2007 = vsub.f32 %v1995, %v2005
  %v2008 = vsub.f32 %v1996, %v2006
  %v2009 = vmul.f32 %v2007, %v2007
  %v2010 = vmul.f32 %v2008, %v2008
  %v2011 = vsel %vm134, %v2009, 0.0
  %2012 = vadd.xlane.f32.xlu0 %v2011
  %v2013 = vpop.xlane.xlu0 %2012
  %v2014 = vsel %vm134, %v2010, 0.0
  %2015 = vadd.xlane.f32.xlu0 %v2014
  %v2016 = vpop.xlane.xlu0 %2015
  %v2017 = vmul.f32 %v2013, %v141
  %v2018 = vmul.f32 %v2016, %v141
  %v2019 = vadd.f32 %v2017, 1e-12
  %v2020 = vadd.f32 %v2018, 1e-12
  %v2021 = vrsqrt.pop %v2019
  %v2022 = vrsqrt.pop %v2020
  %v2023 = vmul.f32 %v2007, %v2021
  %v2024 = vmul.f32 %v2008, %v2022
  %v2025 = vlaneseq
  %v2026 = vshrl.u32 %v2025, 7
  %v2027 = vsub.s32 0, %v2026
  %v2028 = vrot.slane %v1997, %v2027
  %v2029 = vmul.f32 %v2023, %v2028
  %v2030 = vmul.f32 %v2024, %v2028
  %v2031 = vlaneseq
  %v2032 = vshrl.u32 %v2031, 7
  %v2033 = vsub.s32 0, %v2032
  %v2034 = vrot.slane %v1998, %v2033
  %v2035 = vadd.f32 %v2029, %v2034
  %v2036 = vadd.f32 %v2030, %v2034
  %s2037 = scalar_lea.vmem %s3, 96
  %v2038 = vld [vmem:[%s2037] sm:$0xff]
  %v2039 = vld [vmem:[%s2037 + $0x18] sm:$0xff]
  %v2040 = vld [vmem:[%s2037 + $0x30] sm:$0xff]
  %v2041 = vld [vmem:[%s2037 + $0x48] sm:$0xff]
  %v2042 = vld [vmem:[%s2037 + $0x8] sm:$0xff]
  %v2043 = vld [vmem:[%s2037 + $0x20] sm:$0xff]
  %v2044 = vld [vmem:[%s2037 + $0x38] sm:$0xff]
  %v2045 = vld [vmem:[%s2037 + $0x50] sm:$0xff]
  %v2046 = vld [vmem:[%s2037 + $0x10] sm:$0xff]
  %v2047 = vld [vmem:[%s2037 + $0x28] sm:$0xff]
  %v2048 = vld [vmem:[%s2037 + $0x40] sm:$0xff]
  %v2049 = vld [vmem:[%s2037 + $0x58] sm:$0xff]
  %s2050 = scalar_lea.vmem %s4, 128
  %v2051 = vld [vmem:[%s2050] sm:$0xff]
  %v2052 = vld [vmem:[%s2050 + $0x8] sm:$0xff]
  %v2053 = vld [vmem:[%s2050 + $0x10] sm:$0xff]
  %v2054 = vld [vmem:[%s2050 + $0x18] sm:$0xff]
  %v2055 = vld [vmem:[%s2050 + $0x20] sm:$0xff]
  %v2056 = vld [vmem:[%s2050 + $0x28] sm:$0xff]
  %v2057 = vld [vmem:[%s2050 + $0x30] sm:$0xff]
  %v2058 = vld [vmem:[%s2050 + $0x38] sm:$0xff]
  %v2059 = vld [vmem:[%s2050 + $0x40] sm:$0xff]
  %v2060 = vld [vmem:[%s2050 + $0x48] sm:$0xff]
  %v2061 = vld [vmem:[%s2050 + $0x50] sm:$0xff]
  %v2062 = vld [vmem:[%s2050 + $0x58] sm:$0xff]
  %v2063 = vld [vmem:[%s2050 + $0x60] sm:$0xff]
  %v2064 = vld [vmem:[%s2050 + $0x68] sm:$0xff]
  %v2065 = vld [vmem:[%s2050 + $0x70] sm:$0xff]
  %v2066 = vld [vmem:[%s2050 + $0x78] sm:$0xff]
  %v2067 = vld [vmem:[%s5 + $0xa] sm:$0x1]
  %v2068 = vlaneseq
  %v2069 = vshrl.u32 %v2068, 7
  %v2070 = vsub.s32 0, %v2069
  %v2071 = vrot.slane %v2067, %v2070
  %v2073 = vsel %vm134, %v2035, 0
  %v2076 = vsel %vm134, %v2036, 0
  %2078 = vmatprep.subr.mxu0 0.0
  %2079 = vmatpush1.msra.mxu0 %v2038
  %2080 = vmatprep.subr.mxu0 0.0
  %2081 = vmatpush1.msra.mxu0 %v2039
  %2082 = vmatprep.subr.mxu0 0.0
  %2083 = vmatpush1.msra.mxu0 %v2040
  %2084 = vmatprep.subr.mxu0 0.0
  %2085 = vmatpush1.msra.mxu0 %v2041
  %2086 = vmatprep.subr.mxu0 0.0
  %2087 = vmatpush1.msra.mxu0 0.0
  %2088 = vmatprep.subr.mxu0 0.0
  %2089 = vmatpush1.msra.mxu0 0.0
  %2090 = vmatprep.subr.mxu0 0.0
  %2091 = vmatpush1.msra.mxu0 0.0
  %2092 = vmatprep.subr.mxu0 0.0
  %2093 = vmatpush1.msra.mxu0 0.0
  %2094 = vmatprep.subr.mxu0 0.0
  %2095 = vmatpush1.msra.mxu0 0.0
  %2096 = vmatprep.subr.mxu0 0.0
  %2097 = vmatpush1.msra.mxu0 0.0
  %2098 = vmatprep.subr.mxu0 0.0
  %2099 = vmatpush1.msra.mxu0 0.0
  %2100 = vmatprep.subr.mxu0 0.0
  %2101 = vmatpush1.msra.mxu0 0.0
  %2102 = vmatprep.subr.mxu0 0.0
  %2103 = vmatpush1.msra.mxu0 0.0
  %2104 = vmatprep.subr.mxu0 0.0
  %2105 = vmatpush1.msra.mxu0 0.0
  %2106 = vmatprep.subr.mxu0 0.0
  %2107 = vmatpush1.msra.mxu0 0.0
  %2108 = vmatprep.subr.mxu0 0.0
  %2109 = vmatpush1.msra.mxu0 0.0
  %2110 = vmatprep.subr.mxu0 0.0
  %2111 = vmatpush1.msra.mxu0 0.0
  %2112 = vmatprep.subr.mxu0 0.0
  %2113 = vmatpush1.msra.mxu0 0.0
  %2114 = vmatprep.subr.mxu0 0.0
  %2115 = vmatpush1.msra.mxu0 0.0
  %2116 = vmatprep.subr.mxu0 0.0
  %2117 = vmatpush1.msra.mxu0 0.0
  %2118 = vmatprep.subr.mxu0 0.0
  %2119 = vmatpush1.msra.mxu0 0.0
  %2120 = vmatprep.subr.mxu0 0.0
  %2121 = vmatpush1.msra.mxu0 0.0
  %2122 = vmatprep.subr.mxu0 0.0
  %2123 = vmatpush1.msra.mxu0 0.0
  %2124 = vmatprep.subr.mxu0 0.0
  %2125 = vmatpush1.msra.mxu0 0.0
  %2126 = vmatprep.subr.mxu0 0.0
  %2127 = vmatpush1.msra.mxu0 0.0
  %2128 = vmatprep.subr.mxu0 0.0
  %2129 = vmatpush1.msra.mxu0 0.0
  %2130 = vmatprep.subr.mxu0 0.0
  %2131 = vmatpush1.msra.mxu0 0.0
  %2132 = vmatprep.subr.mxu0 0.0
  %2133 = vmatpush1.msra.mxu0 0.0
  %2134 = vmatprep.subr.mxu0 0.0
  %2135 = vmatpush1.msra.mxu0 0.0
  %2136 = vmatprep.subr.mxu0 0.0
  %2137 = vmatpush1.msra.mxu0 0.0
  %2138 = vmatprep.subr.mxu0 0.0
  %2139 = vmatpush1.msra.mxu0 0.0
  %2140 = vmatprep.subr.mxu0 0.0
  %2141 = vmatpush1.msra.mxu0 0.0
  %2142 = vmatprep.mubr.f32.mxu0 0.0
  %2143 = vmatmul.mubr.f32.gmra.mrb[0].mxu0 %v2073
  %v2144 = vpop.f32.mrb[0].mxu0
  %v2145 = vadd.f32 %v2071, %v2144
  %v2146 = vpop.f32.mrb[0].mxu0
  %2147 = vmatprep.mubr.f32.mxu0 0.0
  %2148 = vmatmul.mubr.f32.gmra.mrb[0].mxu0 %v2076
  %v2149 = vpop.f32.mrb[0].mxu0
  %v2150 = vadd.f32 %v2071, %v2149
  %v2151 = vpop.f32.mrb[0].mxu0
  %2152 = vdwg.mxu0
  %2155 = vrot.lane.b32.xlu0 %v2145, 120
  %v2156 = vpop.permute.xlu0 %2155
  %2157 = vrot.lane.b32.xlu0 %v2150, 120
  %v2158 = vpop.permute.xlu0 %2157
  %2159 = vrot.lane.b32.xlu0 %v2145, 112
  %v2160 = vpop.permute.xlu0 %2159
  %2161 = vrot.lane.b32.xlu0 %v2150, 112
  %v2162 = vpop.permute.xlu0 %2161
  %2163 = vrot.lane.b32.xlu0 %v2145, 104
  %v2164 = vpop.permute.xlu0 %2163
  %2165 = vrot.lane.b32.xlu0 %v2150, 104
  %v2166 = vpop.permute.xlu0 %2165
  %2167 = vrot.lane.b32.xlu0 %v2145, 96
  %v2168 = vpop.permute.xlu0 %2167
  %v2169 = vsel %vm304, %v2145, 0
  %v2171 = vsel %vm304, %v2168, 0
  %2173 = vmatprep.subr.mxu0 0.0
  %2174 = vmatpush1.xpose.msra.mxu0 %v2171
  %2175 = vmatprep.subr.mxu0 0.0
  %2176 = vmatpush1.xpose.msra.mxu0 0.0
  %2177 = vmatprep.subr.mxu0 0.0
  %2178 = vmatpush1.xpose.msra.mxu0 0.0
  %2179 = vmatprep.subr.mxu0 0.0
  %2180 = vmatpush1.xpose.msra.mxu0 0.0
  %2181 = vmatprep.subr.mxu0 0.0
  %2182 = vmatpush1.xpose.msra.mxu0 0.0
  %2183 = vmatprep.subr.mxu0 0.0
  %2184 = vmatpush1.xpose.msra.mxu0 0.0
  %2185 = vmatprep.subr.mxu0 0.0
  %2186 = vmatpush1.xpose.msra.mxu0 0.0
  %2187 = vmatprep.subr.mxu0 0.0
  %2188 = vmatpush1.xpose.msra.mxu0 0.0
  %2189 = vmatprep.subr.mxu0 0.0
  %2190 = vmatpush1.xpose.msra.mxu0 0.0
  %2191 = vmatprep.subr.mxu0 0.0
  %2192 = vmatpush1.xpose.msra.mxu0 0.0
  %2193 = vmatprep.subr.mxu0 0.0
  %2194 = vmatpush1.xpose.msra.mxu0 0.0
  %2195 = vmatprep.subr.mxu0 0.0
  %2196 = vmatpush1.xpose.msra.mxu0 0.0
  %2197 = vmatprep.subr.mxu0 0.0
  %2198 = vmatpush1.xpose.msra.mxu0 0.0
  %2199 = vmatprep.subr.mxu0 0.0
  %2200 = vmatpush1.xpose.msra.mxu0 0.0
  %2201 = vmatprep.subr.mxu0 0.0
  %2202 = vmatpush1.xpose.msra.mxu0 0.0
  %2203 = vmatprep.subr.mxu0 0.0
  %2204 = vmatpush1.xpose.msra.mxu0 0.0
  %2205 = vmatprep.subr.mxu0 0.0
  %2206 = vmatpush1.xpose.msra.mxu0 0.0
  %2207 = vmatprep.subr.mxu0 0.0
  %2208 = vmatpush1.xpose.msra.mxu0 0.0
  %2209 = vmatprep.subr.mxu0 0.0
  %2210 = vmatpush1.xpose.msra.mxu0 0.0
  %2211 = vmatprep.subr.mxu0 0.0
  %2212 = vmatpush1.xpose.msra.mxu0 0.0
  %2213 = vmatprep.subr.mxu0 0.0
  %2214 = vmatpush1.xpose.msra.mxu0 0.0
  %2215 = vmatprep.subr.mxu0 0.0
  %2216 = vmatpush1.xpose.msra.mxu0 0.0
  %2217 = vmatprep.subr.mxu0 0.0
  %2218 = vmatpush1.xpose.msra.mxu0 0.0
  %2219 = vmatprep.subr.mxu0 0.0
  %2220 = vmatpush1.xpose.msra.mxu0 0.0
  %2221 = vmatprep.subr.mxu0 0.0
  %2222 = vmatpush1.xpose.msra.mxu0 0.0
  %2223 = vmatprep.subr.mxu0 0.0
  %2224 = vmatpush1.xpose.msra.mxu0 0.0
  %2225 = vmatprep.subr.mxu0 0.0
  %2226 = vmatpush1.xpose.msra.mxu0 0.0
  %2227 = vmatprep.subr.mxu0 0.0
  %2228 = vmatpush1.xpose.msra.mxu0 0.0
  %2229 = vmatprep.subr.mxu0 0.0
  %2230 = vmatpush1.xpose.msra.mxu0 0.0
  %2231 = vmatprep.subr.mxu0 0.0
  %2232 = vmatpush1.xpose.msra.mxu0 0.0
  %2233 = vmatprep.subr.mxu0 0.0
  %2234 = vmatpush1.xpose.msra.mxu0 0.0
  %2235 = vmatprep.subr.mxu0 0.0
  %2236 = vmatpush1.xpose.msra.mxu0 0.0
  %2237 = vmatprep.mubr.f32.mxu0 0.0
  %2238 = vmatmul.mubr.f32.gmra.mrb[0].mxu0 %v2169
  %v2239 = vpop.f32.mrb[0].mxu0
  %v2240 = vadd.f32 0.0, %v2239
  %v2241 = vpop.f32.mrb[0].mxu0
  %2242 = vdwg.mxu0
  %2243 = vrot.lane.b32.xlu0 %v2150, 96
  %v2244 = vpop.permute.xlu0 %2243
  %v2245 = vsel %vm304, %v2150, 0
  %v2247 = vsel %vm304, %v2244, 0
  %2249 = vmatprep.subr.mxu0 0.0
  %2250 = vmatpush1.xpose.msra.mxu0 %v2247
  %2251 = vmatprep.subr.mxu0 0.0
  %2252 = vmatpush1.xpose.msra.mxu0 0.0
  %2253 = vmatprep.subr.mxu0 0.0
  %2254 = vmatpush1.xpose.msra.mxu0 0.0
  %2255 = vmatprep.subr.mxu0 0.0
  %2256 = vmatpush1.xpose.msra.mxu0 0.0
  %2257 = vmatprep.subr.mxu0 0.0
  %2258 = vmatpush1.xpose.msra.mxu0 0.0
  %2259 = vmatprep.subr.mxu0 0.0
  %2260 = vmatpush1.xpose.msra.mxu0 0.0
  %2261 = vmatprep.subr.mxu0 0.0
  %2262 = vmatpush1.xpose.msra.mxu0 0.0
  %2263 = vmatprep.subr.mxu0 0.0
  %2264 = vmatpush1.xpose.msra.mxu0 0.0
  %2265 = vmatprep.subr.mxu0 0.0
  %2266 = vmatpush1.xpose.msra.mxu0 0.0
  %2267 = vmatprep.subr.mxu0 0.0
  %2268 = vmatpush1.xpose.msra.mxu0 0.0
  %2269 = vmatprep.subr.mxu0 0.0
  %2270 = vmatpush1.xpose.msra.mxu0 0.0
  %2271 = vmatprep.subr.mxu0 0.0
  %2272 = vmatpush1.xpose.msra.mxu0 0.0
  %2273 = vmatprep.subr.mxu0 0.0
  %2274 = vmatpush1.xpose.msra.mxu0 0.0
  %2275 = vmatprep.subr.mxu0 0.0
  %2276 = vmatpush1.xpose.msra.mxu0 0.0
  %2277 = vmatprep.subr.mxu0 0.0
  %2278 = vmatpush1.xpose.msra.mxu0 0.0
  %2279 = vmatprep.subr.mxu0 0.0
  %2280 = vmatpush1.xpose.msra.mxu0 0.0
  %2281 = vmatprep.subr.mxu0 0.0
  %2282 = vmatpush1.xpose.msra.mxu0 0.0
  %2283 = vmatprep.subr.mxu0 0.0
  %2284 = vmatpush1.xpose.msra.mxu0 0.0
  %2285 = vmatprep.subr.mxu0 0.0
  %2286 = vmatpush1.xpose.msra.mxu0 0.0
  %2287 = vmatprep.subr.mxu0 0.0
  %2288 = vmatpush1.xpose.msra.mxu0 0.0
  %2289 = vmatprep.subr.mxu0 0.0
  %2290 = vmatpush1.xpose.msra.mxu0 0.0
  %2291 = vmatprep.subr.mxu0 0.0
  %2292 = vmatpush1.xpose.msra.mxu0 0.0
  %2293 = vmatprep.subr.mxu0 0.0
  %2294 = vmatpush1.xpose.msra.mxu0 0.0
  %2295 = vmatprep.subr.mxu0 0.0
  %2296 = vmatpush1.xpose.msra.mxu0 0.0
  %2297 = vmatprep.subr.mxu0 0.0
  %2298 = vmatpush1.xpose.msra.mxu0 0.0
  %2299 = vmatprep.subr.mxu0 0.0
  %2300 = vmatpush1.xpose.msra.mxu0 0.0
  %2301 = vmatprep.subr.mxu0 0.0
  %2302 = vmatpush1.xpose.msra.mxu0 0.0
  %2303 = vmatprep.subr.mxu0 0.0
  %2304 = vmatpush1.xpose.msra.mxu0 0.0
  %2305 = vmatprep.subr.mxu0 0.0
  %2306 = vmatpush1.xpose.msra.mxu0 0.0
  %2307 = vmatprep.subr.mxu0 0.0
  %2308 = vmatpush1.xpose.msra.mxu0 0.0
  %2309 = vmatprep.subr.mxu0 0.0
  %2310 = vmatpush1.xpose.msra.mxu0 0.0
  %2311 = vmatprep.subr.mxu0 0.0
  %2312 = vmatpush1.xpose.msra.mxu0 0.0
  %2313 = vmatprep.mubr.f32.mxu0 0.0
  %2314 = vmatmul.mubr.f32.gmra.mrb[0].mxu0 %v2245
  %v2315 = vpop.f32.mrb[0].mxu0
  %v2316 = vadd.f32 0.0, %v2315
  %v2317 = vpop.f32.mrb[0].mxu0
  %2318 = vdwg.mxu0
  %2319 = vrot.lane.b32.xlu0 %v2156, 96
  %v2320 = vpop.permute.xlu0 %2319
  %v2321 = vsel %vm304, %v2156, 0
  %v2323 = vsel %vm304, %v2320, 0
  %2325 = vmatprep.subr.mxu0 0.0
  %2326 = vmatpush1.xpose.msra.mxu0 %v2323
  %2327 = vmatprep.subr.mxu0 0.0
  %2328 = vmatpush1.xpose.msra.mxu0 0.0
  %2329 = vmatprep.subr.mxu0 0.0
  %2330 = vmatpush1.xpose.msra.mxu0 0.0
  %2331 = vmatprep.subr.mxu0 0.0
  %2332 = vmatpush1.xpose.msra.mxu0 0.0
  %2333 = vmatprep.subr.mxu0 0.0
  %2334 = vmatpush1.xpose.msra.mxu0 0.0
  %2335 = vmatprep.subr.mxu0 0.0
  %2336 = vmatpush1.xpose.msra.mxu0 0.0
  %2337 = vmatprep.subr.mxu0 0.0
  %2338 = vmatpush1.xpose.msra.mxu0 0.0
  %2339 = vmatprep.subr.mxu0 0.0
  %2340 = vmatpush1.xpose.msra.mxu0 0.0
  %2341 = vmatprep.subr.mxu0 0.0
  %2342 = vmatpush1.xpose.msra.mxu0 0.0
  %2343 = vmatprep.subr.mxu0 0.0
  %2344 = vmatpush1.xpose.msra.mxu0 0.0
  %2345 = vmatprep.subr.mxu0 0.0
  %2346 = vmatpush1.xpose.msra.mxu0 0.0
  %2347 = vmatprep.subr.mxu0 0.0
  %2348 = vmatpush1.xpose.msra.mxu0 0.0
  %2349 = vmatprep.subr.mxu0 0.0
  %2350 = vmatpush1.xpose.msra.mxu0 0.0
  %2351 = vmatprep.subr.mxu0 0.0
  %2352 = vmatpush1.xpose.msra.mxu0 0.0
  %2353 = vmatprep.subr.mxu0 0.0
  %2354 = vmatpush1.xpose.msra.mxu0 0.0
  %2355 = vmatprep.subr.mxu0 0.0
  %2356 = vmatpush1.xpose.msra.mxu0 0.0
  %2357 = vmatprep.subr.mxu0 0.0
  %2358 = vmatpush1.xpose.msra.mxu0 0.0
  %2359 = vmatprep.subr.mxu0 0.0
  %2360 = vmatpush1.xpose.msra.mxu0 0.0
  %2361 = vmatprep.subr.mxu0 0.0
  %2362 = vmatpush1.xpose.msra.mxu0 0.0
  %2363 = vmatprep.subr.mxu0 0.0
  %2364 = vmatpush1.xpose.msra.mxu0 0.0
  %2365 = vmatprep.subr.mxu0 0.0
  %2366 = vmatpush1.xpose.msra.mxu0 0.0
  %2367 = vmatprep.subr.mxu0 0.0
  %2368 = vmatpush1.xpose.msra.mxu0 0.0
  %2369 = vmatprep.subr.mxu0 0.0
  %2370 = vmatpush1.xpose.msra.mxu0 0.0
  %2371 = vmatprep.subr.mxu0 0.0
  %2372 = vmatpush1.xpose.msra.mxu0 0.0
  %2373 = vmatprep.subr.mxu0 0.0
  %2374 = vmatpush1.xpose.msra.mxu0 0.0
  %2375 = vmatprep.subr.mxu0 0.0
  %2376 = vmatpush1.xpose.msra.mxu0 0.0
  %2377 = vmatprep.subr.mxu0 0.0
  %2378 = vmatpush1.xpose.msra.mxu0 0.0
  %2379 = vmatprep.subr.mxu0 0.0
  %2380 = vmatpush1.xpose.msra.mxu0 0.0
  %2381 = vmatprep.subr.mxu0 0.0
  %2382 = vmatpush1.xpose.msra.mxu0 0.0
  %2383 = vmatprep.subr.mxu0 0.0
  %2384 = vmatpush1.xpose.msra.mxu0 0.0
  %2385 = vmatprep.subr.mxu0 0.0
  %2386 = vmatpush1.xpose.msra.mxu0 0.0
  %2387 = vmatprep.subr.mxu0 0.0
  %2388 = vmatpush1.xpose.msra.mxu0 0.0
  %2389 = vmatprep.mubr.f32.mxu0 0.0
  %2390 = vmatmul.mubr.f32.gmra.mrb[0].mxu0 %v2321
  %v2391 = vpop.f32.mrb[0].mxu0
  %v2392 = vadd.f32 0.0, %v2391
  %v2393 = vpop.f32.mrb[0].mxu0
  %2394 = vdwg.mxu0
  %2395 = vrot.lane.b32.xlu0 %v2158, 96
  %v2396 = vpop.permute.xlu0 %2395
  %v2397 = vsel %vm304, %v2158, 0
  %v2399 = vsel %vm304, %v2396, 0
  %2401 = vmatprep.subr.mxu0 0.0
  %2402 = vmatpush1.xpose.msra.mxu0 %v2399
  %2403 = vmatprep.subr.mxu0 0.0
  %2404 = vmatpush1.xpose.msra.mxu0 0.0
  %2405 = vmatprep.subr.mxu0 0.0
  %2406 = vmatpush1.xpose.msra.mxu0 0.0
  %2407 = vmatprep.subr.mxu0 0.0
  %2408 = vmatpush1.xpose.msra.mxu0 0.0
  %2409 = vmatprep.subr.mxu0 0.0
  %2410 = vmatpush1.xpose.msra.mxu0 0.0
  %2411 = vmatprep.subr.mxu0 0.0
  %2412 = vmatpush1.xpose.msra.mxu0 0.0
  %2413 = vmatprep.subr.mxu0 0.0
  %2414 = vmatpush1.xpose.msra.mxu0 0.0
  %2415 = vmatprep.subr.mxu0 0.0
  %2416 = vmatpush1.xpose.msra.mxu0 0.0
  %2417 = vmatprep.subr.mxu0 0.0
  %2418 = vmatpush1.xpose.msra.mxu0 0.0
  %2419 = vmatprep.subr.mxu0 0.0
  %2420 = vmatpush1.xpose.msra.mxu0 0.0
  %2421 = vmatprep.subr.mxu0 0.0
  %2422 = vmatpush1.xpose.msra.mxu0 0.0
  %2423 = vmatprep.subr.mxu0 0.0
  %2424 = vmatpush1.xpose.msra.mxu0 0.0
  %2425 = vmatprep.subr.mxu0 0.0
  %2426 = vmatpush1.xpose.msra.mxu0 0.0
  %2427 = vmatprep.subr.mxu0 0.0
  %2428 = vmatpush1.xpose.msra.mxu0 0.0
  %2429 = vmatprep.subr.mxu0 0.0
  %2430 = vmatpush1.xpose.msra.mxu0 0.0
  %2431 = vmatprep.subr.mxu0 0.0
  %2432 = vmatpush1.xpose.msra.mxu0 0.0
  %2433 = vmatprep.subr.mxu0 0.0
  %2434 = vmatpush1.xpose.msra.mxu0 0.0
  %2435 = vmatprep.subr.mxu0 0.0
  %2436 = vmatpush1.xpose.msra.mxu0 0.0
  %2437 = vmatprep.subr.mxu0 0.0
  %2438 = vmatpush1.xpose.msra.mxu0 0.0
  %2439 = vmatprep.subr.mxu0 0.0
  %2440 = vmatpush1.xpose.msra.mxu0 0.0
  %2441 = vmatprep.subr.mxu0 0.0
  %2442 = vmatpush1.xpose.msra.mxu0 0.0
  %2443 = vmatprep.subr.mxu0 0.0
  %2444 = vmatpush1.xpose.msra.mxu0 0.0
  %2445 = vmatprep.subr.mxu0 0.0
  %2446 = vmatpush1.xpose.msra.mxu0 0.0
  %2447 = vmatprep.subr.mxu0 0.0
  %2448 = vmatpush1.xpose.msra.mxu0 0.0
  %2449 = vmatprep.subr.mxu0 0.0
  %2450 = vmatpush1.xpose.msra.mxu0 0.0
  %2451 = vmatprep.subr.mxu0 0.0
  %2452 = vmatpush1.xpose.msra.mxu0 0.0
  %2453 = vmatprep.subr.mxu0 0.0
  %2454 = vmatpush1.xpose.msra.mxu0 0.0
  %2455 = vmatprep.subr.mxu0 0.0
  %2456 = vmatpush1.xpose.msra.mxu0 0.0
  %2457 = vmatprep.subr.mxu0 0.0
  %2458 = vmatpush1.xpose.msra.mxu0 0.0
  %2459 = vmatprep.subr.mxu0 0.0
  %2460 = vmatpush1.xpose.msra.mxu0 0.0
  %2461 = vmatprep.subr.mxu0 0.0
  %2462 = vmatpush1.xpose.msra.mxu0 0.0
  %2463 = vmatprep.subr.mxu0 0.0
  %2464 = vmatpush1.xpose.msra.mxu0 0.0
  %2465 = vmatprep.mubr.f32.mxu0 0.0
  %2466 = vmatmul.mubr.f32.gmra.mrb[0].mxu0 %v2397
  %v2467 = vpop.f32.mrb[0].mxu0
  %v2468 = vadd.f32 0.0, %v2467
  %v2469 = vpop.f32.mrb[0].mxu0
  %2470 = vdwg.mxu0
  %2471 = vrot.lane.b32.xlu0 %v2160, 96
  %v2472 = vpop.permute.xlu0 %2471
  %v2473 = vsel %vm304, %v2160, 0
  %v2475 = vsel %vm304, %v2472, 0
  %2477 = vmatprep.subr.mxu0 0.0
  %2478 = vmatpush1.xpose.msra.mxu0 %v2475
  %2479 = vmatprep.subr.mxu0 0.0
  %2480 = vmatpush1.xpose.msra.mxu0 0.0
  %2481 = vmatprep.subr.mxu0 0.0
  %2482 = vmatpush1.xpose.msra.mxu0 0.0
  %2483 = vmatprep.subr.mxu0 0.0
  %2484 = vmatpush1.xpose.msra.mxu0 0.0
  %2485 = vmatprep.subr.mxu0 0.0
  %2486 = vmatpush1.xpose.msra.mxu0 0.0
  %2487 = vmatprep.subr.mxu0 0.0
  %2488 = vmatpush1.xpose.msra.mxu0 0.0
  %2489 = vmatprep.subr.mxu0 0.0
  %2490 = vmatpush1.xpose.msra.mxu0 0.0
  %2491 = vmatprep.subr.mxu0 0.0
  %2492 = vmatpush1.xpose.msra.mxu0 0.0
  %2493 = vmatprep.subr.mxu0 0.0
  %2494 = vmatpush1.xpose.msra.mxu0 0.0
  %2495 = vmatprep.subr.mxu0 0.0
  %2496 = vmatpush1.xpose.msra.mxu0 0.0
  %2497 = vmatprep.subr.mxu0 0.0
  %2498 = vmatpush1.xpose.msra.mxu0 0.0
  %2499 = vmatprep.subr.mxu0 0.0
  %2500 = vmatpush1.xpose.msra.mxu0 0.0
  %2501 = vmatprep.subr.mxu0 0.0
  %2502 = vmatpush1.xpose.msra.mxu0 0.0
  %2503 = vmatprep.subr.mxu0 0.0
  %2504 = vmatpush1.xpose.msra.mxu0 0.0
  %2505 = vmatprep.subr.mxu0 0.0
  %2506 = vmatpush1.xpose.msra.mxu0 0.0
  %2507 = vmatprep.subr.mxu0 0.0
  %2508 = vmatpush1.xpose.msra.mxu0 0.0
  %2509 = vmatprep.subr.mxu0 0.0
  %2510 = vmatpush1.xpose.msra.mxu0 0.0
  %2511 = vmatprep.subr.mxu0 0.0
  %2512 = vmatpush1.xpose.msra.mxu0 0.0
  %2513 = vmatprep.subr.mxu0 0.0
  %2514 = vmatpush1.xpose.msra.mxu0 0.0
  %2515 = vmatprep.subr.mxu0 0.0
  %2516 = vmatpush1.xpose.msra.mxu0 0.0
  %2517 = vmatprep.subr.mxu0 0.0
  %2518 = vmatpush1.xpose.msra.mxu0 0.0
  %2519 = vmatprep.subr.mxu0 0.0
  %2520 = vmatpush1.xpose.msra.mxu0 0.0
  %2521 = vmatprep.subr.mxu0 0.0
  %2522 = vmatpush1.xpose.msra.mxu0 0.0
  %2523 = vmatprep.subr.mxu0 0.0
  %2524 = vmatpush1.xpose.msra.mxu0 0.0
  %2525 = vmatprep.subr.mxu0 0.0
  %2526 = vmatpush1.xpose.msra.mxu0 0.0
  %2527 = vmatprep.subr.mxu0 0.0
  %2528 = vmatpush1.xpose.msra.mxu0 0.0
  %2529 = vmatprep.subr.mxu0 0.0
  %2530 = vmatpush1.xpose.msra.mxu0 0.0
  %2531 = vmatprep.subr.mxu0 0.0
  %2532 = vmatpush1.xpose.msra.mxu0 0.0
  %2533 = vmatprep.subr.mxu0 0.0
  %2534 = vmatpush1.xpose.msra.mxu0 0.0
  %2535 = vmatprep.subr.mxu0 0.0
  %2536 = vmatpush1.xpose.msra.mxu0 0.0
  %2537 = vmatprep.subr.mxu0 0.0
  %2538 = vmatpush1.xpose.msra.mxu0 0.0
  %2539 = vmatprep.subr.mxu0 0.0
  %2540 = vmatpush1.xpose.msra.mxu0 0.0
  %2541 = vmatprep.mubr.f32.mxu0 0.0
  %2542 = vmatmul.mubr.f32.gmra.mrb[0].mxu0 %v2473
  %v2543 = vpop.f32.mrb[0].mxu0
  %v2544 = vadd.f32 0.0, %v2543
  %v2545 = vpop.f32.mrb[0].mxu0
  %2546 = vdwg.mxu0
  %2547 = vrot.lane.b32.xlu0 %v2162, 96
  %v2548 = vpop.permute.xlu0 %2547
  %v2549 = vsel %vm304, %v2162, 0
  %v2551 = vsel %vm304, %v2548, 0
  %2553 = vmatprep.subr.mxu0 0.0
  %2554 = vmatpush1.xpose.msra.mxu0 %v2551
  %2555 = vmatprep.subr.mxu0 0.0
  %2556 = vmatpush1.xpose.msra.mxu0 0.0
  %2557 = vmatprep.subr.mxu0 0.0
  %2558 = vmatpush1.xpose.msra.mxu0 0.0
  %2559 = vmatprep.subr.mxu0 0.0
  %2560 = vmatpush1.xpose.msra.mxu0 0.0
  %2561 = vmatprep.subr.mxu0 0.0
  %2562 = vmatpush1.xpose.msra.mxu0 0.0
  %2563 = vmatprep.subr.mxu0 0.0
  %2564 = vmatpush1.xpose.msra.mxu0 0.0
  %2565 = vmatprep.subr.mxu0 0.0
  %2566 = vmatpush1.xpose.msra.mxu0 0.0
  %2567 = vmatprep.subr.mxu0 0.0
  %2568 = vmatpush1.xpose.msra.mxu0 0.0
  %2569 = vmatprep.subr.mxu0 0.0
  %2570 = vmatpush1.xpose.msra.mxu0 0.0
  %2571 = vmatprep.subr.mxu0 0.0
  %2572 = vmatpush1.xpose.msra.mxu0 0.0
  %2573 = vmatprep.subr.mxu0 0.0
  %2574 = vmatpush1.xpose.msra.mxu0 0.0
  %2575 = vmatprep.subr.mxu0 0.0
  %2576 = vmatpush1.xpose.msra.mxu0 0.0
  %2577 = vmatprep.subr.mxu0 0.0
  %2578 = vmatpush1.xpose.msra.mxu0 0.0
  %2579 = vmatprep.subr.mxu0 0.0
  %2580 = vmatpush1.xpose.msra.mxu0 0.0
  %2581 = vmatprep.subr.mxu0 0.0
  %2582 = vmatpush1.xpose.msra.mxu0 0.0
  %2583 = vmatprep.subr.mxu0 0.0
  %2584 = vmatpush1.xpose.msra.mxu0 0.0
  %2585 = vmatprep.subr.mxu0 0.0
  %2586 = vmatpush1.xpose.msra.mxu0 0.0
  %2587 = vmatprep.subr.mxu0 0.0
  %2588 = vmatpush1.xpose.msra.mxu0 0.0
  %2589 = vmatprep.subr.mxu0 0.0
  %2590 = vmatpush1.xpose.msra.mxu0 0.0
  %2591 = vmatprep.subr.mxu0 0.0
  %2592 = vmatpush1.xpose.msra.mxu0 0.0
  %2593 = vmatprep.subr.mxu0 0.0
  %2594 = vmatpush1.xpose.msra.mxu0 0.0
  %2595 = vmatprep.subr.mxu0 0.0
  %2596 = vmatpush1.xpose.msra.mxu0 0.0
  %2597 = vmatprep.subr.mxu0 0.0
  %2598 = vmatpush1.xpose.msra.mxu0 0.0
  %2599 = vmatprep.subr.mxu0 0.0
  %2600 = vmatpush1.xpose.msra.mxu0 0.0
  %2601 = vmatprep.subr.mxu0 0.0
  %2602 = vmatpush1.xpose.msra.mxu0 0.0
  %2603 = vmatprep.subr.mxu0 0.0
  %2604 = vmatpush1.xpose.msra.mxu0 0.0
  %2605 = vmatprep.subr.mxu0 0.0
  %2606 = vmatpush1.xpose.msra.mxu0 0.0
  %2607 = vmatprep.subr.mxu0 0.0
  %2608 = vmatpush1.xpose.msra.mxu0 0.0
  %2609 = vmatprep.subr.mxu0 0.0
  %2610 = vmatpush1.xpose.msra.mxu0 0.0
  %2611 = vmatprep.subr.mxu0 0.0
  %2612 = vmatpush1.xpose.msra.mxu0 0.0
  %2613 = vmatprep.subr.mxu0 0.0
  %2614 = vmatpush1.xpose.msra.mxu0 0.0
  %2615 = vmatprep.subr.mxu0 0.0
  %2616 = vmatpush1.xpose.msra.mxu0 0.0
  %2617 = vmatprep.mubr.f32.mxu0 0.0
  %2618 = vmatmul.mubr.f32.gmra.mrb[0].mxu0 %v2549
  %v2619 = vpop.f32.mrb[0].mxu0
  %v2620 = vadd.f32 0.0, %v2619
  %v2621 = vpop.f32.mrb[0].mxu0
  %2622 = vdwg.mxu0
  %2623 = vrot.lane.b32.xlu0 %v2164, 96
  %v2624 = vpop.permute.xlu0 %2623
  %v2625 = vsel %vm304, %v2164, 0
  %v2627 = vsel %vm304, %v2624, 0
  %2629 = vmatprep.subr.mxu0 0.0
  %2630 = vmatpush1.xpose.msra.mxu0 %v2627
  %2631 = vmatprep.subr.mxu0 0.0
  %2632 = vmatpush1.xpose.msra.mxu0 0.0
  %2633 = vmatprep.subr.mxu0 0.0
  %2634 = vmatpush1.xpose.msra.mxu0 0.0
  %2635 = vmatprep.subr.mxu0 0.0
  %2636 = vmatpush1.xpose.msra.mxu0 0.0
  %2637 = vmatprep.subr.mxu0 0.0
  %2638 = vmatpush1.xpose.msra.mxu0 0.0
  %2639 = vmatprep.subr.mxu0 0.0
  %2640 = vmatpush1.xpose.msra.mxu0 0.0
  %2641 = vmatprep.subr.mxu0 0.0
  %2642 = vmatpush1.xpose.msra.mxu0 0.0
  %2643 = vmatprep.subr.mxu0 0.0
  %2644 = vmatpush1.xpose.msra.mxu0 0.0
  %2645 = vmatprep.subr.mxu0 0.0
  %2646 = vmatpush1.xpose.msra.mxu0 0.0
  %2647 = vmatprep.subr.mxu0 0.0
  %2648 = vmatpush1.xpose.msra.mxu0 0.0
  %2649 = vmatprep.subr.mxu0 0.0
  %2650 = vmatpush1.xpose.msra.mxu0 0.0
  %2651 = vmatprep.subr.mxu0 0.0
  %2652 = vmatpush1.xpose.msra.mxu0 0.0
  %2653 = vmatprep.subr.mxu0 0.0
  %2654 = vmatpush1.xpose.msra.mxu0 0.0
  %2655 = vmatprep.subr.mxu0 0.0
  %2656 = vmatpush1.xpose.msra.mxu0 0.0
  %2657 = vmatprep.subr.mxu0 0.0
  %2658 = vmatpush1.xpose.msra.mxu0 0.0
  %2659 = vmatprep.subr.mxu0 0.0
  %2660 = vmatpush1.xpose.msra.mxu0 0.0
  %2661 = vmatprep.subr.mxu0 0.0
  %2662 = vmatpush1.xpose.msra.mxu0 0.0
  %2663 = vmatprep.subr.mxu0 0.0
  %2664 = vmatpush1.xpose.msra.mxu0 0.0
  %2665 = vmatprep.subr.mxu0 0.0
  %2666 = vmatpush1.xpose.msra.mxu0 0.0
  %2667 = vmatprep.subr.mxu0 0.0
  %2668 = vmatpush1.xpose.msra.mxu0 0.0
  %2669 = vmatprep.subr.mxu0 0.0
  %2670 = vmatpush1.xpose.msra.mxu0 0.0
  %2671 = vmatprep.subr.mxu0 0.0
  %2672 = vmatpush1.xpose.msra.mxu0 0.0
  %2673 = vmatprep.subr.mxu0 0.0
  %2674 = vmatpush1.xpose.msra.mxu0 0.0
  %2675 = vmatprep.subr.mxu0 0.0
  %2676 = vmatpush1.xpose.msra.mxu0 0.0
  %2677 = vmatprep.subr.mxu0 0.0
  %2678 = vmatpush1.xpose.msra.mxu0 0.0
  %2679 = vmatprep.subr.mxu0 0.0
  %2680 = vmatpush1.xpose.msra.mxu0 0.0
  %2681 = vmatprep.subr.mxu0 0.0
  %2682 = vmatpush1.xpose.msra.mxu0 0.0
  %2683 = vmatprep.subr.mxu0 0.0
  %2684 = vmatpush1.xpose.msra.mxu0 0.0
  %2685 = vmatprep.subr.mxu0 0.0
  %2686 = vmatpush1.xpose.msra.mxu0 0.0
  %2687 = vmatprep.subr.mxu0 0.0
  %2688 = vmatpush1.xpose.msra.mxu0 0.0
  %2689 = vmatprep.subr.mxu0 0.0
  %2690 = vmatpush1.xpose.msra.mxu0 0.0
  %2691 = vmatprep.subr.mxu0 0.0
  %2692 = vmatpush1.xpose.msra.mxu0 0.0
  %2693 = vmatprep.mubr.f32.mxu0 0.0
  %2694 = vmatmul.mubr.f32.gmra.mrb[0].mxu0 %v2625
  %v2695 = vpop.f32.mrb[0].mxu0
  %v2696 = vadd.f32 0.0, %v2695
  %v2697 = vpop.f32.mrb[0].mxu0
  %2698 = vdwg.mxu0
  %2699 = vrot.lane.b32.xlu0 %v2166, 96
  %v2700 = vpop.permute.xlu0 %2699
  %v2701 = vsel %vm304, %v2166, 0
  %v2703 = vsel %vm304, %v2700, 0
  %2705 = vmatprep.subr.mxu0 0.0
  %2706 = vmatpush1.xpose.msra.mxu0 %v2703
  %2707 = vmatprep.subr.mxu0 0.0
  %2708 = vmatpush1.xpose.msra.mxu0 0.0
  %2709 = vmatprep.subr.mxu0 0.0
  %2710 = vmatpush1.xpose.msra.mxu0 0.0
  %2711 = vmatprep.subr.mxu0 0.0
  %2712 = vmatpush1.xpose.msra.mxu0 0.0
  %2713 = vmatprep.subr.mxu0 0.0
  %2714 = vmatpush1.xpose.msra.mxu0 0.0
  %2715 = vmatprep.subr.mxu0 0.0
  %2716 = vmatpush1.xpose.msra.mxu0 0.0
  %2717 = vmatprep.subr.mxu0 0.0
  %2718 = vmatpush1.xpose.msra.mxu0 0.0
  %2719 = vmatprep.subr.mxu0 0.0
  %2720 = vmatpush1.xpose.msra.mxu0 0.0
  %2721 = vmatprep.subr.mxu0 0.0
  %2722 = vmatpush1.xpose.msra.mxu0 0.0
  %2723 = vmatprep.subr.mxu0 0.0
  %2724 = vmatpush1.xpose.msra.mxu0 0.0
  %2725 = vmatprep.subr.mxu0 0.0
  %2726 = vmatpush1.xpose.msra.mxu0 0.0
  %2727 = vmatprep.subr.mxu0 0.0
  %2728 = vmatpush1.xpose.msra.mxu0 0.0
  %2729 = vmatprep.subr.mxu0 0.0
  %2730 = vmatpush1.xpose.msra.mxu0 0.0
  %2731 = vmatprep.subr.mxu0 0.0
  %2732 = vmatpush1.xpose.msra.mxu0 0.0
  %2733 = vmatprep.subr.mxu0 0.0
  %2734 = vmatpush1.xpose.msra.mxu0 0.0
  %2735 = vmatprep.subr.mxu0 0.0
  %2736 = vmatpush1.xpose.msra.mxu0 0.0
  %2737 = vmatprep.subr.mxu0 0.0
  %2738 = vmatpush1.xpose.msra.mxu0 0.0
  %2739 = vmatprep.subr.mxu0 0.0
  %2740 = vmatpush1.xpose.msra.mxu0 0.0
  %2741 = vmatprep.subr.mxu0 0.0
  %2742 = vmatpush1.xpose.msra.mxu0 0.0
  %2743 = vmatprep.subr.mxu0 0.0
  %2744 = vmatpush1.xpose.msra.mxu0 0.0
  %2745 = vmatprep.subr.mxu0 0.0
  %2746 = vmatpush1.xpose.msra.mxu0 0.0
  %2747 = vmatprep.subr.mxu0 0.0
  %2748 = vmatpush1.xpose.msra.mxu0 0.0
  %2749 = vmatprep.subr.mxu0 0.0
  %2750 = vmatpush1.xpose.msra.mxu0 0.0
  %2751 = vmatprep.subr.mxu0 0.0
  %2752 = vmatpush1.xpose.msra.mxu0 0.0
  %2753 = vmatprep.subr.mxu0 0.0
  %2754 = vmatpush1.xpose.msra.mxu0 0.0
  %2755 = vmatprep.subr.mxu0 0.0
  %2756 = vmatpush1.xpose.msra.mxu0 0.0
  %2757 = vmatprep.subr.mxu0 0.0
  %2758 = vmatpush1.xpose.msra.mxu0 0.0
  %2759 = vmatprep.subr.mxu0 0.0
  %2760 = vmatpush1.xpose.msra.mxu0 0.0
  %2761 = vmatprep.subr.mxu0 0.0
  %2762 = vmatpush1.xpose.msra.mxu0 0.0
  %2763 = vmatprep.subr.mxu0 0.0
  %2764 = vmatpush1.xpose.msra.mxu0 0.0
  %2765 = vmatprep.subr.mxu0 0.0
  %2766 = vmatpush1.xpose.msra.mxu0 0.0
  %2767 = vmatprep.subr.mxu0 0.0
  %2768 = vmatpush1.xpose.msra.mxu0 0.0
  %2769 = vmatprep.mubr.f32.mxu0 0.0
  %2770 = vmatmul.mubr.f32.gmra.mrb[0].mxu0 %v2701
  %v2771 = vpop.f32.mrb[0].mxu0
  %v2772 = vadd.f32 0.0, %v2771
  %v2773 = vpop.f32.mrb[0].mxu0
  %2774 = vdwg.mxu0
  %v2775 = vmul.f32 %v2240, 0.35355338
  %v2776 = vmul.f32 %v2316, 0.35355338
  %v2777 = vmul.f32 %v2392, 0.35355338
  %v2778 = vmul.f32 %v2468, 0.35355338
  %v2779 = vmul.f32 %v2544, 0.35355338
  %v2780 = vmul.f32 %v2620, 0.35355338
  %v2781 = vmul.f32 %v2696, 0.35355338
  %v2782 = vmul.f32 %v2772, 0.35355338
  %v2783 = vsel %vm304, %v2775, -inf
  %2784 = vmax.xlane.f32.xlu0 %v2783
  %v2785 = vpop.xlane.xlu0 %2784
  %v2786 = vsel %vm304, %v2776, -inf
  %2787 = vmax.xlane.f32.xlu0 %v2786
  %v2788 = vpop.xlane.xlu0 %2787
  %v2789 = vsel %vm304, %v2777, -inf
  %2790 = vmax.xlane.f32.xlu0 %v2789
  %v2791 = vpop.xlane.xlu0 %2790
  %v2792 = vsel %vm304, %v2778, -inf
  %2793 = vmax.xlane.f32.xlu0 %v2792
  %v2794 = vpop.xlane.xlu0 %2793
  %v2795 = vsel %vm304, %v2779, -inf
  %2796 = vmax.xlane.f32.xlu0 %v2795
  %v2797 = vpop.xlane.xlu0 %2796
  %v2798 = vsel %vm304, %v2780, -inf
  %2799 = vmax.xlane.f32.xlu0 %v2798
  %v2800 = vpop.xlane.xlu0 %2799
  %v2801 = vsel %vm304, %v2781, -inf
  %2802 = vmax.xlane.f32.xlu0 %v2801
  %v2803 = vpop.xlane.xlu0 %2802
  %v2804 = vsel %vm304, %v2782, -inf
  %2805 = vmax.xlane.f32.xlu0 %v2804
  %v2806 = vpop.xlane.xlu0 %2805
  %v2807 = vsub.f32 %v2775, %v2785
  %v2808 = vsub.f32 %v2776, %v2788
  %v2809 = vsub.f32 %v2777, %v2791
  %v2810 = vsub.f32 %v2778, %v2794
  %v2811 = vsub.f32 %v2779, %v2797
  %v2812 = vsub.f32 %v2780, %v2800
  %v2813 = vsub.f32 %v2781, %v2803
  %v2814 = vsub.f32 %v2782, %v2806
  %v2815 = vmul.f32 %v2807, 1.442695
  %v2816 = vpow.pop %v2815
  %v2817 = vmul.f32 %v2808, 1.442695
  %v2818 = vpow.pop %v2817
  %v2819 = vmul.f32 %v2809, 1.442695
  %v2820 = vpow.pop %v2819
  %v2821 = vmul.f32 %v2810, 1.442695
  %v2822 = vpow.pop %v2821
  %v2823 = vmul.f32 %v2811, 1.442695
  %v2824 = vpow.pop %v2823
  %v2825 = vmul.f32 %v2812, 1.442695
  %v2826 = vpow.pop %v2825
  %v2827 = vmul.f32 %v2813, 1.442695
  %v2828 = vpow.pop %v2827
  %v2829 = vmul.f32 %v2814, 1.442695
  %v2830 = vpow.pop %v2829
  %v2831 = vsel %vm304, %v2816, 0.0
  %2832 = vadd.xlane.f32.xlu0 %v2831
  %v2833 = vpop.xlane.xlu0 %2832
  %v2834 = vsel %vm304, %v2818, 0.0
  %2835 = vadd.xlane.f32.xlu0 %v2834
  %v2836 = vpop.xlane.xlu0 %2835
  %v2837 = vsel %vm304, %v2820, 0.0
  %2838 = vadd.xlane.f32.xlu0 %v2837
  %v2839 = vpop.xlane.xlu0 %2838
  %v2840 = vsel %vm304, %v2822, 0.0
  %2841 = vadd.xlane.f32.xlu0 %v2840
  %v2842 = vpop.xlane.xlu0 %2841
  %v2843 = vsel %vm304, %v2824, 0.0
  %2844 = vadd.xlane.f32.xlu0 %v2843
  %v2845 = vpop.xlane.xlu0 %2844
  %v2846 = vsel %vm304, %v2826, 0.0
  %2847 = vadd.xlane.f32.xlu0 %v2846
  %v2848 = vpop.xlane.xlu0 %2847
  %v2849 = vsel %vm304, %v2828, 0.0
  %2850 = vadd.xlane.f32.xlu0 %v2849
  %v2851 = vpop.xlane.xlu0 %2850
  %v2852 = vsel %vm304, %v2830, 0.0
  %2853 = vadd.xlane.f32.xlu0 %v2852
  %v2854 = vpop.xlane.xlu0 %2853
  %v2855 = vrcp.pop %v2833
  %v2856 = vmul.f32 %v2816, %v2855
  %v2857 = vrcp.pop %v2836
  %v2858 = vmul.f32 %v2818, %v2857
  %v2859 = vrcp.pop %v2839
  %v2860 = vmul.f32 %v2820, %v2859
  %v2861 = vrcp.pop %v2842
  %v2862 = vmul.f32 %v2822, %v2861
  %v2863 = vrcp.pop %v2845
  %v2864 = vmul.f32 %v2824, %v2863
  %v2865 = vrcp.pop %v2848
  %v2866 = vmul.f32 %v2826, %v2865
  %v2867 = vrcp.pop %v2851
  %v2868 = vmul.f32 %v2828, %v2867
  %v2869 = vrcp.pop %v2854
  %v2870 = vmul.f32 %v2830, %v2869
  %2871 = vrot.lane.b32.xlu0 %v2145, 64
  %v2872 = vpop.permute.xlu0 %2871
  %v2875 = vsel %vm304, %v2856, 0
  %2877 = vmatprep.subr.mxu0 0.0
  %2878 = vmatpush1.msra.mxu0 %v2872
  %2879 = vmatprep.subr.mxu0 0.0
  %2880 = vmatpush1.msra.mxu0 0.0
  %2881 = vmatprep.subr.mxu0 0.0
  %2882 = vmatpush1.msra.mxu0 0.0
  %2883 = vmatprep.subr.mxu0 0.0
  %2884 = vmatpush1.msra.mxu0 0.0
  %2885 = vmatprep.subr.mxu0 0.0
  %2886 = vmatpush1.msra.mxu0 0.0
  %2887 = vmatprep.subr.mxu0 0.0
  %2888 = vmatpush1.msra.mxu0 0.0
  %2889 = vmatprep.subr.mxu0 0.0
  %2890 = vmatpush1.msra.mxu0 0.0
  %2891 = vmatprep.subr.mxu0 0.0
  %2892 = vmatpush1.msra.mxu0 0.0
  %2893 = vmatprep.subr.mxu0 0.0
  %2894 = vmatpush1.msra.mxu0 0.0
  %2895 = vmatprep.subr.mxu0 0.0
  %2896 = vmatpush1.msra.mxu0 0.0
  %2897 = vmatprep.subr.mxu0 0.0
  %2898 = vmatpush1.msra.mxu0 0.0
  %2899 = vmatprep.subr.mxu0 0.0
  %2900 = vmatpush1.msra.mxu0 0.0
  %2901 = vmatprep.subr.mxu0 0.0
  %2902 = vmatpush1.msra.mxu0 0.0
  %2903 = vmatprep.subr.mxu0 0.0
  %2904 = vmatpush1.msra.mxu0 0.0
  %2905 = vmatprep.subr.mxu0 0.0
  %2906 = vmatpush1.msra.mxu0 0.0
  %2907 = vmatprep.subr.mxu0 0.0
  %2908 = vmatpush1.msra.mxu0 0.0
  %2909 = vmatprep.subr.mxu0 0.0
  %2910 = vmatpush1.msra.mxu0 0.0
  %2911 = vmatprep.subr.mxu0 0.0
  %2912 = vmatpush1.msra.mxu0 0.0
  %2913 = vmatprep.subr.mxu0 0.0
  %2914 = vmatpush1.msra.mxu0 0.0
  %2915 = vmatprep.subr.mxu0 0.0
  %2916 = vmatpush1.msra.mxu0 0.0
  %2917 = vmatprep.subr.mxu0 0.0
  %2918 = vmatpush1.msra.mxu0 0.0
  %2919 = vmatprep.subr.mxu0 0.0
  %2920 = vmatpush1.msra.mxu0 0.0
  %2921 = vmatprep.subr.mxu0 0.0
  %2922 = vmatpush1.msra.mxu0 0.0
  %2923 = vmatprep.subr.mxu0 0.0
  %2924 = vmatpush1.msra.mxu0 0.0
  %2925 = vmatprep.subr.mxu0 0.0
  %2926 = vmatpush1.msra.mxu0 0.0
  %2927 = vmatprep.subr.mxu0 0.0
  %2928 = vmatpush1.msra.mxu0 0.0
  %2929 = vmatprep.subr.mxu0 0.0
  %2930 = vmatpush1.msra.mxu0 0.0
  %2931 = vmatprep.subr.mxu0 0.0
  %2932 = vmatpush1.msra.mxu0 0.0
  %2933 = vmatprep.subr.mxu0 0.0
  %2934 = vmatpush1.msra.mxu0 0.0
  %2935 = vmatprep.subr.mxu0 0.0
  %2936 = vmatpush1.msra.mxu0 0.0
  %2937 = vmatprep.subr.mxu0 0.0
  %2938 = vmatpush1.msra.mxu0 0.0
  %2939 = vmatprep.subr.mxu0 0.0
  %2940 = vmatpush1.msra.mxu0 0.0
  %2941 = vmatprep.mubr.f32.mxu0 0.0
  %2942 = vmatmul.mubr.f32.gmra.mrb[0].mxu0 %v2875
  %v2943 = vpop.f32.mrb[0].mxu0
  %v2944 = vadd.f32 0.0, %v2943
  %v2945 = vpop.f32.mrb[0].mxu0
  %2946 = vdwg.mxu0
  %2947 = vrot.lane.b32.xlu0 %v2150, 64
  %v2948 = vpop.permute.xlu0 %2947
  %v2951 = vsel %vm304, %v2858, 0
  %2953 = vmatprep.subr.mxu0 0.0
  %2954 = vmatpush1.msra.mxu0 %v2948
  %2955 = vmatprep.subr.mxu0 0.0
  %2956 = vmatpush1.msra.mxu0 0.0
  %2957 = vmatprep.subr.mxu0 0.0
  %2958 = vmatpush1.msra.mxu0 0.0
  %2959 = vmatprep.subr.mxu0 0.0
  %2960 = vmatpush1.msra.mxu0 0.0
  %2961 = vmatprep.subr.mxu0 0.0
  %2962 = vmatpush1.msra.mxu0 0.0
  %2963 = vmatprep.subr.mxu0 0.0
  %2964 = vmatpush1.msra.mxu0 0.0
  %2965 = vmatprep.subr.mxu0 0.0
  %2966 = vmatpush1.msra.mxu0 0.0
  %2967 = vmatprep.subr.mxu0 0.0
  %2968 = vmatpush1.msra.mxu0 0.0
  %2969 = vmatprep.subr.mxu0 0.0
  %2970 = vmatpush1.msra.mxu0 0.0
  %2971 = vmatprep.subr.mxu0 0.0
  %2972 = vmatpush1.msra.mxu0 0.0
  %2973 = vmatprep.subr.mxu0 0.0
  %2974 = vmatpush1.msra.mxu0 0.0
  %2975 = vmatprep.subr.mxu0 0.0
  %2976 = vmatpush1.msra.mxu0 0.0
  %2977 = vmatprep.subr.mxu0 0.0
  %2978 = vmatpush1.msra.mxu0 0.0
  %2979 = vmatprep.subr.mxu0 0.0
  %2980 = vmatpush1.msra.mxu0 0.0
  %2981 = vmatprep.subr.mxu0 0.0
  %2982 = vmatpush1.msra.mxu0 0.0
  %2983 = vmatprep.subr.mxu0 0.0
  %2984 = vmatpush1.msra.mxu0 0.0
  %2985 = vmatprep.subr.mxu0 0.0
  %2986 = vmatpush1.msra.mxu0 0.0
  %2987 = vmatprep.subr.mxu0 0.0
  %2988 = vmatpush1.msra.mxu0 0.0
  %2989 = vmatprep.subr.mxu0 0.0
  %2990 = vmatpush1.msra.mxu0 0.0
  %2991 = vmatprep.subr.mxu0 0.0
  %2992 = vmatpush1.msra.mxu0 0.0
  %2993 = vmatprep.subr.mxu0 0.0
  %2994 = vmatpush1.msra.mxu0 0.0
  %2995 = vmatprep.subr.mxu0 0.0
  %2996 = vmatpush1.msra.mxu0 0.0
  %2997 = vmatprep.subr.mxu0 0.0
  %2998 = vmatpush1.msra.mxu0 0.0
  %2999 = vmatprep.subr.mxu0 0.0
  %3000 = vmatpush1.msra.mxu0 0.0
  %3001 = vmatprep.subr.mxu0 0.0
  %3002 = vmatpush1.msra.mxu0 0.0
  %3003 = vmatprep.subr.mxu0 0.0
  %3004 = vmatpush1.msra.mxu0 0.0
  %3005 = vmatprep.subr.mxu0 0.0
  %3006 = vmatpush1.msra.mxu0 0.0
  %3007 = vmatprep.subr.mxu0 0.0
  %3008 = vmatpush1.msra.mxu0 0.0
  %3009 = vmatprep.subr.mxu0 0.0
  %3010 = vmatpush1.msra.mxu0 0.0
  %3011 = vmatprep.subr.mxu0 0.0
  %3012 = vmatpush1.msra.mxu0 0.0
  %3013 = vmatprep.subr.mxu0 0.0
  %3014 = vmatpush1.msra.mxu0 0.0
  %3015 = vmatprep.subr.mxu0 0.0
  %3016 = vmatpush1.msra.mxu0 0.0
  %3017 = vmatprep.mubr.f32.mxu0 0.0
  %3018 = vmatmul.mubr.f32.gmra.mrb[0].mxu0 %v2951
  %v3019 = vpop.f32.mrb[0].mxu0
  %v3020 = vadd.f32 0.0, %v3019
  %v3021 = vpop.f32.mrb[0].mxu0
  %3022 = vdwg.mxu0
  %3023 = vrot.lane.b32.xlu0 %v2156, 64
  %v3024 = vpop.permute.xlu0 %3023
  %v3027 = vsel %vm304, %v2860, 0
  %3029 = vmatprep.subr.mxu0 0.0
  %3030 = vmatpush1.msra.mxu0 %v3024
  %3031 = vmatprep.subr.mxu0 0.0
  %3032 = vmatpush1.msra.mxu0 0.0
  %3033 = vmatprep.subr.mxu0 0.0
  %3034 = vmatpush1.msra.mxu0 0.0
  %3035 = vmatprep.subr.mxu0 0.0
  %3036 = vmatpush1.msra.mxu0 0.0
  %3037 = vmatprep.subr.mxu0 0.0
  %3038 = vmatpush1.msra.mxu0 0.0
  %3039 = vmatprep.subr.mxu0 0.0
  %3040 = vmatpush1.msra.mxu0 0.0
  %3041 = vmatprep.subr.mxu0 0.0
  %3042 = vmatpush1.msra.mxu0 0.0
  %3043 = vmatprep.subr.mxu0 0.0
  %3044 = vmatpush1.msra.mxu0 0.0
  %3045 = vmatprep.subr.mxu0 0.0
  %3046 = vmatpush1.msra.mxu0 0.0
  %3047 = vmatprep.subr.mxu0 0.0
  %3048 = vmatpush1.msra.mxu0 0.0
  %3049 = vmatprep.subr.mxu0 0.0
  %3050 = vmatpush1.msra.mxu0 0.0
  %3051 = vmatprep.subr.mxu0 0.0
  %3052 = vmatpush1.msra.mxu0 0.0
  %3053 = vmatprep.subr.mxu0 0.0
  %3054 = vmatpush1.msra.mxu0 0.0
  %3055 = vmatprep.subr.mxu0 0.0
  %3056 = vmatpush1.msra.mxu0 0.0
  %3057 = vmatprep.subr.mxu0 0.0
  %3058 = vmatpush1.msra.mxu0 0.0
  %3059 = vmatprep.subr.mxu0 0.0
  %3060 = vmatpush1.msra.mxu0 0.0
  %3061 = vmatprep.subr.mxu0 0.0
  %3062 = vmatpush1.msra.mxu0 0.0
  %3063 = vmatprep.subr.mxu0 0.0
  %3064 = vmatpush1.msra.mxu0 0.0
  %3065 = vmatprep.subr.mxu0 0.0
  %3066 = vmatpush1.msra.mxu0 0.0
  %3067 = vmatprep.subr.mxu0 0.0
  %3068 = vmatpush1.msra.mxu0 0.0
  %3069 = vmatprep.subr.mxu0 0.0
  %3070 = vmatpush1.msra.mxu0 0.0
  %3071 = vmatprep.subr.mxu0 0.0
  %3072 = vmatpush1.msra.mxu0 0.0
  %3073 = vmatprep.subr.mxu0 0.0
  %3074 = vmatpush1.msra.mxu0 0.0
  %3075 = vmatprep.subr.mxu0 0.0
  %3076 = vmatpush1.msra.mxu0 0.0
  %3077 = vmatprep.subr.mxu0 0.0
  %3078 = vmatpush1.msra.mxu0 0.0
  %3079 = vmatprep.subr.mxu0 0.0
  %3080 = vmatpush1.msra.mxu0 0.0
  %3081 = vmatprep.subr.mxu0 0.0
  %3082 = vmatpush1.msra.mxu0 0.0
  %3083 = vmatprep.subr.mxu0 0.0
  %3084 = vmatpush1.msra.mxu0 0.0
  %3085 = vmatprep.subr.mxu0 0.0
  %3086 = vmatpush1.msra.mxu0 0.0
  %3087 = vmatprep.subr.mxu0 0.0
  %3088 = vmatpush1.msra.mxu0 0.0
  %3089 = vmatprep.subr.mxu0 0.0
  %3090 = vmatpush1.msra.mxu0 0.0
  %3091 = vmatprep.subr.mxu0 0.0
  %3092 = vmatpush1.msra.mxu0 0.0
  %3093 = vmatprep.mubr.f32.mxu0 0.0
  %3094 = vmatmul.mubr.f32.gmra.mrb[0].mxu0 %v3027
  %v3095 = vpop.f32.mrb[0].mxu0
  %v3096 = vadd.f32 0.0, %v3095
  %v3097 = vpop.f32.mrb[0].mxu0
  %3098 = vdwg.mxu0
  %3099 = vrot.lane.b32.xlu0 %v2158, 64
  %v3100 = vpop.permute.xlu0 %3099
  %v3103 = vsel %vm304, %v2862, 0
  %3105 = vmatprep.subr.mxu0 0.0
  %3106 = vmatpush1.msra.mxu0 %v3100
  %3107 = vmatprep.subr.mxu0 0.0
  %3108 = vmatpush1.msra.mxu0 0.0
  %3109 = vmatprep.subr.mxu0 0.0
  %3110 = vmatpush1.msra.mxu0 0.0
  %3111 = vmatprep.subr.mxu0 0.0
  %3112 = vmatpush1.msra.mxu0 0.0
  %3113 = vmatprep.subr.mxu0 0.0
  %3114 = vmatpush1.msra.mxu0 0.0
  %3115 = vmatprep.subr.mxu0 0.0
  %3116 = vmatpush1.msra.mxu0 0.0
  %3117 = vmatprep.subr.mxu0 0.0
  %3118 = vmatpush1.msra.mxu0 0.0
  %3119 = vmatprep.subr.mxu0 0.0
  %3120 = vmatpush1.msra.mxu0 0.0
  %3121 = vmatprep.subr.mxu0 0.0
  %3122 = vmatpush1.msra.mxu0 0.0
  %3123 = vmatprep.subr.mxu0 0.0
  %3124 = vmatpush1.msra.mxu0 0.0
  %3125 = vmatprep.subr.mxu0 0.0
  %3126 = vmatpush1.msra.mxu0 0.0
  %3127 = vmatprep.subr.mxu0 0.0
  %3128 = vmatpush1.msra.mxu0 0.0
  %3129 = vmatprep.subr.mxu0 0.0
  %3130 = vmatpush1.msra.mxu0 0.0
  %3131 = vmatprep.subr.mxu0 0.0
  %3132 = vmatpush1.msra.mxu0 0.0
  %3133 = vmatprep.subr.mxu0 0.0
  %3134 = vmatpush1.msra.mxu0 0.0
  %3135 = vmatprep.subr.mxu0 0.0
  %3136 = vmatpush1.msra.mxu0 0.0
  %3137 = vmatprep.subr.mxu0 0.0
  %3138 = vmatpush1.msra.mxu0 0.0
  %3139 = vmatprep.subr.mxu0 0.0
  %3140 = vmatpush1.msra.mxu0 0.0
  %3141 = vmatprep.subr.mxu0 0.0
  %3142 = vmatpush1.msra.mxu0 0.0
  %3143 = vmatprep.subr.mxu0 0.0
  %3144 = vmatpush1.msra.mxu0 0.0
  %3145 = vmatprep.subr.mxu0 0.0
  %3146 = vmatpush1.msra.mxu0 0.0
  %3147 = vmatprep.subr.mxu0 0.0
  %3148 = vmatpush1.msra.mxu0 0.0
  %3149 = vmatprep.subr.mxu0 0.0
  %3150 = vmatpush1.msra.mxu0 0.0
  %3151 = vmatprep.subr.mxu0 0.0
  %3152 = vmatpush1.msra.mxu0 0.0
  %3153 = vmatprep.subr.mxu0 0.0
  %3154 = vmatpush1.msra.mxu0 0.0
  %3155 = vmatprep.subr.mxu0 0.0
  %3156 = vmatpush1.msra.mxu0 0.0
  %3157 = vmatprep.subr.mxu0 0.0
  %3158 = vmatpush1.msra.mxu0 0.0
  %3159 = vmatprep.subr.mxu0 0.0
  %3160 = vmatpush1.msra.mxu0 0.0
  %3161 = vmatprep.subr.mxu0 0.0
  %3162 = vmatpush1.msra.mxu0 0.0
  %3163 = vmatprep.subr.mxu0 0.0
  %3164 = vmatpush1.msra.mxu0 0.0
  %3165 = vmatprep.subr.mxu0 0.0
  %3166 = vmatpush1.msra.mxu0 0.0
  %3167 = vmatprep.subr.mxu0 0.0
  %3168 = vmatpush1.msra.mxu0 0.0
  %3169 = vmatprep.mubr.f32.mxu0 0.0
  %3170 = vmatmul.mubr.f32.gmra.mrb[0].mxu0 %v3103
  %v3171 = vpop.f32.mrb[0].mxu0
  %v3172 = vadd.f32 0.0, %v3171
  %v3173 = vpop.f32.mrb[0].mxu0
  %3174 = vdwg.mxu0
  %3175 = vrot.lane.b32.xlu0 %v2160, 64
  %v3176 = vpop.permute.xlu0 %3175
  %v3179 = vsel %vm304, %v2864, 0
  %3181 = vmatprep.subr.mxu0 0.0
  %3182 = vmatpush1.msra.mxu0 %v3176
  %3183 = vmatprep.subr.mxu0 0.0
  %3184 = vmatpush1.msra.mxu0 0.0
  %3185 = vmatprep.subr.mxu0 0.0
  %3186 = vmatpush1.msra.mxu0 0.0
  %3187 = vmatprep.subr.mxu0 0.0
  %3188 = vmatpush1.msra.mxu0 0.0
  %3189 = vmatprep.subr.mxu0 0.0
  %3190 = vmatpush1.msra.mxu0 0.0
  %3191 = vmatprep.subr.mxu0 0.0
  %3192 = vmatpush1.msra.mxu0 0.0
  %3193 = vmatprep.subr.mxu0 0.0
  %3194 = vmatpush1.msra.mxu0 0.0
  %3195 = vmatprep.subr.mxu0 0.0
  %3196 = vmatpush1.msra.mxu0 0.0
  %3197 = vmatprep.subr.mxu0 0.0
  %3198 = vmatpush1.msra.mxu0 0.0
  %3199 = vmatprep.subr.mxu0 0.0
  %3200 = vmatpush1.msra.mxu0 0.0
  %3201 = vmatprep.subr.mxu0 0.0
  %3202 = vmatpush1.msra.mxu0 0.0
  %3203 = vmatprep.subr.mxu0 0.0
  %3204 = vmatpush1.msra.mxu0 0.0
  %3205 = vmatprep.subr.mxu0 0.0
  %3206 = vmatpush1.msra.mxu0 0.0
  %3207 = vmatprep.subr.mxu0 0.0
  %3208 = vmatpush1.msra.mxu0 0.0
  %3209 = vmatprep.subr.mxu0 0.0
  %3210 = vmatpush1.msra.mxu0 0.0
  %3211 = vmatprep.subr.mxu0 0.0
  %3212 = vmatpush1.msra.mxu0 0.0
  %3213 = vmatprep.subr.mxu0 0.0
  %3214 = vmatpush1.msra.mxu0 0.0
  %3215 = vmatprep.subr.mxu0 0.0
  %3216 = vmatpush1.msra.mxu0 0.0
  %3217 = vmatprep.subr.mxu0 0.0
  %3218 = vmatpush1.msra.mxu0 0.0
  %3219 = vmatprep.subr.mxu0 0.0
  %3220 = vmatpush1.msra.mxu0 0.0
  %3221 = vmatprep.subr.mxu0 0.0
  %3222 = vmatpush1.msra.mxu0 0.0
  %3223 = vmatprep.subr.mxu0 0.0
  %3224 = vmatpush1.msra.mxu0 0.0
  %3225 = vmatprep.subr.mxu0 0.0
  %3226 = vmatpush1.msra.mxu0 0.0
  %3227 = vmatprep.subr.mxu0 0.0
  %3228 = vmatpush1.msra.mxu0 0.0
  %3229 = vmatprep.subr.mxu0 0.0
  %3230 = vmatpush1.msra.mxu0 0.0
  %3231 = vmatprep.subr.mxu0 0.0
  %3232 = vmatpush1.msra.mxu0 0.0
  %3233 = vmatprep.subr.mxu0 0.0
  %3234 = vmatpush1.msra.mxu0 0.0
  %3235 = vmatprep.subr.mxu0 0.0
  %3236 = vmatpush1.msra.mxu0 0.0
  %3237 = vmatprep.subr.mxu0 0.0
  %3238 = vmatpush1.msra.mxu0 0.0
  %3239 = vmatprep.subr.mxu0 0.0
  %3240 = vmatpush1.msra.mxu0 0.0
  %3241 = vmatprep.subr.mxu0 0.0
  %3242 = vmatpush1.msra.mxu0 0.0
  %3243 = vmatprep.subr.mxu0 0.0
  %3244 = vmatpush1.msra.mxu0 0.0
  %3245 = vmatprep.mubr.f32.mxu0 0.0
  %3246 = vmatmul.mubr.f32.gmra.mrb[0].mxu0 %v3179
  %v3247 = vpop.f32.mrb[0].mxu0
  %v3248 = vadd.f32 0.0, %v3247
  %v3249 = vpop.f32.mrb[0].mxu0
  %3250 = vdwg.mxu0
  %3251 = vrot.lane.b32.xlu0 %v2162, 64
  %v3252 = vpop.permute.xlu0 %3251
  %v3255 = vsel %vm304, %v2866, 0
  %3257 = vmatprep.subr.mxu0 0.0
  %3258 = vmatpush1.msra.mxu0 %v3252
  %3259 = vmatprep.subr.mxu0 0.0
  %3260 = vmatpush1.msra.mxu0 0.0
  %3261 = vmatprep.subr.mxu0 0.0
  %3262 = vmatpush1.msra.mxu0 0.0
  %3263 = vmatprep.subr.mxu0 0.0
  %3264 = vmatpush1.msra.mxu0 0.0
  %3265 = vmatprep.subr.mxu0 0.0
  %3266 = vmatpush1.msra.mxu0 0.0
  %3267 = vmatprep.subr.mxu0 0.0
  %3268 = vmatpush1.msra.mxu0 0.0
  %3269 = vmatprep.subr.mxu0 0.0
  %3270 = vmatpush1.msra.mxu0 0.0
  %3271 = vmatprep.subr.mxu0 0.0
  %3272 = vmatpush1.msra.mxu0 0.0
  %3273 = vmatprep.subr.mxu0 0.0
  %3274 = vmatpush1.msra.mxu0 0.0
  %3275 = vmatprep.subr.mxu0 0.0
  %3276 = vmatpush1.msra.mxu0 0.0
  %3277 = vmatprep.subr.mxu0 0.0
  %3278 = vmatpush1.msra.mxu0 0.0
  %3279 = vmatprep.subr.mxu0 0.0
  %3280 = vmatpush1.msra.mxu0 0.0
  %3281 = vmatprep.subr.mxu0 0.0
  %3282 = vmatpush1.msra.mxu0 0.0
  %3283 = vmatprep.subr.mxu0 0.0
  %3284 = vmatpush1.msra.mxu0 0.0
  %3285 = vmatprep.subr.mxu0 0.0
  %3286 = vmatpush1.msra.mxu0 0.0
  %3287 = vmatprep.subr.mxu0 0.0
  %3288 = vmatpush1.msra.mxu0 0.0
  %3289 = vmatprep.subr.mxu0 0.0
  %3290 = vmatpush1.msra.mxu0 0.0
  %3291 = vmatprep.subr.mxu0 0.0
  %3292 = vmatpush1.msra.mxu0 0.0
  %3293 = vmatprep.subr.mxu0 0.0
  %3294 = vmatpush1.msra.mxu0 0.0
  %3295 = vmatprep.subr.mxu0 0.0
  %3296 = vmatpush1.msra.mxu0 0.0
  %3297 = vmatprep.subr.mxu0 0.0
  %3298 = vmatpush1.msra.mxu0 0.0
  %3299 = vmatprep.subr.mxu0 0.0
  %3300 = vmatpush1.msra.mxu0 0.0
  %3301 = vmatprep.subr.mxu0 0.0
  %3302 = vmatpush1.msra.mxu0 0.0
  %3303 = vmatprep.subr.mxu0 0.0
  %3304 = vmatpush1.msra.mxu0 0.0
  %3305 = vmatprep.subr.mxu0 0.0
  %3306 = vmatpush1.msra.mxu0 0.0
  %3307 = vmatprep.subr.mxu0 0.0
  %3308 = vmatpush1.msra.mxu0 0.0
  %3309 = vmatprep.subr.mxu0 0.0
  %3310 = vmatpush1.msra.mxu0 0.0
  %3311 = vmatprep.subr.mxu0 0.0
  %3312 = vmatpush1.msra.mxu0 0.0
  %3313 = vmatprep.subr.mxu0 0.0
  %3314 = vmatpush1.msra.mxu0 0.0
  %3315 = vmatprep.subr.mxu0 0.0
  %3316 = vmatpush1.msra.mxu0 0.0
  %3317 = vmatprep.subr.mxu0 0.0
  %3318 = vmatpush1.msra.mxu0 0.0
  %3319 = vmatprep.subr.mxu0 0.0
  %3320 = vmatpush1.msra.mxu0 0.0
  %3321 = vmatprep.mubr.f32.mxu0 0.0
  %3322 = vmatmul.mubr.f32.gmra.mrb[0].mxu0 %v3255
  %v3323 = vpop.f32.mrb[0].mxu0
  %v3324 = vadd.f32 0.0, %v3323
  %v3325 = vpop.f32.mrb[0].mxu0
  %3326 = vdwg.mxu0
  %3327 = vrot.lane.b32.xlu0 %v2164, 64
  %v3328 = vpop.permute.xlu0 %3327
  %v3331 = vsel %vm304, %v2868, 0
  %3333 = vmatprep.subr.mxu0 0.0
  %3334 = vmatpush1.msra.mxu0 %v3328
  %3335 = vmatprep.subr.mxu0 0.0
  %3336 = vmatpush1.msra.mxu0 0.0
  %3337 = vmatprep.subr.mxu0 0.0
  %3338 = vmatpush1.msra.mxu0 0.0
  %3339 = vmatprep.subr.mxu0 0.0
  %3340 = vmatpush1.msra.mxu0 0.0
  %3341 = vmatprep.subr.mxu0 0.0
  %3342 = vmatpush1.msra.mxu0 0.0
  %3343 = vmatprep.subr.mxu0 0.0
  %3344 = vmatpush1.msra.mxu0 0.0
  %3345 = vmatprep.subr.mxu0 0.0
  %3346 = vmatpush1.msra.mxu0 0.0
  %3347 = vmatprep.subr.mxu0 0.0
  %3348 = vmatpush1.msra.mxu0 0.0
  %3349 = vmatprep.subr.mxu0 0.0
  %3350 = vmatpush1.msra.mxu0 0.0
  %3351 = vmatprep.subr.mxu0 0.0
  %3352 = vmatpush1.msra.mxu0 0.0
  %3353 = vmatprep.subr.mxu0 0.0
  %3354 = vmatpush1.msra.mxu0 0.0
  %3355 = vmatprep.subr.mxu0 0.0
  %3356 = vmatpush1.msra.mxu0 0.0
  %3357 = vmatprep.subr.mxu0 0.0
  %3358 = vmatpush1.msra.mxu0 0.0
  %3359 = vmatprep.subr.mxu0 0.0
  %3360 = vmatpush1.msra.mxu0 0.0
  %3361 = vmatprep.subr.mxu0 0.0
  %3362 = vmatpush1.msra.mxu0 0.0
  %3363 = vmatprep.subr.mxu0 0.0
  %3364 = vmatpush1.msra.mxu0 0.0
  %3365 = vmatprep.subr.mxu0 0.0
  %3366 = vmatpush1.msra.mxu0 0.0
  %3367 = vmatprep.subr.mxu0 0.0
  %3368 = vmatpush1.msra.mxu0 0.0
  %3369 = vmatprep.subr.mxu0 0.0
  %3370 = vmatpush1.msra.mxu0 0.0
  %3371 = vmatprep.subr.mxu0 0.0
  %3372 = vmatpush1.msra.mxu0 0.0
  %3373 = vmatprep.subr.mxu0 0.0
  %3374 = vmatpush1.msra.mxu0 0.0
  %3375 = vmatprep.subr.mxu0 0.0
  %3376 = vmatpush1.msra.mxu0 0.0
  %3377 = vmatprep.subr.mxu0 0.0
  %3378 = vmatpush1.msra.mxu0 0.0
  %3379 = vmatprep.subr.mxu0 0.0
  %3380 = vmatpush1.msra.mxu0 0.0
  %3381 = vmatprep.subr.mxu0 0.0
  %3382 = vmatpush1.msra.mxu0 0.0
  %3383 = vmatprep.subr.mxu0 0.0
  %3384 = vmatpush1.msra.mxu0 0.0
  %3385 = vmatprep.subr.mxu0 0.0
  %3386 = vmatpush1.msra.mxu0 0.0
  %3387 = vmatprep.subr.mxu0 0.0
  %3388 = vmatpush1.msra.mxu0 0.0
  %3389 = vmatprep.subr.mxu0 0.0
  %3390 = vmatpush1.msra.mxu0 0.0
  %3391 = vmatprep.subr.mxu0 0.0
  %3392 = vmatpush1.msra.mxu0 0.0
  %3393 = vmatprep.subr.mxu0 0.0
  %3394 = vmatpush1.msra.mxu0 0.0
  %3395 = vmatprep.subr.mxu0 0.0
  %3396 = vmatpush1.msra.mxu0 0.0
  %3397 = vmatprep.mubr.f32.mxu0 0.0
  %3398 = vmatmul.mubr.f32.gmra.mrb[0].mxu0 %v3331
  %v3399 = vpop.f32.mrb[0].mxu0
  %v3400 = vadd.f32 0.0, %v3399
  %v3401 = vpop.f32.mrb[0].mxu0
  %3402 = vdwg.mxu0
  %3403 = vrot.lane.b32.xlu0 %v2166, 64
  %v3404 = vpop.permute.xlu0 %3403
  %v3407 = vsel %vm304, %v2870, 0
  %3409 = vmatprep.subr.mxu0 0.0
  %3410 = vmatpush1.msra.mxu0 %v3404
  %3411 = vmatprep.subr.mxu0 0.0
  %3412 = vmatpush1.msra.mxu0 0.0
  %3413 = vmatprep.subr.mxu0 0.0
  %3414 = vmatpush1.msra.mxu0 0.0
  %3415 = vmatprep.subr.mxu0 0.0
  %3416 = vmatpush1.msra.mxu0 0.0
  %3417 = vmatprep.subr.mxu0 0.0
  %3418 = vmatpush1.msra.mxu0 0.0
  %3419 = vmatprep.subr.mxu0 0.0
  %3420 = vmatpush1.msra.mxu0 0.0
  %3421 = vmatprep.subr.mxu0 0.0
  %3422 = vmatpush1.msra.mxu0 0.0
  %3423 = vmatprep.subr.mxu0 0.0
  %3424 = vmatpush1.msra.mxu0 0.0
  %3425 = vmatprep.subr.mxu0 0.0
  %3426 = vmatpush1.msra.mxu0 0.0
  %3427 = vmatprep.subr.mxu0 0.0
  %3428 = vmatpush1.msra.mxu0 0.0
  %3429 = vmatprep.subr.mxu0 0.0
  %3430 = vmatpush1.msra.mxu0 0.0
  %3431 = vmatprep.subr.mxu0 0.0
  %3432 = vmatpush1.msra.mxu0 0.0
  %3433 = vmatprep.subr.mxu0 0.0
  %3434 = vmatpush1.msra.mxu0 0.0
  %3435 = vmatprep.subr.mxu0 0.0
  %3436 = vmatpush1.msra.mxu0 0.0
  %3437 = vmatprep.subr.mxu0 0.0
  %3438 = vmatpush1.msra.mxu0 0.0
  %3439 = vmatprep.subr.mxu0 0.0
  %3440 = vmatpush1.msra.mxu0 0.0
  %3441 = vmatprep.subr.mxu0 0.0
  %3442 = vmatpush1.msra.mxu0 0.0
  %3443 = vmatprep.subr.mxu0 0.0
  %3444 = vmatpush1.msra.mxu0 0.0
  %3445 = vmatprep.subr.mxu0 0.0
  %3446 = vmatpush1.msra.mxu0 0.0
  %3447 = vmatprep.subr.mxu0 0.0
  %3448 = vmatpush1.msra.mxu0 0.0
  %3449 = vmatprep.subr.mxu0 0.0
  %3450 = vmatpush1.msra.mxu0 0.0
  %3451 = vmatprep.subr.mxu0 0.0
  %3452 = vmatpush1.msra.mxu0 0.0
  %3453 = vmatprep.subr.mxu0 0.0
  %3454 = vmatpush1.msra.mxu0 0.0
  %3455 = vmatprep.subr.mxu0 0.0
  %3456 = vmatpush1.msra.mxu0 0.0
  %3457 = vmatprep.subr.mxu0 0.0
  %3458 = vmatpush1.msra.mxu0 0.0
  %3459 = vmatprep.subr.mxu0 0.0
  %3460 = vmatpush1.msra.mxu0 0.0
  %3461 = vmatprep.subr.mxu0 0.0
  %3462 = vmatpush1.msra.mxu0 0.0
  %3463 = vmatprep.subr.mxu0 0.0
  %3464 = vmatpush1.msra.mxu0 0.0
  %3465 = vmatprep.subr.mxu0 0.0
  %3466 = vmatpush1.msra.mxu0 0.0
  %3467 = vmatprep.subr.mxu0 0.0
  %3468 = vmatpush1.msra.mxu0 0.0
  %3469 = vmatprep.subr.mxu0 0.0
  %3470 = vmatpush1.msra.mxu0 0.0
  %3471 = vmatprep.subr.mxu0 0.0
  %3472 = vmatpush1.msra.mxu0 0.0
  %3473 = vmatprep.mubr.f32.mxu0 0.0
  %3474 = vmatmul.mubr.f32.gmra.mrb[0].mxu0 %v3407
  %v3475 = vpop.f32.mrb[0].mxu0
  %v3476 = vadd.f32 0.0, %v3475
  %v3477 = vpop.f32.mrb[0].mxu0
  %3478 = vdwg.mxu0
  %3481 = vrot.lane.b32.xlu0 %v3096, 8
  %v3482 = vpop.permute.xlu0 %3481
  %3483 = vrot.lane.b32.xlu0 %v3172, 8
  %v3484 = vpop.permute.xlu0 %3483
  %3489 = vrot.lane.b32.xlu0 %v3248, 16
  %v3490 = vpop.permute.xlu0 %3489
  %3491 = vrot.lane.b32.xlu0 %v3324, 16
  %v3492 = vpop.permute.xlu0 %3491
  %3497 = vrot.lane.b32.xlu0 %v3400, 24
  %v3498 = vpop.permute.xlu0 %3497
  %3499 = vrot.lane.b32.xlu0 %v3476, 24
  %v3500 = vpop.permute.xlu0 %3499
  %v3503 = vsel %vm304, %v2944, %v3482
  %v3504 = vsel %vm304, %v3020, %v3484
  %v3505 = vsel %vm1641, %v3503, %v3490
  %v3506 = vsel %vm1641, %v3504, %v3492
  %v3507 = vsel %vm1644, %v3505, %v3498
  %v3508 = vsel %vm1644, %v3506, %v3500
  %v3509 = vld [vmem:[%s5 + $0xb] sm:$0x1]
  %v3510 = vlaneseq
  %v3511 = vshrl.u32 %v3510, 7
  %v3512 = vsub.s32 0, %v3511
  %v3513 = vrot.slane %v3509, %v3512
  %v3515 = vsel %vm134, %v3507, 0
  %v3518 = vsel %vm134, %v3508, 0
  %3520 = vmatprep.subr.mxu0 0.0
  %3521 = vmatpush1.msra.mxu0 %v2042
  %3522 = vmatprep.subr.mxu0 0.0
  %3523 = vmatpush1.msra.mxu0 %v2043
  %3524 = vmatprep.subr.mxu0 0.0
  %3525 = vmatpush1.msra.mxu0 %v2044
  %3526 = vmatprep.subr.mxu0 0.0
  %3527 = vmatpush1.msra.mxu0 %v2045
  %3528 = vmatprep.subr.mxu0 0.0
  %3529 = vmatpush1.msra.mxu0 0.0
  %3530 = vmatprep.subr.mxu0 0.0
  %3531 = vmatpush1.msra.mxu0 0.0
  %3532 = vmatprep.subr.mxu0 0.0
  %3533 = vmatpush1.msra.mxu0 0.0
  %3534 = vmatprep.subr.mxu0 0.0
  %3535 = vmatpush1.msra.mxu0 0.0
  %3536 = vmatprep.subr.mxu0 0.0
  %3537 = vmatpush1.msra.mxu0 0.0
  %3538 = vmatprep.subr.mxu0 0.0
  %3539 = vmatpush1.msra.mxu0 0.0
  %3540 = vmatprep.subr.mxu0 0.0
  %3541 = vmatpush1.msra.mxu0 0.0
  %3542 = vmatprep.subr.mxu0 0.0
  %3543 = vmatpush1.msra.mxu0 0.0
  %3544 = vmatprep.subr.mxu0 0.0
  %3545 = vmatpush1.msra.mxu0 0.0
  %3546 = vmatprep.subr.mxu0 0.0
  %3547 = vmatpush1.msra.mxu0 0.0
  %3548 = vmatprep.subr.mxu0 0.0
  %3549 = vmatpush1.msra.mxu0 0.0
  %3550 = vmatprep.subr.mxu0 0.0
  %3551 = vmatpush1.msra.mxu0 0.0
  %3552 = vmatprep.subr.mxu0 0.0
  %3553 = vmatpush1.msra.mxu0 0.0
  %3554 = vmatprep.subr.mxu0 0.0
  %3555 = vmatpush1.msra.mxu0 0.0
  %3556 = vmatprep.subr.mxu0 0.0
  %3557 = vmatpush1.msra.mxu0 0.0
  %3558 = vmatprep.subr.mxu0 0.0
  %3559 = vmatpush1.msra.mxu0 0.0
  %3560 = vmatprep.subr.mxu0 0.0
  %3561 = vmatpush1.msra.mxu0 0.0
  %3562 = vmatprep.subr.mxu0 0.0
  %3563 = vmatpush1.msra.mxu0 0.0
  %3564 = vmatprep.subr.mxu0 0.0
  %3565 = vmatpush1.msra.mxu0 0.0
  %3566 = vmatprep.subr.mxu0 0.0
  %3567 = vmatpush1.msra.mxu0 0.0
  %3568 = vmatprep.subr.mxu0 0.0
  %3569 = vmatpush1.msra.mxu0 0.0
  %3570 = vmatprep.subr.mxu0 0.0
  %3571 = vmatpush1.msra.mxu0 0.0
  %3572 = vmatprep.subr.mxu0 0.0
  %3573 = vmatpush1.msra.mxu0 0.0
  %3574 = vmatprep.subr.mxu0 0.0
  %3575 = vmatpush1.msra.mxu0 0.0
  %3576 = vmatprep.subr.mxu0 0.0
  %3577 = vmatpush1.msra.mxu0 0.0
  %3578 = vmatprep.subr.mxu0 0.0
  %3579 = vmatpush1.msra.mxu0 0.0
  %3580 = vmatprep.subr.mxu0 0.0
  %3581 = vmatpush1.msra.mxu0 0.0
  %3582 = vmatprep.subr.mxu0 0.0
  %3583 = vmatpush1.msra.mxu0 0.0
  %3584 = vmatprep.mubr.f32.mxu0 0.0
  %3585 = vmatmul.mubr.f32.gmra.mrb[0].mxu0 %v3515
  %v3586 = vpop.f32.mrb[0].mxu0
  %v3587 = vadd.f32 %v3513, %v3586
  %v3588 = vpop.f32.mrb[0].mxu0
  %3589 = vmatprep.mubr.f32.mxu0 0.0
  %3590 = vmatmul.mubr.f32.gmra.mrb[0].mxu0 %v3518
  %v3591 = vpop.f32.mrb[0].mxu0
  %v3592 = vadd.f32 %v3513, %v3591
  %v3593 = vpop.f32.mrb[0].mxu0
  %3594 = vdwg.mxu0
  %v3595 = vadd.f32 %v3587, %v2035
  %v3596 = vadd.f32 %v3592, %v2036
  %v3597 = vld [vmem:[%s5 + $0xc] sm:$0x1]
  %v3598 = vld [vmem:[%s5 + $0xd] sm:$0x1]
  %v3599 = vsel %vm134, %v3595, 0.0
  %3600 = vadd.xlane.f32.xlu0 %v3599
  %v3601 = vpop.xlane.xlu0 %3600
  %v3602 = vsel %vm134, %v3596, 0.0
  %3603 = vadd.xlane.f32.xlu0 %v3602
  %v3604 = vpop.xlane.xlu0 %3603
  %v3605 = vmul.f32 %v3601, %v141
  %v3606 = vmul.f32 %v3604, %v141
  %v3607 = vsub.f32 %v3595, %v3605
  %v3608 = vsub.f32 %v3596, %v3606
  %v3609 = vmul.f32 %v3607, %v3607
  %v3610 = vmul.f32 %v3608, %v3608
  %v3611 = vsel %vm134, %v3609, 0.0
  %3612 = vadd.xlane.f32.xlu0 %v3611
  %v3613 = vpop.xlane.xlu0 %3612
  %v3614 = vsel %vm134, %v3610, 0.0
  %3615 = vadd.xlane.f32.xlu0 %v3614
  %v3616 = vpop.xlane.xlu0 %3615
  %v3617 = vmul.f32 %v3613, %v141
  %v3618 = vmul.f32 %v3616, %v141
  %v3619 = vadd.f32 %v3617, 1e-12
  %v3620 = vadd.f32 %v3618, 1e-12
  %v3621 = vrsqrt.pop %v3619
  %v3622 = vrsqrt.pop %v3620
  %v3623 = vmul.f32 %v3607, %v3621
  %v3624 = vmul.f32 %v3608, %v3622
  %v3625 = vlaneseq
  %v3626 = vshrl.u32 %v3625, 7
  %v3627 = vsub.s32 0, %v3626
  %v3628 = vrot.slane %v3597, %v3627
  %v3629 = vmul.f32 %v3623, %v3628
  %v3630 = vmul.f32 %v3624, %v3628
  %v3631 = vlaneseq
  %v3632 = vshrl.u32 %v3631, 7
  %v3633 = vsub.s32 0, %v3632
  %v3634 = vrot.slane %v3598, %v3633
  %v3635 = vadd.f32 %v3629, %v3634
  %v3636 = vadd.f32 %v3630, %v3634
  %v3637 = vld [vmem:[%s5 + $0xe] sm:$0x1]
  %v3638 = vlaneseq
  %v3639 = vshrl.u32 %v3638, 7
  %v3640 = vsub.s32 0, %v3639
  %v3641 = vrot.slane %v3637, %v3640
  %v3643 = vsel %vm134, %v3635, 0
  %v3646 = vsel %vm134, %v3636, 0
  %3648 = vmatprep.subr.mxu0 0.0
  %3649 = vmatpush1.msra.mxu0 %v2046
  %3650 = vmatprep.subr.mxu0 0.0
  %3651 = vmatpush1.msra.mxu0 %v2047
  %3652 = vmatprep.subr.mxu0 0.0
  %3653 = vmatpush1.msra.mxu0 %v2048
  %3654 = vmatprep.subr.mxu0 0.0
  %3655 = vmatpush1.msra.mxu0 %v2049
  %3656 = vmatprep.subr.mxu0 0.0
  %3657 = vmatpush1.msra.mxu0 0.0
  %3658 = vmatprep.subr.mxu0 0.0
  %3659 = vmatpush1.msra.mxu0 0.0
  %3660 = vmatprep.subr.mxu0 0.0
  %3661 = vmatpush1.msra.mxu0 0.0
  %3662 = vmatprep.subr.mxu0 0.0
  %3663 = vmatpush1.msra.mxu0 0.0
  %3664 = vmatprep.subr.mxu0 0.0
  %3665 = vmatpush1.msra.mxu0 0.0
  %3666 = vmatprep.subr.mxu0 0.0
  %3667 = vmatpush1.msra.mxu0 0.0
  %3668 = vmatprep.subr.mxu0 0.0
  %3669 = vmatpush1.msra.mxu0 0.0
  %3670 = vmatprep.subr.mxu0 0.0
  %3671 = vmatpush1.msra.mxu0 0.0
  %3672 = vmatprep.subr.mxu0 0.0
  %3673 = vmatpush1.msra.mxu0 0.0
  %3674 = vmatprep.subr.mxu0 0.0
  %3675 = vmatpush1.msra.mxu0 0.0
  %3676 = vmatprep.subr.mxu0 0.0
  %3677 = vmatpush1.msra.mxu0 0.0
  %3678 = vmatprep.subr.mxu0 0.0
  %3679 = vmatpush1.msra.mxu0 0.0
  %3680 = vmatprep.subr.mxu0 0.0
  %3681 = vmatpush1.msra.mxu0 0.0
  %3682 = vmatprep.subr.mxu0 0.0
  %3683 = vmatpush1.msra.mxu0 0.0
  %3684 = vmatprep.subr.mxu0 0.0
  %3685 = vmatpush1.msra.mxu0 0.0
  %3686 = vmatprep.subr.mxu0 0.0
  %3687 = vmatpush1.msra.mxu0 0.0
  %3688 = vmatprep.subr.mxu0 0.0
  %3689 = vmatpush1.msra.mxu0 0.0
  %3690 = vmatprep.subr.mxu0 0.0
  %3691 = vmatpush1.msra.mxu0 0.0
  %3692 = vmatprep.subr.mxu0 0.0
  %3693 = vmatpush1.msra.mxu0 0.0
  %3694 = vmatprep.subr.mxu0 0.0
  %3695 = vmatpush1.msra.mxu0 0.0
  %3696 = vmatprep.subr.mxu0 0.0
  %3697 = vmatpush1.msra.mxu0 0.0
  %3698 = vmatprep.subr.mxu0 0.0
  %3699 = vmatpush1.msra.mxu0 0.0
  %3700 = vmatprep.subr.mxu0 0.0
  %3701 = vmatpush1.msra.mxu0 0.0
  %3702 = vmatprep.subr.mxu0 0.0
  %3703 = vmatpush1.msra.mxu0 0.0
  %3704 = vmatprep.subr.mxu0 0.0
  %3705 = vmatpush1.msra.mxu0 0.0
  %3706 = vmatprep.subr.mxu0 0.0
  %3707 = vmatpush1.msra.mxu0 0.0
  %3708 = vmatprep.subr.mxu0 0.0
  %3709 = vmatpush1.msra.mxu0 0.0
  %3710 = vmatprep.subr.mxu0 0.0
  %3711 = vmatpush1.msra.mxu0 0.0
  %3712 = vmatprep.mubr.f32.mxu0 0.0
  %3713 = vmatmul.mubr.f32.gmra.mrb[0].mxu0 %v3643
  %v3714 = vpop.f32.mrb[0].mxu0
  %v3715 = vadd.f32 %v3641, %v3714
  %v3716 = vpop.f32.mrb[0].mxu0
  %3717 = vmatprep.mubr.f32.mxu0 0.0
  %3718 = vmatmul.mubr.f32.gmra.mrb[0].mxu0 %v3646
  %v3719 = vpop.f32.mrb[0].mxu0
  %v3720 = vadd.f32 %v3641, %v3719
  %v3721 = vpop.f32.mrb[0].mxu0
  %3722 = vdwg.mxu0
  %v3723 = vmul.f32 %v3715, 0.5
  %v3724 = vmul.f32 %v3720, 0.5
  %v3725 = vmul.f32 %v3715, 0.70710677
  %v3726 = vmul.f32 %v3720, 0.70710677
  %vm3727 = vcmp.ge.f32.partialorder %v3725, 0.0
  %vm3728 = vcmp.ge.f32.partialorder %v3726, 0.0
  %v3729 = vsel %vm3727, 1.0, -1.0
  %v3730 = vsel %vm3728, 1.0, -1.0
  %v3731 = vand.u32 2147483647, %v3725
  %v3732 = vand.u32 2147483647, %v3726
  %v3733 = vmul.f32 %v3731, 0.3275911
  %v3734 = vmul.f32 %v3732, 0.3275911
  %v3735 = vadd.f32 %v3733, 1.0
  %v3736 = vadd.f32 %v3734, 1.0
  %v3737 = vrcp.pop %v3735
  %v3738 = vmul.f32 1.0, %v3737
  %v3739 = vrcp.pop %v3736
  %v3740 = vmul.f32 1.0, %v3739
  %v3741 = vmul.f32 %v3738, 1.0614054
  %v3742 = vmul.f32 %v3740, 1.0614054
  %v3743 = vadd.f32 %v3741, -1.4531521
  %v3744 = vadd.f32 %v3742, -1.4531521
  %v3745 = vmul.f32 %v3743, %v3738
  %v3746 = vmul.f32 %v3744, %v3740
  %v3747 = vadd.f32 %v3745, 1.4214138
  %v3748 = vadd.f32 %v3746, 1.4214138
  %v3749 = vmul.f32 %v3747, %v3738
  %v3750 = vmul.f32 %v3748, %v3740
  %v3751 = vadd.f32 %v3749, -0.28449672
  %v3752 = vadd.f32 %v3750, -0.28449672
  %v3753 = vmul.f32 %v3751, %v3738
  %v3754 = vmul.f32 %v3752, %v3740
  %v3755 = vadd.f32 %v3753, 0.2548296
  %v3756 = vadd.f32 %v3754, 0.2548296
  %v3757 = vmul.f32 %v3755, %v3738
  %v3758 = vmul.f32 %v3756, %v3740
  %v3759 = vsub.f32 0.0, %v3731
  %v3760 = vsub.f32 0.0, %v3732
  %v3761 = vmul.f32 %v3759, %v3731
  %v3762 = vmul.f32 %v3760, %v3732
  %v3763 = vmul.f32 %v3761, 1.442695
  %v3764 = vpow.pop %v3763
  %v3765 = vmul.f32 %v3762, 1.442695
  %v3766 = vpow.pop %v3765
  %v3767 = vmul.f32 %v3757, %v3764
  %v3768 = vmul.f32 %v3758, %v3766
  %v3769 = vsub.f32 1.0, %v3767
  %v3770 = vsub.f32 1.0, %v3768
  %v3771 = vmul.f32 %v3729, %v3769
  %v3772 = vmul.f32 %v3730, %v3770
  %v3773 = vadd.f32 %v3771, 1.0
  %v3774 = vadd.f32 %v3772, 1.0
  %v3775 = vmul.f32 %v3723, %v3773
  %v3776 = vmul.f32 %v3724, %v3774
  %v3777 = vld [vmem:[%s5 + $0xf] sm:$0x1]
  %v3778 = vlaneseq
  %v3779 = vshrl.u32 %v3778, 7
  %v3780 = vsub.s32 0, %v3779
  %v3781 = vrot.slane %v3777, %v3780
  %3782 = vmatprep.subr.mxu0 0.0
  %3783 = vmatpush1.msra.mxu0 %v2051
  %3784 = vmatprep.subr.mxu0 0.0
  %3785 = vmatpush1.msra.mxu0 %v2052
  %3786 = vmatprep.subr.mxu0 0.0
  %3787 = vmatpush1.msra.mxu0 %v2053
  %3788 = vmatprep.subr.mxu0 0.0
  %3789 = vmatpush1.msra.mxu0 %v2054
  %3790 = vmatprep.subr.mxu0 0.0
  %3791 = vmatpush1.msra.mxu0 %v2055
  %3792 = vmatprep.subr.mxu0 0.0
  %3793 = vmatpush1.msra.mxu0 %v2056
  %3794 = vmatprep.subr.mxu0 0.0
  %3795 = vmatpush1.msra.mxu0 %v2057
  %3796 = vmatprep.subr.mxu0 0.0
  %3797 = vmatpush1.msra.mxu0 %v2058
  %3798 = vmatprep.subr.mxu0 0.0
  %3799 = vmatpush1.msra.mxu0 %v2059
  %3800 = vmatprep.subr.mxu0 0.0
  %3801 = vmatpush1.msra.mxu0 %v2060
  %3802 = vmatprep.subr.mxu0 0.0
  %3803 = vmatpush1.msra.mxu0 %v2061
  %3804 = vmatprep.subr.mxu0 0.0
  %3805 = vmatpush1.msra.mxu0 %v2062
  %3806 = vmatprep.subr.mxu0 0.0
  %3807 = vmatpush1.msra.mxu0 %v2063
  %3808 = vmatprep.subr.mxu0 0.0
  %3809 = vmatpush1.msra.mxu0 %v2064
  %3810 = vmatprep.subr.mxu0 0.0
  %3811 = vmatpush1.msra.mxu0 %v2065
  %3812 = vmatprep.subr.mxu0 0.0
  %3813 = vmatpush1.msra.mxu0 %v2066
  %3814 = vmatprep.subr.mxu0 0.0
  %3815 = vmatpush1.msra.mxu0 0.0
  %3816 = vmatprep.subr.mxu0 0.0
  %3817 = vmatpush1.msra.mxu0 0.0
  %3818 = vmatprep.subr.mxu0 0.0
  %3819 = vmatpush1.msra.mxu0 0.0
  %3820 = vmatprep.subr.mxu0 0.0
  %3821 = vmatpush1.msra.mxu0 0.0
  %3822 = vmatprep.subr.mxu0 0.0
  %3823 = vmatpush1.msra.mxu0 0.0
  %3824 = vmatprep.subr.mxu0 0.0
  %3825 = vmatpush1.msra.mxu0 0.0
  %3826 = vmatprep.subr.mxu0 0.0
  %3827 = vmatpush1.msra.mxu0 0.0
  %3828 = vmatprep.subr.mxu0 0.0
  %3829 = vmatpush1.msra.mxu0 0.0
  %3830 = vmatprep.subr.mxu0 0.0
  %3831 = vmatpush1.msra.mxu0 0.0
  %3832 = vmatprep.subr.mxu0 0.0
  %3833 = vmatpush1.msra.mxu0 0.0
  %3834 = vmatprep.subr.mxu0 0.0
  %3835 = vmatpush1.msra.mxu0 0.0
  %3836 = vmatprep.subr.mxu0 0.0
  %3837 = vmatpush1.msra.mxu0 0.0
  %3838 = vmatprep.subr.mxu0 0.0
  %3839 = vmatpush1.msra.mxu0 0.0
  %3840 = vmatprep.subr.mxu0 0.0
  %3841 = vmatpush1.msra.mxu0 0.0
  %3842 = vmatprep.subr.mxu0 0.0
  %3843 = vmatpush1.msra.mxu0 0.0
  %3844 = vmatprep.subr.mxu0 0.0
  %3845 = vmatpush1.msra.mxu0 0.0
  %3846 = vmatprep.mubr.f32.mxu0 0.0
  %3847 = vmatmul.mubr.f32.gmra.mrb[0].mxu0 %v3775
  %v3848 = vpop.f32.mrb[0].mxu0
  %v3849 = vadd.f32 %v3781, %v3848
  %v3850 = vpop.f32.mrb[0].mxu0
  %3851 = vmatprep.mubr.f32.mxu0 0.0
  %3852 = vmatmul.mubr.f32.gmra.mrb[0].mxu0 %v3776
  %v3853 = vpop.f32.mrb[0].mxu0
  %v3854 = vadd.f32 %v3781, %v3853
  %v3855 = vpop.f32.mrb[0].mxu0
  %3856 = vdwg.mxu0
  %v3857 = vadd.f32 %v3849, %v3635
  %v3858 = vadd.f32 %v3854, %v3636
  %v3859 = vld [vmem:[%s5 + $0x10] sm:$0x1]
  %v3860 = vld [vmem:[%s5 + $0x11] sm:$0x1]
  %v3861 = vsel %vm134, %v3857, 0.0
  %3862 = vadd.xlane.f32.xlu0 %v3861
  %v3863 = vpop.xlane.xlu0 %3862
  %v3864 = vsel %vm134, %v3858, 0.0
  %3865 = vadd.xlane.f32.xlu0 %v3864
  %v3866 = vpop.xlane.xlu0 %3865
  %v3867 = vmul.f32 %v3863, %v141
  %v3868 = vmul.f32 %v3866, %v141
  %v3869 = vsub.f32 %v3857, %v3867
  %v3870 = vsub.f32 %v3858, %v3868
  %v3871 = vmul.f32 %v3869, %v3869
  %v3872 = vmul.f32 %v3870, %v3870
  %v3873 = vsel %vm134, %v3871, 0.0
  %3874 = vadd.xlane.f32.xlu0 %v3873
  %v3875 = vpop.xlane.xlu0 %3874
  %v3876 = vsel %vm134, %v3872, 0.0
  %3877 = vadd.xlane.f32.xlu0 %v3876
  %v3878 = vpop.xlane.xlu0 %3877
  %v3879 = vmul.f32 %v3875, %v141
  %v3880 = vmul.f32 %v3878, %v141
  %v3881 = vadd.f32 %v3879, 1e-12
  %v3882 = vadd.f32 %v3880, 1e-12
  %v3883 = vrsqrt.pop %v3881
  %v3884 = vrsqrt.pop %v3882
  %v3885 = vmul.f32 %v3869, %v3883
  %v3886 = vmul.f32 %v3870, %v3884
  %v3887 = vlaneseq
  %v3888 = vshrl.u32 %v3887, 7
  %v3889 = vsub.s32 0, %v3888
  %v3890 = vrot.slane %v3859, %v3889
  %v3891 = vmul.f32 %v3885, %v3890
  %v3892 = vmul.f32 %v3886, %v3890
  %v3893 = vlaneseq
  %v3894 = vshrl.u32 %v3893, 7
  %v3895 = vsub.s32 0, %v3894
  %v3896 = vrot.slane %v3860, %v3895
  %v3897 = vadd.f32 %v3891, %v3896
  %v3898 = vadd.f32 %v3892, %v3896
  %s3899 = scalar_lea.vmem %s3, 192
  %v3900 = vld [vmem:[%s3899] sm:$0xff]
  %v3901 = vld [vmem:[%s3899 + $0x18] sm:$0xff]
  %v3902 = vld [vmem:[%s3899 + $0x30] sm:$0xff]
  %v3903 = vld [vmem:[%s3899 + $0x48] sm:$0xff]
  %v3904 = vld [vmem:[%s5 + $0x12] sm:$0x1]
  %v3905 = vlaneseq
  %v3906 = vshrl.u32 %v3905, 7
  %v3907 = vsub.s32 0, %v3906
  %v3908 = vrot.slane %v3904, %v3907
  %v3910 = vsel %vm134, %v3897, 0
  %v3913 = vsel %vm134, %v3898, 0
  %3915 = vmatprep.subr.mxu0 0.0
  %3916 = vmatpush1.msra.mxu0 %v3900
  %3917 = vmatprep.subr.mxu0 0.0
  %3918 = vmatpush1.msra.mxu0 %v3901
  %3919 = vmatprep.subr.mxu0 0.0
  %3920 = vmatpush1.msra.mxu0 %v3902
  %3921 = vmatprep.subr.mxu0 0.0
  %3922 = vmatpush1.msra.mxu0 %v3903
  %3923 = vmatprep.subr.mxu0 0.0
  %3924 = vmatpush1.msra.mxu0 0.0
  %3925 = vmatprep.subr.mxu0 0.0
  %3926 = vmatpush1.msra.mxu0 0.0
  %3927 = vmatprep.subr.mxu0 0.0
  %3928 = vmatpush1.msra.mxu0 0.0
  %3929 = vmatprep.subr.mxu0 0.0
  %3930 = vmatpush1.msra.mxu0 0.0
  %3931 = vmatprep.subr.mxu0 0.0
  %3932 = vmatpush1.msra.mxu0 0.0
  %3933 = vmatprep.subr.mxu0 0.0
  %3934 = vmatpush1.msra.mxu0 0.0
  %3935 = vmatprep.subr.mxu0 0.0
  %3936 = vmatpush1.msra.mxu0 0.0
  %3937 = vmatprep.subr.mxu0 0.0
  %3938 = vmatpush1.msra.mxu0 0.0
  %3939 = vmatprep.subr.mxu0 0.0
  %3940 = vmatpush1.msra.mxu0 0.0
  %3941 = vmatprep.subr.mxu0 0.0
  %3942 = vmatpush1.msra.mxu0 0.0
  %3943 = vmatprep.subr.mxu0 0.0
  %3944 = vmatpush1.msra.mxu0 0.0
  %3945 = vmatprep.subr.mxu0 0.0
  %3946 = vmatpush1.msra.mxu0 0.0
  %3947 = vmatprep.subr.mxu0 0.0
  %3948 = vmatpush1.msra.mxu0 0.0
  %3949 = vmatprep.subr.mxu0 0.0
  %3950 = vmatpush1.msra.mxu0 0.0
  %3951 = vmatprep.subr.mxu0 0.0
  %3952 = vmatpush1.msra.mxu0 0.0
  %3953 = vmatprep.subr.mxu0 0.0
  %3954 = vmatpush1.msra.mxu0 0.0
  %3955 = vmatprep.subr.mxu0 0.0
  %3956 = vmatpush1.msra.mxu0 0.0
  %3957 = vmatprep.subr.mxu0 0.0
  %3958 = vmatpush1.msra.mxu0 0.0
  %3959 = vmatprep.subr.mxu0 0.0
  %3960 = vmatpush1.msra.mxu0 0.0
  %3961 = vmatprep.subr.mxu0 0.0
  %3962 = vmatpush1.msra.mxu0 0.0
  %3963 = vmatprep.subr.mxu0 0.0
  %3964 = vmatpush1.msra.mxu0 0.0
  %3965 = vmatprep.subr.mxu0 0.0
  %3966 = vmatpush1.msra.mxu0 0.0
  %3967 = vmatprep.subr.mxu0 0.0
  %3968 = vmatpush1.msra.mxu0 0.0
  %3969 = vmatprep.subr.mxu0 0.0
  %3970 = vmatpush1.msra.mxu0 0.0
  %3971 = vmatprep.subr.mxu0 0.0
  %3972 = vmatpush1.msra.mxu0 0.0
  %3973 = vmatprep.subr.mxu0 0.0
  %3974 = vmatpush1.msra.mxu0 0.0
  %3975 = vmatprep.subr.mxu0 0.0
  %3976 = vmatpush1.msra.mxu0 0.0
  %3977 = vmatprep.subr.mxu0 0.0
  %3978 = vmatpush1.msra.mxu0 0.0
  %3979 = vmatprep.mubr.f32.mxu0 0.0
  %3980 = vmatmul.mubr.f32.gmra.mrb[0].mxu0 %v3910
  %v3981 = vpop.f32.mrb[0].mxu0
  %v3982 = vadd.f32 %v3908, %v3981
  %v3983 = vpop.f32.mrb[0].mxu0
  %3984 = vmatprep.mubr.f32.mxu0 0.0
  %3985 = vmatmul.mubr.f32.gmra.mrb[0].mxu0 %v3913
  %v3986 = vpop.f32.mrb[0].mxu0
  %v3987 = vadd.f32 %v3908, %v3986
  %v3988 = vpop.f32.mrb[0].mxu0
  %3989 = vdwg.mxu0
  %v3990 = vmul.f32 %v3982, 0.5
  %v3991 = vmul.f32 %v3987, 0.5
  %v3992 = vmul.f32 %v3982, 0.70710677
  %v3993 = vmul.f32 %v3987, 0.70710677
  %vm3994 = vcmp.ge.f32.partialorder %v3992, 0.0
  %vm3995 = vcmp.ge.f32.partialorder %v3993, 0.0
  %v3996 = vsel %vm3994, 1.0, -1.0
  %v3997 = vsel %vm3995, 1.0, -1.0
  %v3998 = vand.u32 2147483647, %v3992
  %v3999 = vand.u32 2147483647, %v3993
  %v4000 = vmul.f32 %v3998, 0.3275911
  %v4001 = vmul.f32 %v3999, 0.3275911
  %v4002 = vadd.f32 %v4000, 1.0
  %v4003 = vadd.f32 %v4001, 1.0
  %v4004 = vrcp.pop %v4002
  %v4005 = vmul.f32 1.0, %v4004
  %v4006 = vrcp.pop %v4003
  %v4007 = vmul.f32 1.0, %v4006
  %v4008 = vmul.f32 %v4005, 1.0614054
  %v4009 = vmul.f32 %v4007, 1.0614054
  %v4010 = vadd.f32 %v4008, -1.4531521
  %v4011 = vadd.f32 %v4009, -1.4531521
  %v4012 = vmul.f32 %v4010, %v4005
  %v4013 = vmul.f32 %v4011, %v4007
  %v4014 = vadd.f32 %v4012, 1.4214138
  %v4015 = vadd.f32 %v4013, 1.4214138
  %v4016 = vmul.f32 %v4014, %v4005
  %v4017 = vmul.f32 %v4015, %v4007
  %v4018 = vadd.f32 %v4016, -0.28449672
  %v4019 = vadd.f32 %v4017, -0.28449672
  %v4020 = vmul.f32 %v4018, %v4005
  %v4021 = vmul.f32 %v4019, %v4007
  %v4022 = vadd.f32 %v4020, 0.2548296
  %v4023 = vadd.f32 %v4021, 0.2548296
  %v4024 = vmul.f32 %v4022, %v4005
  %v4025 = vmul.f32 %v4023, %v4007
  %v4026 = vsub.f32 0.0, %v3998
  %v4027 = vsub.f32 0.0, %v3999
  %v4028 = vmul.f32 %v4026, %v3998
  %v4029 = vmul.f32 %v4027, %v3999
  %v4030 = vmul.f32 %v4028, 1.442695
  %v4031 = vpow.pop %v4030
  %v4032 = vmul.f32 %v4029, 1.442695
  %v4033 = vpow.pop %v4032
  %v4034 = vmul.f32 %v4024, %v4031
  %v4035 = vmul.f32 %v4025, %v4033
  %v4036 = vsub.f32 1.0, %v4034
  %v4037 = vsub.f32 1.0, %v4035
  %v4038 = vmul.f32 %v3996, %v4036
  %v4039 = vmul.f32 %v3997, %v4037
  %v4040 = vadd.f32 %v4038, 1.0
  %v4041 = vadd.f32 %v4039, 1.0
  %v4042 = vmul.f32 %v3990, %v4040
  %v4043 = vmul.f32 %v3991, %v4041
  %v4044 = vld [vmem:[%s5 + $0x13] sm:$0x1]
  %v4045 = vld [vmem:[%s5 + $0x14] sm:$0x1]
  %v4046 = vsel %vm134, %v4042, 0.0
  %4047 = vadd.xlane.f32.xlu0 %v4046
  %v4048 = vpop.xlane.xlu0 %4047
  %v4049 = vsel %vm134, %v4043, 0.0
  %4050 = vadd.xlane.f32.xlu0 %v4049
  %v4051 = vpop.xlane.xlu0 %4050
  %v4052 = vmul.f32 %v4048, %v141
  %v4053 = vmul.f32 %v4051, %v141
  %v4054 = vsub.f32 %v4042, %v4052
  %v4055 = vsub.f32 %v4043, %v4053
  %v4056 = vmul.f32 %v4054, %v4054
  %v4057 = vmul.f32 %v4055, %v4055
  %v4058 = vsel %vm134, %v4056, 0.0
  %4059 = vadd.xlane.f32.xlu0 %v4058
  %v4060 = vpop.xlane.xlu0 %4059
  %v4061 = vsel %vm134, %v4057, 0.0
  %4062 = vadd.xlane.f32.xlu0 %v4061
  %v4063 = vpop.xlane.xlu0 %4062
  %v4064 = vmul.f32 %v4060, %v141
  %v4065 = vmul.f32 %v4063, %v141
  %v4066 = vadd.f32 %v4064, 1e-12
  %v4067 = vadd.f32 %v4065, 1e-12
  %v4068 = vrsqrt.pop %v4066
  %v4069 = vrsqrt.pop %v4067
  %v4070 = vmul.f32 %v4054, %v4068
  %v4071 = vmul.f32 %v4055, %v4069
  %v4072 = vlaneseq
  %v4073 = vshrl.u32 %v4072, 7
  %v4074 = vsub.s32 0, %v4073
  %v4075 = vrot.slane %v4044, %v4074
  %v4076 = vmul.f32 %v4070, %v4075
  %v4077 = vmul.f32 %v4071, %v4075
  %v4078 = vlaneseq
  %v4079 = vshrl.u32 %v4078, 7
  %v4080 = vsub.s32 0, %v4079
  %v4081 = vrot.slane %v4045, %v4080
  %v4082 = vadd.f32 %v4076, %v4081
  %v4083 = vadd.f32 %v4077, %v4081
  %v4085 = vsel %vm134, %v4082, 0
  %v4088 = vsel %vm134, %v4083, 0
  %v4091 = vsel %vm134, %v23, 0
  %v4094 = vsel %vm134, %v24, 0
  %v4097 = vsel %vm134, %v25, 0
  %v4100 = vsel %vm134, %v26, 0
  %v4103 = vsel %vm134, %v27, 0
  %v4106 = vsel %vm134, %v28, 0
  %v4109 = vsel %vm134, %v29, 0
  %v4112 = vsel %vm134, %v30, 0
  %v4115 = vsel %vm134, %v31, 0
  %v4118 = vsel %vm134, %v32, 0
  %v4121 = vsel %vm134, %v33, 0
  %v4124 = vsel %vm134, %v34, 0
  %v4127 = vsel %vm134, %v35, 0
  %v4130 = vsel %vm134, %v36, 0
  %v4133 = vsel %vm134, %v37, 0
  %v4136 = vsel %vm134, %v38, 0
  %4138 = vmatprep.subr.mxu0 0.0
  %4139 = vmatpush1.xpose.msra.mxu0 %v4091
  %4140 = vmatprep.subr.mxu0 0.0
  %4141 = vmatpush1.xpose.msra.mxu0 %v4094
  %4142 = vmatprep.subr.mxu0 0.0
  %4143 = vmatpush1.xpose.msra.mxu0 %v4097
  %4144 = vmatprep.subr.mxu0 0.0
  %4145 = vmatpush1.xpose.msra.mxu0 %v4100
  %4146 = vmatprep.subr.mxu0 0.0
  %4147 = vmatpush1.xpose.msra.mxu0 %v4103
  %4148 = vmatprep.subr.mxu0 0.0
  %4149 = vmatpush1.xpose.msra.mxu0 %v4106
  %4150 = vmatprep.subr.mxu0 0.0
  %4151 = vmatpush1.xpose.msra.mxu0 %v4109
  %4152 = vmatprep.subr.mxu0 0.0
  %4153 = vmatpush1.xpose.msra.mxu0 %v4112
  %4154 = vmatprep.subr.mxu0 0.0
  %4155 = vmatpush1.xpose.msra.mxu0 %v4115
  %4156 = vmatprep.subr.mxu0 0.0
  %4157 = vmatpush1.xpose.msra.mxu0 %v4118
  %4158 = vmatprep.subr.mxu0 0.0
  %4159 = vmatpush1.xpose.msra.mxu0 %v4121
  %4160 = vmatprep.subr.mxu0 0.0
  %4161 = vmatpush1.xpose.msra.mxu0 %v4124
  %4162 = vmatprep.subr.mxu0 0.0
  %4163 = vmatpush1.xpose.msra.mxu0 %v4127
  %4164 = vmatprep.subr.mxu0 0.0
  %4165 = vmatpush1.xpose.msra.mxu0 %v4130
  %4166 = vmatprep.subr.mxu0 0.0
  %4167 = vmatpush1.xpose.msra.mxu0 %v4133
  %4168 = vmatprep.subr.mxu0 0.0
  %4169 = vmatpush1.xpose.msra.mxu0 %v4136
  %4170 = vmatprep.subr.mxu0 0.0
  %4171 = vmatpush1.xpose.msra.mxu0 0.0
  %4172 = vmatprep.subr.mxu0 0.0
  %4173 = vmatpush1.xpose.msra.mxu0 0.0
  %4174 = vmatprep.subr.mxu0 0.0
  %4175 = vmatpush1.xpose.msra.mxu0 0.0
  %4176 = vmatprep.subr.mxu0 0.0
  %4177 = vmatpush1.xpose.msra.mxu0 0.0
  %4178 = vmatprep.subr.mxu0 0.0
  %4179 = vmatpush1.xpose.msra.mxu0 0.0
  %4180 = vmatprep.subr.mxu0 0.0
  %4181 = vmatpush1.xpose.msra.mxu0 0.0
  %4182 = vmatprep.subr.mxu0 0.0
  %4183 = vmatpush1.xpose.msra.mxu0 0.0
  %4184 = vmatprep.subr.mxu0 0.0
  %4185 = vmatpush1.xpose.msra.mxu0 0.0
  %4186 = vmatprep.subr.mxu0 0.0
  %4187 = vmatpush1.xpose.msra.mxu0 0.0
  %4188 = vmatprep.subr.mxu0 0.0
  %4189 = vmatpush1.xpose.msra.mxu0 0.0
  %4190 = vmatprep.subr.mxu0 0.0
  %4191 = vmatpush1.xpose.msra.mxu0 0.0
  %4192 = vmatprep.subr.mxu0 0.0
  %4193 = vmatpush1.xpose.msra.mxu0 0.0
  %4194 = vmatprep.subr.mxu0 0.0
  %4195 = vmatpush1.xpose.msra.mxu0 0.0
  %4196 = vmatprep.subr.mxu0 0.0
  %4197 = vmatpush1.xpose.msra.mxu0 0.0
  %4198 = vmatprep.subr.mxu0 0.0
  %4199 = vmatpush1.xpose.msra.mxu0 0.0
  %4200 = vmatprep.subr.mxu0 0.0
  %4201 = vmatpush1.xpose.msra.mxu0 0.0
  %4202 = vmatprep.mubr.f32.mxu0 0.0
  %4203 = vmatmul.mubr.f32.gmra.mrb[0].mxu0 %v4085
  %v4204 = vpop.f32.mrb[0].mxu0
  %v4205 = vadd.f32 0.0, %v4204
  %v4206 = vpop.f32.mrb[0].mxu0
  %4207 = vmatprep.mubr.f32.mxu0 0.0
  %4208 = vmatmul.mubr.f32.gmra.mrb[0].mxu0 %v4088
  %v4209 = vpop.f32.mrb[0].mxu0
  %v4210 = vadd.f32 0.0, %v4209
  %v4211 = vpop.f32.mrb[0].mxu0
  %4212 = vdwg.mxu0
  %4213 = vst [vmem:[%s6] sm:$0xff] %v4205
  %4214 = vst [vmem:[%s6 + $0x8] sm:$0xff] %v4210
  // Predicated region
  $region26: #{_lambda_.1} parent=0 // pred_check
    _
  $region27: #{_lambda_.1} parent=0 // pred_check_branch
    %4216 = sbr.rel (0) target = $region29
  $region28: #{_lambda_.1} parent=0 // pred_region
    _
  $region29: #{_lambda_.1} parent=0 // pred_fallthru
    _
  // Predicated region
  $region30: #{_lambda_.1} parent=0 // pred_check
    _
  $region31: #{_lambda_.1} parent=0 // pred_check_branch
    %4218 = sbr.rel (0) target = $region33
  $region32: #{_lambda_.1} parent=0 // pred_region
    _
  $region33: #{_lambda_.1} parent=0 // pred_fallthru
    _

</llo_original>
